<compile_context>
chip_gen: v5e
topology: v5e:2x2
jax: 0.10.0
libtpu: 0.0.40
codegen_flags: <defaults>
</compile_context>

<pallas_src>
import jax
import jax.numpy as jnp
from jax.experimental import pallas as pl
from jax.experimental.pallas import tpu as pltpu

HIDDEN_SIZE = 128
INPUT_SIZE = 28
NUM_CLASSES = 10
NUM_LAYERS = 2
SEQ_LEN = 8


def _lstm_cell(gates, c_prev, H):
    """LSTM cell update, PyTorch gate order (i, f, g, o). f32 math."""
    i = jax.nn.sigmoid(gates[:, 0 * H:1 * H])
    f = jax.nn.sigmoid(gates[:, 1 * H:2 * H])
    g = jnp.tanh(gates[:, 2 * H:3 * H])
    o = jax.nn.sigmoid(gates[:, 3 * H:4 * H])
    c_new = f * c_prev + i * g
    h_new = o * jnp.tanh(c_new)
    return h_new, c_new


def _fused_lstm_fc_kernel(x_ref, wih1_ref, whh1_ref, b1_ref,
                          wih2_ref, whh2_ref, b2_ref,
                          wfc_ref, bfc_ref, out_ref):
    """Fused 2-layer LSTM + final Linear, single invocation (no grid).

    x_ref   : (B, S, Din) f32   batch-first input (whole sequence)
    wih*_ref: (Din|H, 4H) bf16  input-to-hidden weights (pre-transposed)
    whh*_ref: (H, 4H)    bf16   hidden-to-hidden weights (pre-transposed)
    b*_ref  : (1, 4H)    f32    combined bias (b_ih + b_hh)
    wfc_ref : (H, C)     f32    FC weight (pre-transposed)
    bfc_ref : (1, C)     f32    FC bias
    out_ref : (B, C)     f32    logits = fc(h_layer2[:, -1, :])
    """
    B, S, _ = x_ref.shape
    H = whh1_ref.shape[0]

    x = x_ref[...]  # load the whole input once (tiny)

    # Hoisted layer-1 input projection for all time steps: build a time-major
    # (S*B, Din) stack from static slices (no wrapper transpose needed) and do
    # a single MXU matmul instead of S tiny ones.
    x_tm = jnp.concatenate([x[:, t, :] for t in range(S)], axis=0)  # (S*B, Din)
    gx1 = (
        jnp.dot(x_tm.astype(jnp.bfloat16), wih1_ref[...],
                preferred_element_type=jnp.float32)
        + b1_ref[...]
    )  # (S*B, 4H) f32; rows [t*B:(t+1)*B] belong to time step t

    zeros = jnp.zeros((B, H), jnp.float32)
    h1, c1, h2, c2 = zeros, zeros, zeros, zeros

    # Sequential recurrence, fully unrolled (S is small & static).
    # Only the MXU operands are bf16; gate elementwise math stays f32.
    for t in range(S):
        g1 = gx1[t * B:(t + 1) * B, :] + jnp.dot(
            h1.astype(jnp.bfloat16), whh1_ref[...],
            preferred_element_type=jnp.float32)
        h1, c1 = _lstm_cell(g1, c1, H)

        g2 = (
            jnp.dot(h1.astype(jnp.bfloat16), wih2_ref[...],
                    preferred_element_type=jnp.float32)
            + jnp.dot(h2.astype(jnp.bfloat16), whh2_ref[...],
                      preferred_element_type=jnp.float32)
            + b2_ref[...]
        )
        h2, c2 = _lstm_cell(g2, c2, H)

    # Final FC on the last hidden state of the top layer (out[:, -1, :]).
    out_ref[...] = (
        jnp.dot(h2, wfc_ref[...], preferred_element_type=jnp.float32)
        + bfc_ref[...]
    ).astype(out_ref.dtype)


def rnn_fused_forward(x, params):
    """x: (B, S, INPUT_SIZE) batch-first. Returns logits (B, NUM_CLASSES)."""
    B, _, _ = x.shape
    l1, l2 = params["lstm"]
    fcp = params["fc"]
    vmem = lambda: pl.BlockSpec(memory_space=pltpu.MemorySpace.VMEM)
    return pl.pallas_call(
        _fused_lstm_fc_kernel,
        out_shape=jax.ShapeDtypeStruct((B, NUM_CLASSES), jnp.float32),
        in_specs=[vmem() for _ in range(9)],
        out_specs=vmem(),
    )(
        x.astype(jnp.float32),
        l1["w_ih_t"], l1["w_hh_t"], l1["bias"],
        l2["w_ih_t"], l2["w_hh_t"], l2["bias"],
        fcp["w_t"], fcp["b"],
    )


rnn_forward = jax.jit(rnn_fused_forward)


def init_params(key, input_size, hidden_size, num_layers, num_classes):
    """Uniform(-1/sqrt(H), 1/sqrt(H)) init, PyTorch LSTM shapes, gate order i,f,g,o.

    Matmul weights are stored pre-transposed in bf16 (MXU operands); biases and
    FC params stay f32.
    """
    params = {"lstm": [], "fc": None}
    k = 1.0 / jnp.sqrt(hidden_size)
    for layer in range(num_layers):
        din = input_size if layer == 0 else hidden_size
        key, k1, k2, k3, k4 = jax.random.split(key, 5)
        w_ih = jax.random.uniform(k1, (4 * hidden_size, din), jnp.float32, -k, k)
        w_hh = jax.random.uniform(k2, (4 * hidden_size, hidden_size), jnp.float32, -k, k)
        b_ih = jax.random.uniform(k3, (4 * hidden_size,), jnp.float32, -k, k)
        b_hh = jax.random.uniform(k4, (4 * hidden_size,), jnp.float32, -k, k)
        params["lstm"].append(
            {
                "w_ih_t": w_ih.T.astype(jnp.bfloat16),           # (din, 4H)
                "w_hh_t": w_hh.T.astype(jnp.bfloat16),           # (H, 4H)
                "bias": (b_ih + b_hh).reshape(1, 4 * hidden_size),  # (1, 4H) f32
            }
        )
    key, k1, k2 = jax.random.split(key, 3)
    w_fc = jax.random.uniform(k1, (num_classes, hidden_size), jnp.float32, -k, k)
    b_fc = jax.random.uniform(k2, (num_classes,), jnp.float32, -k, k)
    params["fc"] = {"w_t": w_fc.T, "b": b_fc.reshape(1, num_classes)}
    return params


def _reference_forward(x, params):
    """Pure-JAX f32 reference matching nn.LSTM(batch_first=True) + Linear."""
    B = x.shape[0]
    h_seq = jnp.transpose(x, (1, 0, 2)).astype(jnp.float32)  # (S, B, Din)
    for lp in params["lstm"]:
        wih = lp["w_ih_t"].astype(jnp.float32)
        whh = lp["w_hh_t"].astype(jnp.float32)
        b = lp["bias"]
        H = whh.shape[0]

        def step(carry, x_t):
            h_prev, c_prev = carry
            gates = x_t @ wih + h_prev @ whh + b
            i = jax.nn.sigmoid(gates[:, :H])
            f = jax.nn.sigmoid(gates[:, H:2 * H])
            g = jnp.tanh(gates[:, 2 * H:3 * H])
            o = jax.nn.sigmoid(gates[:, 3 * H:])
            c = f * c_prev + i * g
            hh = o * jnp.tanh(c)
            return (hh, c), hh

        init = (jnp.zeros((B, H), jnp.float32), jnp.zeros((B, H), jnp.float32))
        _, h_seq = jax.lax.scan(step, init, h_seq)
    return h_seq[-1] @ params["fc"]["w_t"] + params["fc"]["b"]


if __name__ == "__main__":
    key = jax.random.PRNGKey(0)
    key, pkey, xkey = jax.random.split(key, 3)

    params = init_params(pkey, INPUT_SIZE, HIDDEN_SIZE, NUM_LAYERS, NUM_CLASSES)

    batch, seq = 2, SEQ_LEN
    x = jax.random.normal(xkey, (batch, seq, INPUT_SIZE), jnp.float32)

    logits = rnn_forward(x, params)
    jax.block_until_ready(logits)
    assert logits.shape == (batch, NUM_CLASSES)

    # Correctness check vs pure-JAX reference (bf16 MXU operands -> loose tol).
    ref = _reference_forward(x, params)
    max_err = float(jnp.max(jnp.abs(logits - ref)))
    assert max_err < 5e-2, f"max abs error {max_err} too large"

    print("KERNEL_OK")
</pallas_src>

<mosaic_0001>
module attributes {stable_mosaic.version = 11 : i64} {
  func.func @_fused_lstm_fc_kernel(%arg0: memref<2x8x28xf32, #tpu.memory_space<vmem>>, %arg1: memref<28x512xbf16, #tpu.memory_space<vmem>>, %arg2: memref<128x512xbf16, #tpu.memory_space<vmem>>, %arg3: memref<1x512xf32, #tpu.memory_space<vmem>>, %arg4: memref<128x512xbf16, #tpu.memory_space<vmem>>, %arg5: memref<128x512xbf16, #tpu.memory_space<vmem>>, %arg6: memref<1x512xf32, #tpu.memory_space<vmem>>, %arg7: memref<128x10xf32, #tpu.memory_space<vmem>>, %arg8: memref<1x10xf32, #tpu.memory_space<vmem>>, %arg9: memref<2x10xf32, #tpu.memory_space<vmem>>) attributes {dimension_semantics = [], scalar_prefetch = 0 : i64, scratch_operands = 0 : i64, tpu.core_type = #tpu.core_type<tc>} {
    %c0 = arith.constant 0 : index
    %c0_0 = arith.constant 0 : index
    %c0_1 = arith.constant 0 : index
    %0 = vector.load %arg0[%c0, %c0_0, %c0_1] : memref<2x8x28xf32, #tpu.memory_space<vmem>>, vector<2x8x28xf32>
    %1 = vector.extract_strided_slice %0 {offsets = [0, 0, 0], sizes = [2, 1, 28], strides = [1, 1, 1]} : vector<2x8x28xf32> to vector<2x1x28xf32>
    %2 = vector.shape_cast %1 : vector<2x1x28xf32> to vector<2x28xf32>
    %3 = vector.extract_strided_slice %0 {offsets = [0, 1, 0], sizes = [2, 1, 28], strides = [1, 1, 1]} : vector<2x8x28xf32> to vector<2x1x28xf32>
    %4 = vector.shape_cast %3 : vector<2x1x28xf32> to vector<2x28xf32>
    %5 = vector.extract_strided_slice %0 {offsets = [0, 2, 0], sizes = [2, 1, 28], strides = [1, 1, 1]} : vector<2x8x28xf32> to vector<2x1x28xf32>
    %6 = vector.shape_cast %5 : vector<2x1x28xf32> to vector<2x28xf32>
    %7 = vector.extract_strided_slice %0 {offsets = [0, 3, 0], sizes = [2, 1, 28], strides = [1, 1, 1]} : vector<2x8x28xf32> to vector<2x1x28xf32>
    %8 = vector.shape_cast %7 : vector<2x1x28xf32> to vector<2x28xf32>
    %9 = vector.extract_strided_slice %0 {offsets = [0, 4, 0], sizes = [2, 1, 28], strides = [1, 1, 1]} : vector<2x8x28xf32> to vector<2x1x28xf32>
    %10 = vector.shape_cast %9 : vector<2x1x28xf32> to vector<2x28xf32>
    %11 = vector.extract_strided_slice %0 {offsets = [0, 5, 0], sizes = [2, 1, 28], strides = [1, 1, 1]} : vector<2x8x28xf32> to vector<2x1x28xf32>
    %12 = vector.shape_cast %11 : vector<2x1x28xf32> to vector<2x28xf32>
    %13 = vector.extract_strided_slice %0 {offsets = [0, 6, 0], sizes = [2, 1, 28], strides = [1, 1, 1]} : vector<2x8x28xf32> to vector<2x1x28xf32>
    %14 = vector.shape_cast %13 : vector<2x1x28xf32> to vector<2x28xf32>
    %15 = vector.extract_strided_slice %0 {offsets = [0, 7, 0], sizes = [2, 1, 28], strides = [1, 1, 1]} : vector<2x8x28xf32> to vector<2x1x28xf32>
    %16 = vector.shape_cast %15 : vector<2x1x28xf32> to vector<2x28xf32>
    %17 = tpu.concatenate %2, %4, %6, %8, %10, %12, %14, %16 in 0 : vector<2x28xf32>, vector<2x28xf32>, vector<2x28xf32>, vector<2x28xf32>, vector<2x28xf32>, vector<2x28xf32>, vector<2x28xf32>, vector<2x28xf32> -> vector<16x28xf32>
    %18 = arith.truncf %17 : vector<16x28xf32> to vector<16x28xbf16>
    %c0_2 = arith.constant 0 : index
    %c0_3 = arith.constant 0 : index
    %19 = vector.load %arg1[%c0_2, %c0_3] : memref<28x512xbf16, #tpu.memory_space<vmem>>, vector<28x512xbf16>
    %cst = arith.constant dense<0.000000e+00> : vector<16x512xf32>
    %20 = tpu.matmul %18, %19, %cst {dimension_numbers = #tpu.dot_dimension_numbers<[1], [0], [0], [1], [0, 0, 1, 1], [], []>} : vector<16x28xbf16>, vector<28x512xbf16>, vector<16x512xf32> -> vector<16x512xf32>
    %c0_4 = arith.constant 0 : index
    %c0_5 = arith.constant 0 : index
    %21 = vector.load %arg3[%c0_4, %c0_5] : memref<1x512xf32, #tpu.memory_space<vmem>>, vector<1x512xf32>
    %22 = vector.broadcast %21 : vector<1x512xf32> to vector<16x512xf32>
    %23 = arith.addf %20, %22 : vector<16x512xf32>
    %cst_6 = arith.constant 0.000000e+00 : f32
    %24 = vector.broadcast %cst_6 : f32 to vector<2x128xf32>
    %25 = vector.extract_strided_slice %23 {offsets = [0, 0], sizes = [2, 512], strides = [1, 1]} : vector<16x512xf32> to vector<2x512xf32>
    %26 = arith.truncf %24 : vector<2x128xf32> to vector<2x128xbf16>
    %c0_7 = arith.constant 0 : index
    %c0_8 = arith.constant 0 : index
    %27 = vector.load %arg2[%c0_7, %c0_8] : memref<128x512xbf16, #tpu.memory_space<vmem>>, vector<128x512xbf16>
    %cst_9 = arith.constant dense<0.000000e+00> : vector<2x512xf32>
    %28 = tpu.matmul %26, %27, %cst_9 {dimension_numbers = #tpu.dot_dimension_numbers<[1], [0], [0], [1], [0, 0, 1, 1], [], []>} : vector<2x128xbf16>, vector<128x512xbf16>, vector<2x512xf32> -> vector<2x512xf32>
    %29 = arith.addf %25, %28 : vector<2x512xf32>
    %30 = vector.extract_strided_slice %29 {offsets = [0, 0], sizes = [2, 128], strides = [1, 1]} : vector<2x512xf32> to vector<2x128xf32>
    %31 = arith.negf %30 : vector<2x128xf32>
    %32 = math.exp %31 : vector<2x128xf32>
    %cst_10 = arith.constant 1.000000e+00 : f32
    %33 = vector.broadcast %cst_10 : f32 to vector<2x128xf32>
    %34 = arith.addf %33, %32 : vector<2x128xf32>
    %35 = arith.divf %33, %34 : vector<2x128xf32>
    %36 = vector.extract_strided_slice %29 {offsets = [0, 128], sizes = [2, 128], strides = [1, 1]} : vector<2x512xf32> to vector<2x128xf32>
    %37 = arith.negf %36 : vector<2x128xf32>
    %38 = math.exp %37 : vector<2x128xf32>
    %cst_11 = arith.constant 1.000000e+00 : f32
    %39 = vector.broadcast %cst_11 : f32 to vector<2x128xf32>
    %40 = arith.addf %39, %38 : vector<2x128xf32>
    %41 = arith.divf %39, %40 : vector<2x128xf32>
    %42 = vector.extract_strided_slice %29 {offsets = [0, 256], sizes = [2, 128], strides = [1, 1]} : vector<2x512xf32> to vector<2x128xf32>
    %43 = math.tanh %42 : vector<2x128xf32>
    %44 = vector.extract_strided_slice %29 {offsets = [0, 384], sizes = [2, 128], strides = [1, 1]} : vector<2x512xf32> to vector<2x128xf32>
    %45 = arith.negf %44 : vector<2x128xf32>
    %46 = math.exp %45 : vector<2x128xf32>
    %cst_12 = arith.constant 1.000000e+00 : f32
    %47 = vector.broadcast %cst_12 : f32 to vector<2x128xf32>
    %48 = arith.addf %47, %46 : vector<2x128xf32>
    %49 = arith.divf %47, %48 : vector<2x128xf32>
    %50 = arith.mulf %41, %24 : vector<2x128xf32>
    %51 = arith.mulf %35, %43 : vector<2x128xf32>
    %52 = arith.addf %50, %51 : vector<2x128xf32>
    %53 = math.tanh %52 : vector<2x128xf32>
    %54 = arith.mulf %49, %53 : vector<2x128xf32>
    %55 = arith.truncf %54 : vector<2x128xf32> to vector<2x128xbf16>
    %c0_13 = arith.constant 0 : index
    %c0_14 = arith.constant 0 : index
    %56 = vector.load %arg4[%c0_13, %c0_14] : memref<128x512xbf16, #tpu.memory_space<vmem>>, vector<128x512xbf16>
    %cst_15 = arith.constant dense<0.000000e+00> : vector<2x512xf32>
    %57 = tpu.matmul %55, %56, %cst_15 {dimension_numbers = #tpu.dot_dimension_numbers<[1], [0], [0], [1], [0, 0, 1, 1], [], []>} : vector<2x128xbf16>, vector<128x512xbf16>, vector<2x512xf32> -> vector<2x512xf32>
    %58 = arith.truncf %24 : vector<2x128xf32> to vector<2x128xbf16>
    %c0_16 = arith.constant 0 : index
    %c0_17 = arith.constant 0 : index
    %59 = vector.load %arg5[%c0_16, %c0_17] : memref<128x512xbf16, #tpu.memory_space<vmem>>, vector<128x512xbf16>
    %cst_18 = arith.constant dense<0.000000e+00> : vector<2x512xf32>
    %60 = tpu.matmul %58, %59, %cst_18 {dimension_numbers = #tpu.dot_dimension_numbers<[1], [0], [0], [1], [0, 0, 1, 1], [], []>} : vector<2x128xbf16>, vector<128x512xbf16>, vector<2x512xf32> -> vector<2x512xf32>
    %61 = arith.addf %57, %60 : vector<2x512xf32>
    %c0_19 = arith.constant 0 : index
    %c0_20 = arith.constant 0 : index
    %62 = vector.load %arg6[%c0_19, %c0_20] : memref<1x512xf32, #tpu.memory_space<vmem>>, vector<1x512xf32>
    %63 = vector.broadcast %62 : vector<1x512xf32> to vector<2x512xf32>
    %64 = arith.addf %61, %63 : vector<2x512xf32>
    %65 = vector.extract_strided_slice %64 {offsets = [0, 0], sizes = [2, 128], strides = [1, 1]} : vector<2x512xf32> to vector<2x128xf32>
    %66 = arith.negf %65 : vector<2x128xf32>
    %67 = math.exp %66 : vector<2x128xf32>
    %cst_21 = arith.constant 1.000000e+00 : f32
    %68 = vector.broadcast %cst_21 : f32 to vector<2x128xf32>
    %69 = arith.addf %68, %67 : vector<2x128xf32>
    %70 = arith.divf %68, %69 : vector<2x128xf32>
    %71 = vector.extract_strided_slice %64 {offsets = [0, 128], sizes = [2, 128], strides = [1, 1]} : vector<2x512xf32> to vector<2x128xf32>
    %72 = arith.negf %71 : vector<2x128xf32>
    %73 = math.exp %72 : vector<2x128xf32>
    %cst_22 = arith.constant 1.000000e+00 : f32
    %74 = vector.broadcast %cst_22 : f32 to vector<2x128xf32>
    %75 = arith.addf %74, %73 : vector<2x128xf32>
    %76 = arith.divf %74, %75 : vector<2x128xf32>
    %77 = vector.extract_strided_slice %64 {offsets = [0, 256], sizes = [2, 128], strides = [1, 1]} : vector<2x512xf32> to vector<2x128xf32>
    %78 = math.tanh %77 : vector<2x128xf32>
    %79 = vector.extract_strided_slice %64 {offsets = [0, 384], sizes = [2, 128], strides = [1, 1]} : vector<2x512xf32> to vector<2x128xf32>
    %80 = arith.negf %79 : vector<2x128xf32>
    %81 = math.exp %80 : vector<2x128xf32>
    %cst_23 = arith.constant 1.000000e+00 : f32
    %82 = vector.broadcast %cst_23 : f32 to vector<2x128xf32>
    %83 = arith.addf %82, %81 : vector<2x128xf32>
    %84 = arith.divf %82, %83 : vector<2x128xf32>
    %85 = arith.mulf %76, %24 : vector<2x128xf32>
    %86 = arith.mulf %70, %78 : vector<2x128xf32>
    %87 = arith.addf %85, %86 : vector<2x128xf32>
    %88 = math.tanh %87 : vector<2x128xf32>
    %89 = arith.mulf %84, %88 : vector<2x128xf32>
    %90 = vector.extract_strided_slice %23 {offsets = [2, 0], sizes = [2, 512], strides = [1, 1]} : vector<16x512xf32> to vector<2x512xf32>
    %91 = arith.truncf %54 : vector<2x128xf32> to vector<2x128xbf16>
    %c0_24 = arith.constant 0 : index
    %c0_25 = arith.constant 0 : index
    %92 = vector.load %arg2[%c0_24, %c0_25] : memref<128x512xbf16, #tpu.memory_space<vmem>>, vector<128x512xbf16>
    %cst_26 = arith.constant dense<0.000000e+00> : vector<2x512xf32>
    %93 = tpu.matmul %91, %92, %cst_26 {dimension_numbers = #tpu.dot_dimension_numbers<[1], [0], [0], [1], [0, 0, 1, 1], [], []>} : vector<2x128xbf16>, vector<128x512xbf16>, vector<2x512xf32> -> vector<2x512xf32>
    %94 = arith.addf %90, %93 : vector<2x512xf32>
    %95 = vector.extract_strided_slice %94 {offsets = [0, 0], sizes = [2, 128], strides = [1, 1]} : vector<2x512xf32> to vector<2x128xf32>
    %96 = arith.negf %95 : vector<2x128xf32>
    %97 = math.exp %96 : vector<2x128xf32>
    %cst_27 = arith.constant 1.000000e+00 : f32
    %98 = vector.broadcast %cst_27 : f32 to vector<2x128xf32>
    %99 = arith.addf %98, %97 : vector<2x128xf32>
    %100 = arith.divf %98, %99 : vector<2x128xf32>
    %101 = vector.extract_strided_slice %94 {offsets = [0, 128], sizes = [2, 128], strides = [1, 1]} : vector<2x512xf32> to vector<2x128xf32>
    %102 = arith.negf %101 : vector<2x128xf32>
    %103 = math.exp %102 : vector<2x128xf32>
    %cst_28 = arith.constant 1.000000e+00 : f32
    %104 = vector.broadcast %cst_28 : f32 to vector<2x128xf32>
    %105 = arith.addf %104, %103 : vector<2x128xf32>
    %106 = arith.divf %104, %105 : vector<2x128xf32>
    %107 = vector.extract_strided_slice %94 {offsets = [0, 256], sizes = [2, 128], strides = [1, 1]} : vector<2x512xf32> to vector<2x128xf32>
    %108 = math.tanh %107 : vector<2x128xf32>
    %109 = vector.extract_strided_slice %94 {offsets = [0, 384], sizes = [2, 128], strides = [1, 1]} : vector<2x512xf32> to vector<2x128xf32>
    %110 = arith.negf %109 : vector<2x128xf32>
    %111 = math.exp %110 : vector<2x128xf32>
    %cst_29 = arith.constant 1.000000e+00 : f32
    %112 = vector.broadcast %cst_29 : f32 to vector<2x128xf32>
    %113 = arith.addf %112, %111 : vector<2x128xf32>
    %114 = arith.divf %112, %113 : vector<2x128xf32>
    %115 = arith.mulf %106, %52 : vector<2x128xf32>
    %116 = arith.mulf %100, %108 : vector<2x128xf32>
    %117 = arith.addf %115, %116 : vector<2x128xf32>
    %118 = math.tanh %117 : vector<2x128xf32>
    %119 = arith.mulf %114, %118 : vector<2x128xf32>
    %120 = arith.truncf %119 : vector<2x128xf32> to vector<2x128xbf16>
    %c0_30 = arith.constant 0 : index
    %c0_31 = arith.constant 0 : index
    %121 = vector.load %arg4[%c0_30, %c0_31] : memref<128x512xbf16, #tpu.memory_space<vmem>>, vector<128x512xbf16>
    %cst_32 = arith.constant dense<0.000000e+00> : vector<2x512xf32>
    %122 = tpu.matmul %120, %121, %cst_32 {dimension_numbers = #tpu.dot_dimension_numbers<[1], [0], [0], [1], [0, 0, 1, 1], [], []>} : vector<2x128xbf16>, vector<128x512xbf16>, vector<2x512xf32> -> vector<2x512xf32>
    %123 = arith.truncf %89 : vector<2x128xf32> to vector<2x128xbf16>
    %c0_33 = arith.constant 0 : index
    %c0_34 = arith.constant 0 : index
    %124 = vector.load %arg5[%c0_33, %c0_34] : memref<128x512xbf16, #tpu.memory_space<vmem>>, vector<128x512xbf16>
    %cst_35 = arith.constant dense<0.000000e+00> : vector<2x512xf32>
    %125 = tpu.matmul %123, %124, %cst_35 {dimension_numbers = #tpu.dot_dimension_numbers<[1], [0], [0], [1], [0, 0, 1, 1], [], []>} : vector<2x128xbf16>, vector<128x512xbf16>, vector<2x512xf32> -> vector<2x512xf32>
    %126 = arith.addf %122, %125 : vector<2x512xf32>
    %c0_36 = arith.constant 0 : index
    %c0_37 = arith.constant 0 : index
    %127 = vector.load %arg6[%c0_36, %c0_37] : memref<1x512xf32, #tpu.memory_space<vmem>>, vector<1x512xf32>
    %128 = vector.broadcast %127 : vector<1x512xf32> to vector<2x512xf32>
    %129 = arith.addf %126, %128 : vector<2x512xf32>
    %130 = vector.extract_strided_slice %129 {offsets = [0, 0], sizes = [2, 128], strides = [1, 1]} : vector<2x512xf32> to vector<2x128xf32>
    %131 = arith.negf %130 : vector<2x128xf32>
    %132 = math.exp %131 : vector<2x128xf32>
    %cst_38 = arith.constant 1.000000e+00 : f32
    %133 = vector.broadcast %cst_38 : f32 to vector<2x128xf32>
    %134 = arith.addf %133, %132 : vector<2x128xf32>
    %135 = arith.divf %133, %134 : vector<2x128xf32>
    %136 = vector.extract_strided_slice %129 {offsets = [0, 128], sizes = [2, 128], strides = [1, 1]} : vector<2x512xf32> to vector<2x128xf32>
    %137 = arith.negf %136 : vector<2x128xf32>
    %138 = math.exp %137 : vector<2x128xf32>
    %cst_39 = arith.constant 1.000000e+00 : f32
    %139 = vector.broadcast %cst_39 : f32 to vector<2x128xf32>
    %140 = arith.addf %139, %138 : vector<2x128xf32>
    %141 = arith.divf %139, %140 : vector<2x128xf32>
    %142 = vector.extract_strided_slice %129 {offsets = [0, 256], sizes = [2, 128], strides = [1, 1]} : vector<2x512xf32> to vector<2x128xf32>
    %143 = math.tanh %142 : vector<2x128xf32>
    %144 = vector.extract_strided_slice %129 {offsets = [0, 384], sizes = [2, 128], strides = [1, 1]} : vector<2x512xf32> to vector<2x128xf32>
    %145 = arith.negf %144 : vector<2x128xf32>
    %146 = math.exp %145 : vector<2x128xf32>
    %cst_40 = arith.constant 1.000000e+00 : f32
    %147 = vector.broadcast %cst_40 : f32 to vector<2x128xf32>
    %148 = arith.addf %147, %146 : vector<2x128xf32>
    %149 = arith.divf %147, %148 : vector<2x128xf32>
    %150 = arith.mulf %141, %87 : vector<2x128xf32>
    %151 = arith.mulf %135, %143 : vector<2x128xf32>
    %152 = arith.addf %150, %151 : vector<2x128xf32>
    %153 = math.tanh %152 : vector<2x128xf32>
    %154 = arith.mulf %149, %153 : vector<2x128xf32>
    %155 = vector.extract_strided_slice %23 {offsets = [4, 0], sizes = [2, 512], strides = [1, 1]} : vector<16x512xf32> to vector<2x512xf32>
    %156 = arith.truncf %119 : vector<2x128xf32> to vector<2x128xbf16>
    %c0_41 = arith.constant 0 : index
    %c0_42 = arith.constant 0 : index
    %157 = vector.load %arg2[%c0_41, %c0_42] : memref<128x512xbf16, #tpu.memory_space<vmem>>, vector<128x512xbf16>
    %cst_43 = arith.constant dense<0.000000e+00> : vector<2x512xf32>
    %158 = tpu.matmul %156, %157, %cst_43 {dimension_numbers = #tpu.dot_dimension_numbers<[1], [0], [0], [1], [0, 0, 1, 1], [], []>} : vector<2x128xbf16>, vector<128x512xbf16>, vector<2x512xf32> -> vector<2x512xf32>
    %159 = arith.addf %155, %158 : vector<2x512xf32>
    %160 = vector.extract_strided_slice %159 {offsets = [0, 0], sizes = [2, 128], strides = [1, 1]} : vector<2x512xf32> to vector<2x128xf32>
    %161 = arith.negf %160 : vector<2x128xf32>
    %162 = math.exp %161 : vector<2x128xf32>
    %cst_44 = arith.constant 1.000000e+00 : f32
    %163 = vector.broadcast %cst_44 : f32 to vector<2x128xf32>
    %164 = arith.addf %163, %162 : vector<2x128xf32>
    %165 = arith.divf %163, %164 : vector<2x128xf32>
    %166 = vector.extract_strided_slice %159 {offsets = [0, 128], sizes = [2, 128], strides = [1, 1]} : vector<2x512xf32> to vector<2x128xf32>
    %167 = arith.negf %166 : vector<2x128xf32>
    %168 = math.exp %167 : vector<2x128xf32>
    %cst_45 = arith.constant 1.000000e+00 : f32
    %169 = vector.broadcast %cst_45 : f32 to vector<2x128xf32>
    %170 = arith.addf %169, %168 : vector<2x128xf32>
    %171 = arith.divf %169, %170 : vector<2x128xf32>
    %172 = vector.extract_strided_slice %159 {offsets = [0, 256], sizes = [2, 128], strides = [1, 1]} : vector<2x512xf32> to vector<2x128xf32>
    %173 = math.tanh %172 : vector<2x128xf32>
    %174 = vector.extract_strided_slice %159 {offsets = [0, 384], sizes = [2, 128], strides = [1, 1]} : vector<2x512xf32> to vector<2x128xf32>
    %175 = arith.negf %174 : vector<2x128xf32>
    %176 = math.exp %175 : vector<2x128xf32>
    %cst_46 = arith.constant 1.000000e+00 : f32
    %177 = vector.broadcast %cst_46 : f32 to vector<2x128xf32>
    %178 = arith.addf %177, %176 : vector<2x128xf32>
    %179 = arith.divf %177, %178 : vector<2x128xf32>
    %180 = arith.mulf %171, %117 : vector<2x128xf32>
    %181 = arith.mulf %165, %173 : vector<2x128xf32>
    %182 = arith.addf %180, %181 : vector<2x128xf32>
    %183 = math.tanh %182 : vector<2x128xf32>
    %184 = arith.mulf %179, %183 : vector<2x128xf32>
    %185 = arith.truncf %184 : vector<2x128xf32> to vector<2x128xbf16>
    %c0_47 = arith.constant 0 : index
    %c0_48 = arith.constant 0 : index
    %186 = vector.load %arg4[%c0_47, %c0_48] : memref<128x512xbf16, #tpu.memory_space<vmem>>, vector<128x512xbf16>
    %cst_49 = arith.constant dense<0.000000e+00> : vector<2x512xf32>
    %187 = tpu.matmul %185, %186, %cst_49 {dimension_numbers = #tpu.dot_dimension_numbers<[1], [0], [0], [1], [0, 0, 1, 1], [], []>} : vector<2x128xbf16>, vector<128x512xbf16>, vector<2x512xf32> -> vector<2x512xf32>
    %188 = arith.truncf %154 : vector<2x128xf32> to vector<2x128xbf16>
    %c0_50 = arith.constant 0 : index
    %c0_51 = arith.constant 0 : index
    %189 = vector.load %arg5[%c0_50, %c0_51] : memref<128x512xbf16, #tpu.memory_space<vmem>>, vector<128x512xbf16>
    %cst_52 = arith.constant dense<0.000000e+00> : vector<2x512xf32>
    %190 = tpu.matmul %188, %189, %cst_52 {dimension_numbers = #tpu.dot_dimension_numbers<[1], [0], [0], [1], [0, 0, 1, 1], [], []>} : vector<2x128xbf16>, vector<128x512xbf16>, vector<2x512xf32> -> vector<2x512xf32>
    %191 = arith.addf %187, %190 : vector<2x512xf32>
    %c0_53 = arith.constant 0 : index
    %c0_54 = arith.constant 0 : index
    %192 = vector.load %arg6[%c0_53, %c0_54] : memref<1x512xf32, #tpu.memory_space<vmem>>, vector<1x512xf32>
    %193 = vector.broadcast %192 : vector<1x512xf32> to vector<2x512xf32>
    %194 = arith.addf %191, %193 : vector<2x512xf32>
    %195 = vector.extract_strided_slice %194 {offsets = [0, 0], sizes = [2, 128], strides = [1, 1]} : vector<2x512xf32> to vector<2x128xf32>
    %196 = arith.negf %195 : vector<2x128xf32>
    %197 = math.exp %196 : vector<2x128xf32>
    %cst_55 = arith.constant 1.000000e+00 : f32
    %198 = vector.broadcast %cst_55 : f32 to vector<2x128xf32>
    %199 = arith.addf %198, %197 : vector<2x128xf32>
    %200 = arith.divf %198, %199 : vector<2x128xf32>
    %201 = vector.extract_strided_slice %194 {offsets = [0, 128], sizes = [2, 128], strides = [1, 1]} : vector<2x512xf32> to vector<2x128xf32>
    %202 = arith.negf %201 : vector<2x128xf32>
    %203 = math.exp %202 : vector<2x128xf32>
    %cst_56 = arith.constant 1.000000e+00 : f32
    %204 = vector.broadcast %cst_56 : f32 to vector<2x128xf32>
    %205 = arith.addf %204, %203 : vector<2x128xf32>
    %206 = arith.divf %204, %205 : vector<2x128xf32>
    %207 = vector.extract_strided_slice %194 {offsets = [0, 256], sizes = [2, 128], strides = [1, 1]} : vector<2x512xf32> to vector<2x128xf32>
    %208 = math.tanh %207 : vector<2x128xf32>
    %209 = vector.extract_strided_slice %194 {offsets = [0, 384], sizes = [2, 128], strides = [1, 1]} : vector<2x512xf32> to vector<2x128xf32>
    %210 = arith.negf %209 : vector<2x128xf32>
    %211 = math.exp %210 : vector<2x128xf32>
    %cst_57 = arith.constant 1.000000e+00 : f32
    %212 = vector.broadcast %cst_57 : f32 to vector<2x128xf32>
    %213 = arith.addf %212, %211 : vector<2x128xf32>
    %214 = arith.divf %212, %213 : vector<2x128xf32>
    %215 = arith.mulf %206, %152 : vector<2x128xf32>
    %216 = arith.mulf %200, %208 : vector<2x128xf32>
    %217 = arith.addf %215, %216 : vector<2x128xf32>
    %218 = math.tanh %217 : vector<2x128xf32>
    %219 = arith.mulf %214, %218 : vector<2x128xf32>
    %220 = vector.extract_strided_slice %23 {offsets = [6, 0], sizes = [2, 512], strides = [1, 1]} : vector<16x512xf32> to vector<2x512xf32>
    %221 = arith.truncf %184 : vector<2x128xf32> to vector<2x128xbf16>
    %c0_58 = arith.constant 0 : index
    %c0_59 = arith.constant 0 : index
    %222 = vector.load %arg2[%c0_58, %c0_59] : memref<128x512xbf16, #tpu.memory_space<vmem>>, vector<128x512xbf16>
    %cst_60 = arith.constant dense<0.000000e+00> : vector<2x512xf32>
    %223 = tpu.matmul %221, %222, %cst_60 {dimension_numbers = #tpu.dot_dimension_numbers<[1], [0], [0], [1], [0, 0, 1, 1], [], []>} : vector<2x128xbf16>, vector<128x512xbf16>, vector<2x512xf32> -> vector<2x512xf32>
    %224 = arith.addf %220, %223 : vector<2x512xf32>
    %225 = vector.extract_strided_slice %224 {offsets = [0, 0], sizes = [2, 128], strides = [1, 1]} : vector<2x512xf32> to vector<2x128xf32>
    %226 = arith.negf %225 : vector<2x128xf32>
    %227 = math.exp %226 : vector<2x128xf32>
    %cst_61 = arith.constant 1.000000e+00 : f32
    %228 = vector.broadcast %cst_61 : f32 to vector<2x128xf32>
    %229 = arith.addf %228, %227 : vector<2x128xf32>
    %230 = arith.divf %228, %229 : vector<2x128xf32>
    %231 = vector.extract_strided_slice %224 {offsets = [0, 128], sizes = [2, 128], strides = [1, 1]} : vector<2x512xf32> to vector<2x128xf32>
    %232 = arith.negf %231 : vector<2x128xf32>
    %233 = math.exp %232 : vector<2x128xf32>
    %cst_62 = arith.constant 1.000000e+00 : f32
    %234 = vector.broadcast %cst_62 : f32 to vector<2x128xf32>
    %235 = arith.addf %234, %233 : vector<2x128xf32>
    %236 = arith.divf %234, %235 : vector<2x128xf32>
    %237 = vector.extract_strided_slice %224 {offsets = [0, 256], sizes = [2, 128], strides = [1, 1]} : vector<2x512xf32> to vector<2x128xf32>
    %238 = math.tanh %237 : vector<2x128xf32>
    %239 = vector.extract_strided_slice %224 {offsets = [0, 384], sizes = [2, 128], strides = [1, 1]} : vector<2x512xf32> to vector<2x128xf32>
    %240 = arith.negf %239 : vector<2x128xf32>
    %241 = math.exp %240 : vector<2x128xf32>
    %cst_63 = arith.constant 1.000000e+00 : f32
    %242 = vector.broadcast %cst_63 : f32 to vector<2x128xf32>
    %243 = arith.addf %242, %241 : vector<2x128xf32>
    %244 = arith.divf %242, %243 : vector<2x128xf32>
    %245 = arith.mulf %236, %182 : vector<2x128xf32>
    %246 = arith.mulf %230, %238 : vector<2x128xf32>
    %247 = arith.addf %245, %246 : vector<2x128xf32>
    %248 = math.tanh %247 : vector<2x128xf32>
    %249 = arith.mulf %244, %248 : vector<2x128xf32>
    %250 = arith.truncf %249 : vector<2x128xf32> to vector<2x128xbf16>
    %c0_64 = arith.constant 0 : index
    %c0_65 = arith.constant 0 : index
    %251 = vector.load %arg4[%c0_64, %c0_65] : memref<128x512xbf16, #tpu.memory_space<vmem>>, vector<128x512xbf16>
    %cst_66 = arith.constant dense<0.000000e+00> : vector<2x512xf32>
    %252 = tpu.matmul %250, %251, %cst_66 {dimension_numbers = #tpu.dot_dimension_numbers<[1], [0], [0], [1], [0, 0, 1, 1], [], []>} : vector<2x128xbf16>, vector<128x512xbf16>, vector<2x512xf32> -> vector<2x512xf32>
    %253 = arith.truncf %219 : vector<2x128xf32> to vector<2x128xbf16>
    %c0_67 = arith.constant 0 : index
    %c0_68 = arith.constant 0 : index
    %254 = vector.load %arg5[%c0_67, %c0_68] : memref<128x512xbf16, #tpu.memory_space<vmem>>, vector<128x512xbf16>
    %cst_69 = arith.constant dense<0.000000e+00> : vector<2x512xf32>
    %255 = tpu.matmul %253, %254, %cst_69 {dimension_numbers = #tpu.dot_dimension_numbers<[1], [0], [0], [1], [0, 0, 1, 1], [], []>} : vector<2x128xbf16>, vector<128x512xbf16>, vector<2x512xf32> -> vector<2x512xf32>
    %256 = arith.addf %252, %255 : vector<2x512xf32>
    %c0_70 = arith.constant 0 : index
    %c0_71 = arith.constant 0 : index
    %257 = vector.load %arg6[%c0_70, %c0_71] : memref<1x512xf32, #tpu.memory_space<vmem>>, vector<1x512xf32>
    %258 = vector.broadcast %257 : vector<1x512xf32> to vector<2x512xf32>
    %259 = arith.addf %256, %258 : vector<2x512xf32>
    %260 = vector.extract_strided_slice %259 {offsets = [0, 0], sizes = [2, 128], strides = [1, 1]} : vector<2x512xf32> to vector<2x128xf32>
    %261 = arith.negf %260 : vector<2x128xf32>
    %262 = math.exp %261 : vector<2x128xf32>
    %cst_72 = arith.constant 1.000000e+00 : f32
    %263 = vector.broadcast %cst_72 : f32 to vector<2x128xf32>
    %264 = arith.addf %263, %262 : vector<2x128xf32>
    %265 = arith.divf %263, %264 : vector<2x128xf32>
    %266 = vector.extract_strided_slice %259 {offsets = [0, 128], sizes = [2, 128], strides = [1, 1]} : vector<2x512xf32> to vector<2x128xf32>
    %267 = arith.negf %266 : vector<2x128xf32>
    %268 = math.exp %267 : vector<2x128xf32>
    %cst_73 = arith.constant 1.000000e+00 : f32
    %269 = vector.broadcast %cst_73 : f32 to vector<2x128xf32>
    %270 = arith.addf %269, %268 : vector<2x128xf32>
    %271 = arith.divf %269, %270 : vector<2x128xf32>
    %272 = vector.extract_strided_slice %259 {offsets = [0, 256], sizes = [2, 128], strides = [1, 1]} : vector<2x512xf32> to vector<2x128xf32>
    %273 = math.tanh %272 : vector<2x128xf32>
    %274 = vector.extract_strided_slice %259 {offsets = [0, 384], sizes = [2, 128], strides = [1, 1]} : vector<2x512xf32> to vector<2x128xf32>
    %275 = arith.negf %274 : vector<2x128xf32>
    %276 = math.exp %275 : vector<2x128xf32>
    %cst_74 = arith.constant 1.000000e+00 : f32
    %277 = vector.broadcast %cst_74 : f32 to vector<2x128xf32>
    %278 = arith.addf %277, %276 : vector<2x128xf32>
    %279 = arith.divf %277, %278 : vector<2x128xf32>
    %280 = arith.mulf %271, %217 : vector<2x128xf32>
    %281 = arith.mulf %265, %273 : vector<2x128xf32>
    %282 = arith.addf %280, %281 : vector<2x128xf32>
    %283 = math.tanh %282 : vector<2x128xf32>
    %284 = arith.mulf %279, %283 : vector<2x128xf32>
    %285 = vector.extract_strided_slice %23 {offsets = [8, 0], sizes = [2, 512], strides = [1, 1]} : vector<16x512xf32> to vector<2x512xf32>
    %286 = arith.truncf %249 : vector<2x128xf32> to vector<2x128xbf16>
    %c0_75 = arith.constant 0 : index
    %c0_76 = arith.constant 0 : index
    %287 = vector.load %arg2[%c0_75, %c0_76] : memref<128x512xbf16, #tpu.memory_space<vmem>>, vector<128x512xbf16>
    %cst_77 = arith.constant dense<0.000000e+00> : vector<2x512xf32>
    %288 = tpu.matmul %286, %287, %cst_77 {dimension_numbers = #tpu.dot_dimension_numbers<[1], [0], [0], [1], [0, 0, 1, 1], [], []>} : vector<2x128xbf16>, vector<128x512xbf16>, vector<2x512xf32> -> vector<2x512xf32>
    %289 = arith.addf %285, %288 : vector<2x512xf32>
    %290 = vector.extract_strided_slice %289 {offsets = [0, 0], sizes = [2, 128], strides = [1, 1]} : vector<2x512xf32> to vector<2x128xf32>
    %291 = arith.negf %290 : vector<2x128xf32>
    %292 = math.exp %291 : vector<2x128xf32>
    %cst_78 = arith.constant 1.000000e+00 : f32
    %293 = vector.broadcast %cst_78 : f32 to vector<2x128xf32>
    %294 = arith.addf %293, %292 : vector<2x128xf32>
    %295 = arith.divf %293, %294 : vector<2x128xf32>
    %296 = vector.extract_strided_slice %289 {offsets = [0, 128], sizes = [2, 128], strides = [1, 1]} : vector<2x512xf32> to vector<2x128xf32>
    %297 = arith.negf %296 : vector<2x128xf32>
    %298 = math.exp %297 : vector<2x128xf32>
    %cst_79 = arith.constant 1.000000e+00 : f32
    %299 = vector.broadcast %cst_79 : f32 to vector<2x128xf32>
    %300 = arith.addf %299, %298 : vector<2x128xf32>
    %301 = arith.divf %299, %300 : vector<2x128xf32>
    %302 = vector.extract_strided_slice %289 {offsets = [0, 256], sizes = [2, 128], strides = [1, 1]} : vector<2x512xf32> to vector<2x128xf32>
    %303 = math.tanh %302 : vector<2x128xf32>
    %304 = vector.extract_strided_slice %289 {offsets = [0, 384], sizes = [2, 128], strides = [1, 1]} : vector<2x512xf32> to vector<2x128xf32>
    %305 = arith.negf %304 : vector<2x128xf32>
    %306 = math.exp %305 : vector<2x128xf32>
    %cst_80 = arith.constant 1.000000e+00 : f32
    %307 = vector.broadcast %cst_80 : f32 to vector<2x128xf32>
    %308 = arith.addf %307, %306 : vector<2x128xf32>
    %309 = arith.divf %307, %308 : vector<2x128xf32>
    %310 = arith.mulf %301, %247 : vector<2x128xf32>
    %311 = arith.mulf %295, %303 : vector<2x128xf32>
    %312 = arith.addf %310, %311 : vector<2x128xf32>
    %313 = math.tanh %312 : vector<2x128xf32>
    %314 = arith.mulf %309, %313 : vector<2x128xf32>
    %315 = arith.truncf %314 : vector<2x128xf32> to vector<2x128xbf16>
    %c0_81 = arith.constant 0 : index
    %c0_82 = arith.constant 0 : index
    %316 = vector.load %arg4[%c0_81, %c0_82] : memref<128x512xbf16, #tpu.memory_space<vmem>>, vector<128x512xbf16>
    %cst_83 = arith.constant dense<0.000000e+00> : vector<2x512xf32>
    %317 = tpu.matmul %315, %316, %cst_83 {dimension_numbers = #tpu.dot_dimension_numbers<[1], [0], [0], [1], [0, 0, 1, 1], [], []>} : vector<2x128xbf16>, vector<128x512xbf16>, vector<2x512xf32> -> vector<2x512xf32>
    %318 = arith.truncf %284 : vector<2x128xf32> to vector<2x128xbf16>
    %c0_84 = arith.constant 0 : index
    %c0_85 = arith.constant 0 : index
    %319 = vector.load %arg5[%c0_84, %c0_85] : memref<128x512xbf16, #tpu.memory_space<vmem>>, vector<128x512xbf16>
    %cst_86 = arith.constant dense<0.000000e+00> : vector<2x512xf32>
    %320 = tpu.matmul %318, %319, %cst_86 {dimension_numbers = #tpu.dot_dimension_numbers<[1], [0], [0], [1], [0, 0, 1, 1], [], []>} : vector<2x128xbf16>, vector<128x512xbf16>, vector<2x512xf32> -> vector<2x512xf32>
    %321 = arith.addf %317, %320 : vector<2x512xf32>
    %c0_87 = arith.constant 0 : index
    %c0_88 = arith.constant 0 : index
    %322 = vector.load %arg6[%c0_87, %c0_88] : memref<1x512xf32, #tpu.memory_space<vmem>>, vector<1x512xf32>
    %323 = vector.broadcast %322 : vector<1x512xf32> to vector<2x512xf32>
    %324 = arith.addf %321, %323 : vector<2x512xf32>
    %325 = vector.extract_strided_slice %324 {offsets = [0, 0], sizes = [2, 128], strides = [1, 1]} : vector<2x512xf32> to vector<2x128xf32>
    %326 = arith.negf %325 : vector<2x128xf32>
    %327 = math.exp %326 : vector<2x128xf32>
    %cst_89 = arith.constant 1.000000e+00 : f32
    %328 = vector.broadcast %cst_89 : f32 to vector<2x128xf32>
    %329 = arith.addf %328, %327 : vector<2x128xf32>
    %330 = arith.divf %328, %329 : vector<2x128xf32>
    %331 = vector.extract_strided_slice %324 {offsets = [0, 128], sizes = [2, 128], strides = [1, 1]} : vector<2x512xf32> to vector<2x128xf32>
    %332 = arith.negf %331 : vector<2x128xf32>
    %333 = math.exp %332 : vector<2x128xf32>
    %cst_90 = arith.constant 1.000000e+00 : f32
    %334 = vector.broadcast %cst_90 : f32 to vector<2x128xf32>
    %335 = arith.addf %334, %333 : vector<2x128xf32>
    %336 = arith.divf %334, %335 : vector<2x128xf32>
    %337 = vector.extract_strided_slice %324 {offsets = [0, 256], sizes = [2, 128], strides = [1, 1]} : vector<2x512xf32> to vector<2x128xf32>
    %338 = math.tanh %337 : vector<2x128xf32>
    %339 = vector.extract_strided_slice %324 {offsets = [0, 384], sizes = [2, 128], strides = [1, 1]} : vector<2x512xf32> to vector<2x128xf32>
    %340 = arith.negf %339 : vector<2x128xf32>
    %341 = math.exp %340 : vector<2x128xf32>
    %cst_91 = arith.constant 1.000000e+00 : f32
    %342 = vector.broadcast %cst_91 : f32 to vector<2x128xf32>
    %343 = arith.addf %342, %341 : vector<2x128xf32>
    %344 = arith.divf %342, %343 : vector<2x128xf32>
    %345 = arith.mulf %336, %282 : vector<2x128xf32>
    %346 = arith.mulf %330, %338 : vector<2x128xf32>
    %347 = arith.addf %345, %346 : vector<2x128xf32>
    %348 = math.tanh %347 : vector<2x128xf32>
    %349 = arith.mulf %344, %348 : vector<2x128xf32>
    %350 = vector.extract_strided_slice %23 {offsets = [10, 0], sizes = [2, 512], strides = [1, 1]} : vector<16x512xf32> to vector<2x512xf32>
    %351 = arith.truncf %314 : vector<2x128xf32> to vector<2x128xbf16>
    %c0_92 = arith.constant 0 : index
    %c0_93 = arith.constant 0 : index
    %352 = vector.load %arg2[%c0_92, %c0_93] : memref<128x512xbf16, #tpu.memory_space<vmem>>, vector<128x512xbf16>
    %cst_94 = arith.constant dense<0.000000e+00> : vector<2x512xf32>
    %353 = tpu.matmul %351, %352, %cst_94 {dimension_numbers = #tpu.dot_dimension_numbers<[1], [0], [0], [1], [0, 0, 1, 1], [], []>} : vector<2x128xbf16>, vector<128x512xbf16>, vector<2x512xf32> -> vector<2x512xf32>
    %354 = arith.addf %350, %353 : vector<2x512xf32>
    %355 = vector.extract_strided_slice %354 {offsets = [0, 0], sizes = [2, 128], strides = [1, 1]} : vector<2x512xf32> to vector<2x128xf32>
    %356 = arith.negf %355 : vector<2x128xf32>
    %357 = math.exp %356 : vector<2x128xf32>
    %cst_95 = arith.constant 1.000000e+00 : f32
    %358 = vector.broadcast %cst_95 : f32 to vector<2x128xf32>
    %359 = arith.addf %358, %357 : vector<2x128xf32>
    %360 = arith.divf %358, %359 : vector<2x128xf32>
    %361 = vector.extract_strided_slice %354 {offsets = [0, 128], sizes = [2, 128], strides = [1, 1]} : vector<2x512xf32> to vector<2x128xf32>
    %362 = arith.negf %361 : vector<2x128xf32>
    %363 = math.exp %362 : vector<2x128xf32>
    %cst_96 = arith.constant 1.000000e+00 : f32
    %364 = vector.broadcast %cst_96 : f32 to vector<2x128xf32>
    %365 = arith.addf %364, %363 : vector<2x128xf32>
    %366 = arith.divf %364, %365 : vector<2x128xf32>
    %367 = vector.extract_strided_slice %354 {offsets = [0, 256], sizes = [2, 128], strides = [1, 1]} : vector<2x512xf32> to vector<2x128xf32>
    %368 = math.tanh %367 : vector<2x128xf32>
    %369 = vector.extract_strided_slice %354 {offsets = [0, 384], sizes = [2, 128], strides = [1, 1]} : vector<2x512xf32> to vector<2x128xf32>
    %370 = arith.negf %369 : vector<2x128xf32>
    %371 = math.exp %370 : vector<2x128xf32>
    %cst_97 = arith.constant 1.000000e+00 : f32
    %372 = vector.broadcast %cst_97 : f32 to vector<2x128xf32>
    %373 = arith.addf %372, %371 : vector<2x128xf32>
    %374 = arith.divf %372, %373 : vector<2x128xf32>
    %375 = arith.mulf %366, %312 : vector<2x128xf32>
    %376 = arith.mulf %360, %368 : vector<2x128xf32>
    %377 = arith.addf %375, %376 : vector<2x128xf32>
    %378 = math.tanh %377 : vector<2x128xf32>
    %379 = arith.mulf %374, %378 : vector<2x128xf32>
    %380 = arith.truncf %379 : vector<2x128xf32> to vector<2x128xbf16>
    %c0_98 = arith.constant 0 : index
    %c0_99 = arith.constant 0 : index
    %381 = vector.load %arg4[%c0_98, %c0_99] : memref<128x512xbf16, #tpu.memory_space<vmem>>, vector<128x512xbf16>
    %cst_100 = arith.constant dense<0.000000e+00> : vector<2x512xf32>
    %382 = tpu.matmul %380, %381, %cst_100 {dimension_numbers = #tpu.dot_dimension_numbers<[1], [0], [0], [1], [0, 0, 1, 1], [], []>} : vector<2x128xbf16>, vector<128x512xbf16>, vector<2x512xf32> -> vector<2x512xf32>
    %383 = arith.truncf %349 : vector<2x128xf32> to vector<2x128xbf16>
    %c0_101 = arith.constant 0 : index
    %c0_102 = arith.constant 0 : index
    %384 = vector.load %arg5[%c0_101, %c0_102] : memref<128x512xbf16, #tpu.memory_space<vmem>>, vector<128x512xbf16>
    %cst_103 = arith.constant dense<0.000000e+00> : vector<2x512xf32>
    %385 = tpu.matmul %383, %384, %cst_103 {dimension_numbers = #tpu.dot_dimension_numbers<[1], [0], [0], [1], [0, 0, 1, 1], [], []>} : vector<2x128xbf16>, vector<128x512xbf16>, vector<2x512xf32> -> vector<2x512xf32>
    %386 = arith.addf %382, %385 : vector<2x512xf32>
    %c0_104 = arith.constant 0 : index
    %c0_105 = arith.constant 0 : index
    %387 = vector.load %arg6[%c0_104, %c0_105] : memref<1x512xf32, #tpu.memory_space<vmem>>, vector<1x512xf32>
    %388 = vector.broadcast %387 : vector<1x512xf32> to vector<2x512xf32>
    %389 = arith.addf %386, %388 : vector<2x512xf32>
    %390 = vector.extract_strided_slice %389 {offsets = [0, 0], sizes = [2, 128], strides = [1, 1]} : vector<2x512xf32> to vector<2x128xf32>
    %391 = arith.negf %390 : vector<2x128xf32>
    %392 = math.exp %391 : vector<2x128xf32>
    %cst_106 = arith.constant 1.000000e+00 : f32
    %393 = vector.broadcast %cst_106 : f32 to vector<2x128xf32>
    %394 = arith.addf %393, %392 : vector<2x128xf32>
    %395 = arith.divf %393, %394 : vector<2x128xf32>
    %396 = vector.extract_strided_slice %389 {offsets = [0, 128], sizes = [2, 128], strides = [1, 1]} : vector<2x512xf32> to vector<2x128xf32>
    %397 = arith.negf %396 : vector<2x128xf32>
    %398 = math.exp %397 : vector<2x128xf32>
    %cst_107 = arith.constant 1.000000e+00 : f32
    %399 = vector.broadcast %cst_107 : f32 to vector<2x128xf32>
    %400 = arith.addf %399, %398 : vector<2x128xf32>
    %401 = arith.divf %399, %400 : vector<2x128xf32>
    %402 = vector.extract_strided_slice %389 {offsets = [0, 256], sizes = [2, 128], strides = [1, 1]} : vector<2x512xf32> to vector<2x128xf32>
    %403 = math.tanh %402 : vector<2x128xf32>
    %404 = vector.extract_strided_slice %389 {offsets = [0, 384], sizes = [2, 128], strides = [1, 1]} : vector<2x512xf32> to vector<2x128xf32>
    %405 = arith.negf %404 : vector<2x128xf32>
    %406 = math.exp %405 : vector<2x128xf32>
    %cst_108 = arith.constant 1.000000e+00 : f32
    %407 = vector.broadcast %cst_108 : f32 to vector<2x128xf32>
    %408 = arith.addf %407, %406 : vector<2x128xf32>
    %409 = arith.divf %407, %408 : vector<2x128xf32>
    %410 = arith.mulf %401, %347 : vector<2x128xf32>
    %411 = arith.mulf %395, %403 : vector<2x128xf32>
    %412 = arith.addf %410, %411 : vector<2x128xf32>
    %413 = math.tanh %412 : vector<2x128xf32>
    %414 = arith.mulf %409, %413 : vector<2x128xf32>
    %415 = vector.extract_strided_slice %23 {offsets = [12, 0], sizes = [2, 512], strides = [1, 1]} : vector<16x512xf32> to vector<2x512xf32>
    %416 = arith.truncf %379 : vector<2x128xf32> to vector<2x128xbf16>
    %c0_109 = arith.constant 0 : index
    %c0_110 = arith.constant 0 : index
    %417 = vector.load %arg2[%c0_109, %c0_110] : memref<128x512xbf16, #tpu.memory_space<vmem>>, vector<128x512xbf16>
    %cst_111 = arith.constant dense<0.000000e+00> : vector<2x512xf32>
    %418 = tpu.matmul %416, %417, %cst_111 {dimension_numbers = #tpu.dot_dimension_numbers<[1], [0], [0], [1], [0, 0, 1, 1], [], []>} : vector<2x128xbf16>, vector<128x512xbf16>, vector<2x512xf32> -> vector<2x512xf32>
    %419 = arith.addf %415, %418 : vector<2x512xf32>
    %420 = vector.extract_strided_slice %419 {offsets = [0, 0], sizes = [2, 128], strides = [1, 1]} : vector<2x512xf32> to vector<2x128xf32>
    %421 = arith.negf %420 : vector<2x128xf32>
    %422 = math.exp %421 : vector<2x128xf32>
    %cst_112 = arith.constant 1.000000e+00 : f32
    %423 = vector.broadcast %cst_112 : f32 to vector<2x128xf32>
    %424 = arith.addf %423, %422 : vector<2x128xf32>
    %425 = arith.divf %423, %424 : vector<2x128xf32>
    %426 = vector.extract_strided_slice %419 {offsets = [0, 128], sizes = [2, 128], strides = [1, 1]} : vector<2x512xf32> to vector<2x128xf32>
    %427 = arith.negf %426 : vector<2x128xf32>
    %428 = math.exp %427 : vector<2x128xf32>
    %cst_113 = arith.constant 1.000000e+00 : f32
    %429 = vector.broadcast %cst_113 : f32 to vector<2x128xf32>
    %430 = arith.addf %429, %428 : vector<2x128xf32>
    %431 = arith.divf %429, %430 : vector<2x128xf32>
    %432 = vector.extract_strided_slice %419 {offsets = [0, 256], sizes = [2, 128], strides = [1, 1]} : vector<2x512xf32> to vector<2x128xf32>
    %433 = math.tanh %432 : vector<2x128xf32>
    %434 = vector.extract_strided_slice %419 {offsets = [0, 384], sizes = [2, 128], strides = [1, 1]} : vector<2x512xf32> to vector<2x128xf32>
    %435 = arith.negf %434 : vector<2x128xf32>
    %436 = math.exp %435 : vector<2x128xf32>
    %cst_114 = arith.constant 1.000000e+00 : f32
    %437 = vector.broadcast %cst_114 : f32 to vector<2x128xf32>
    %438 = arith.addf %437, %436 : vector<2x128xf32>
    %439 = arith.divf %437, %438 : vector<2x128xf32>
    %440 = arith.mulf %431, %377 : vector<2x128xf32>
    %441 = arith.mulf %425, %433 : vector<2x128xf32>
    %442 = arith.addf %440, %441 : vector<2x128xf32>
    %443 = math.tanh %442 : vector<2x128xf32>
    %444 = arith.mulf %439, %443 : vector<2x128xf32>
    %445 = arith.truncf %444 : vector<2x128xf32> to vector<2x128xbf16>
    %c0_115 = arith.constant 0 : index
    %c0_116 = arith.constant 0 : index
    %446 = vector.load %arg4[%c0_115, %c0_116] : memref<128x512xbf16, #tpu.memory_space<vmem>>, vector<128x512xbf16>
    %cst_117 = arith.constant dense<0.000000e+00> : vector<2x512xf32>
    %447 = tpu.matmul %445, %446, %cst_117 {dimension_numbers = #tpu.dot_dimension_numbers<[1], [0], [0], [1], [0, 0, 1, 1], [], []>} : vector<2x128xbf16>, vector<128x512xbf16>, vector<2x512xf32> -> vector<2x512xf32>
    %448 = arith.truncf %414 : vector<2x128xf32> to vector<2x128xbf16>
    %c0_118 = arith.constant 0 : index
    %c0_119 = arith.constant 0 : index
    %449 = vector.load %arg5[%c0_118, %c0_119] : memref<128x512xbf16, #tpu.memory_space<vmem>>, vector<128x512xbf16>
    %cst_120 = arith.constant dense<0.000000e+00> : vector<2x512xf32>
    %450 = tpu.matmul %448, %449, %cst_120 {dimension_numbers = #tpu.dot_dimension_numbers<[1], [0], [0], [1], [0, 0, 1, 1], [], []>} : vector<2x128xbf16>, vector<128x512xbf16>, vector<2x512xf32> -> vector<2x512xf32>
    %451 = arith.addf %447, %450 : vector<2x512xf32>
    %c0_121 = arith.constant 0 : index
    %c0_122 = arith.constant 0 : index
    %452 = vector.load %arg6[%c0_121, %c0_122] : memref<1x512xf32, #tpu.memory_space<vmem>>, vector<1x512xf32>
    %453 = vector.broadcast %452 : vector<1x512xf32> to vector<2x512xf32>
    %454 = arith.addf %451, %453 : vector<2x512xf32>
    %455 = vector.extract_strided_slice %454 {offsets = [0, 0], sizes = [2, 128], strides = [1, 1]} : vector<2x512xf32> to vector<2x128xf32>
    %456 = arith.negf %455 : vector<2x128xf32>
    %457 = math.exp %456 : vector<2x128xf32>
    %cst_123 = arith.constant 1.000000e+00 : f32
    %458 = vector.broadcast %cst_123 : f32 to vector<2x128xf32>
    %459 = arith.addf %458, %457 : vector<2x128xf32>
    %460 = arith.divf %458, %459 : vector<2x128xf32>
    %461 = vector.extract_strided_slice %454 {offsets = [0, 128], sizes = [2, 128], strides = [1, 1]} : vector<2x512xf32> to vector<2x128xf32>
    %462 = arith.negf %461 : vector<2x128xf32>
    %463 = math.exp %462 : vector<2x128xf32>
    %cst_124 = arith.constant 1.000000e+00 : f32
    %464 = vector.broadcast %cst_124 : f32 to vector<2x128xf32>
    %465 = arith.addf %464, %463 : vector<2x128xf32>
    %466 = arith.divf %464, %465 : vector<2x128xf32>
    %467 = vector.extract_strided_slice %454 {offsets = [0, 256], sizes = [2, 128], strides = [1, 1]} : vector<2x512xf32> to vector<2x128xf32>
    %468 = math.tanh %467 : vector<2x128xf32>
    %469 = vector.extract_strided_slice %454 {offsets = [0, 384], sizes = [2, 128], strides = [1, 1]} : vector<2x512xf32> to vector<2x128xf32>
    %470 = arith.negf %469 : vector<2x128xf32>
    %471 = math.exp %470 : vector<2x128xf32>
    %cst_125 = arith.constant 1.000000e+00 : f32
    %472 = vector.broadcast %cst_125 : f32 to vector<2x128xf32>
    %473 = arith.addf %472, %471 : vector<2x128xf32>
    %474 = arith.divf %472, %473 : vector<2x128xf32>
    %475 = arith.mulf %466, %412 : vector<2x128xf32>
    %476 = arith.mulf %460, %468 : vector<2x128xf32>
    %477 = arith.addf %475, %476 : vector<2x128xf32>
    %478 = math.tanh %477 : vector<2x128xf32>
    %479 = arith.mulf %474, %478 : vector<2x128xf32>
    %480 = vector.extract_strided_slice %23 {offsets = [14, 0], sizes = [2, 512], strides = [1, 1]} : vector<16x512xf32> to vector<2x512xf32>
    %481 = arith.truncf %444 : vector<2x128xf32> to vector<2x128xbf16>
    %c0_126 = arith.constant 0 : index
    %c0_127 = arith.constant 0 : index
    %482 = vector.load %arg2[%c0_126, %c0_127] : memref<128x512xbf16, #tpu.memory_space<vmem>>, vector<128x512xbf16>
    %cst_128 = arith.constant dense<0.000000e+00> : vector<2x512xf32>
    %483 = tpu.matmul %481, %482, %cst_128 {dimension_numbers = #tpu.dot_dimension_numbers<[1], [0], [0], [1], [0, 0, 1, 1], [], []>} : vector<2x128xbf16>, vector<128x512xbf16>, vector<2x512xf32> -> vector<2x512xf32>
    %484 = arith.addf %480, %483 : vector<2x512xf32>
    %485 = vector.extract_strided_slice %484 {offsets = [0, 0], sizes = [2, 128], strides = [1, 1]} : vector<2x512xf32> to vector<2x128xf32>
    %486 = arith.negf %485 : vector<2x128xf32>
    %487 = math.exp %486 : vector<2x128xf32>
    %cst_129 = arith.constant 1.000000e+00 : f32
    %488 = vector.broadcast %cst_129 : f32 to vector<2x128xf32>
    %489 = arith.addf %488, %487 : vector<2x128xf32>
    %490 = arith.divf %488, %489 : vector<2x128xf32>
    %491 = vector.extract_strided_slice %484 {offsets = [0, 128], sizes = [2, 128], strides = [1, 1]} : vector<2x512xf32> to vector<2x128xf32>
    %492 = arith.negf %491 : vector<2x128xf32>
    %493 = math.exp %492 : vector<2x128xf32>
    %cst_130 = arith.constant 1.000000e+00 : f32
    %494 = vector.broadcast %cst_130 : f32 to vector<2x128xf32>
    %495 = arith.addf %494, %493 : vector<2x128xf32>
    %496 = arith.divf %494, %495 : vector<2x128xf32>
    %497 = vector.extract_strided_slice %484 {offsets = [0, 256], sizes = [2, 128], strides = [1, 1]} : vector<2x512xf32> to vector<2x128xf32>
    %498 = math.tanh %497 : vector<2x128xf32>
    %499 = vector.extract_strided_slice %484 {offsets = [0, 384], sizes = [2, 128], strides = [1, 1]} : vector<2x512xf32> to vector<2x128xf32>
    %500 = arith.negf %499 : vector<2x128xf32>
    %501 = math.exp %500 : vector<2x128xf32>
    %cst_131 = arith.constant 1.000000e+00 : f32
    %502 = vector.broadcast %cst_131 : f32 to vector<2x128xf32>
    %503 = arith.addf %502, %501 : vector<2x128xf32>
    %504 = arith.divf %502, %503 : vector<2x128xf32>
    %505 = arith.mulf %496, %442 : vector<2x128xf32>
    %506 = arith.mulf %490, %498 : vector<2x128xf32>
    %507 = arith.addf %505, %506 : vector<2x128xf32>
    %508 = math.tanh %507 : vector<2x128xf32>
    %509 = arith.mulf %504, %508 : vector<2x128xf32>
    %510 = arith.truncf %509 : vector<2x128xf32> to vector<2x128xbf16>
    %c0_132 = arith.constant 0 : index
    %c0_133 = arith.constant 0 : index
    %511 = vector.load %arg4[%c0_132, %c0_133] : memref<128x512xbf16, #tpu.memory_space<vmem>>, vector<128x512xbf16>
    %cst_134 = arith.constant dense<0.000000e+00> : vector<2x512xf32>
    %512 = tpu.matmul %510, %511, %cst_134 {dimension_numbers = #tpu.dot_dimension_numbers<[1], [0], [0], [1], [0, 0, 1, 1], [], []>} : vector<2x128xbf16>, vector<128x512xbf16>, vector<2x512xf32> -> vector<2x512xf32>
    %513 = arith.truncf %479 : vector<2x128xf32> to vector<2x128xbf16>
    %c0_135 = arith.constant 0 : index
    %c0_136 = arith.constant 0 : index
    %514 = vector.load %arg5[%c0_135, %c0_136] : memref<128x512xbf16, #tpu.memory_space<vmem>>, vector<128x512xbf16>
    %cst_137 = arith.constant dense<0.000000e+00> : vector<2x512xf32>
    %515 = tpu.matmul %513, %514, %cst_137 {dimension_numbers = #tpu.dot_dimension_numbers<[1], [0], [0], [1], [0, 0, 1, 1], [], []>} : vector<2x128xbf16>, vector<128x512xbf16>, vector<2x512xf32> -> vector<2x512xf32>
    %516 = arith.addf %512, %515 : vector<2x512xf32>
    %c0_138 = arith.constant 0 : index
    %c0_139 = arith.constant 0 : index
    %517 = vector.load %arg6[%c0_138, %c0_139] : memref<1x512xf32, #tpu.memory_space<vmem>>, vector<1x512xf32>
    %518 = vector.broadcast %517 : vector<1x512xf32> to vector<2x512xf32>
    %519 = arith.addf %516, %518 : vector<2x512xf32>
    %520 = vector.extract_strided_slice %519 {offsets = [0, 0], sizes = [2, 128], strides = [1, 1]} : vector<2x512xf32> to vector<2x128xf32>
    %521 = arith.negf %520 : vector<2x128xf32>
    %522 = math.exp %521 : vector<2x128xf32>
    %cst_140 = arith.constant 1.000000e+00 : f32
    %523 = vector.broadcast %cst_140 : f32 to vector<2x128xf32>
    %524 = arith.addf %523, %522 : vector<2x128xf32>
    %525 = arith.divf %523, %524 : vector<2x128xf32>
    %526 = vector.extract_strided_slice %519 {offsets = [0, 128], sizes = [2, 128], strides = [1, 1]} : vector<2x512xf32> to vector<2x128xf32>
    %527 = arith.negf %526 : vector<2x128xf32>
    %528 = math.exp %527 : vector<2x128xf32>
    %cst_141 = arith.constant 1.000000e+00 : f32
    %529 = vector.broadcast %cst_141 : f32 to vector<2x128xf32>
    %530 = arith.addf %529, %528 : vector<2x128xf32>
    %531 = arith.divf %529, %530 : vector<2x128xf32>
    %532 = vector.extract_strided_slice %519 {offsets = [0, 256], sizes = [2, 128], strides = [1, 1]} : vector<2x512xf32> to vector<2x128xf32>
    %533 = math.tanh %532 : vector<2x128xf32>
    %534 = vector.extract_strided_slice %519 {offsets = [0, 384], sizes = [2, 128], strides = [1, 1]} : vector<2x512xf32> to vector<2x128xf32>
    %535 = arith.negf %534 : vector<2x128xf32>
    %536 = math.exp %535 : vector<2x128xf32>
    %cst_142 = arith.constant 1.000000e+00 : f32
    %537 = vector.broadcast %cst_142 : f32 to vector<2x128xf32>
    %538 = arith.addf %537, %536 : vector<2x128xf32>
    %539 = arith.divf %537, %538 : vector<2x128xf32>
    %540 = arith.mulf %531, %477 : vector<2x128xf32>
    %541 = arith.mulf %525, %533 : vector<2x128xf32>
    %542 = arith.addf %540, %541 : vector<2x128xf32>
    %543 = math.tanh %542 : vector<2x128xf32>
    %544 = arith.mulf %539, %543 : vector<2x128xf32>
    %c0_143 = arith.constant 0 : index
    %c0_144 = arith.constant 0 : index
    %545 = vector.load %arg7[%c0_143, %c0_144] : memref<128x10xf32, #tpu.memory_space<vmem>>, vector<128x10xf32>
    %cst_145 = arith.constant dense<0.000000e+00> : vector<2x10xf32>
    %546 = tpu.matmul %544, %545, %cst_145 {dimension_numbers = #tpu.dot_dimension_numbers<[1], [0], [0], [1], [0, 0, 1, 1], [], []>} : vector<2x128xf32>, vector<128x10xf32>, vector<2x10xf32> -> vector<2x10xf32>
    %c0_146 = arith.constant 0 : index
    %c0_147 = arith.constant 0 : index
    %547 = vector.load %arg8[%c0_146, %c0_147] : memref<1x10xf32, #tpu.memory_space<vmem>>, vector<1x10xf32>
    %548 = vector.broadcast %547 : vector<1x10xf32> to vector<2x10xf32>
    %549 = arith.addf %546, %548 : vector<2x10xf32>
    %c0_148 = arith.constant 0 : index
    %c0_149 = arith.constant 0 : index
    %550 = vector.load %arg9[%c0_148, %c0_149] : memref<2x10xf32, #tpu.memory_space<vmem>>, vector<2x10xf32>
    tpu.vector_store %arg9[%c0_148, %c0_149], %549 {strides = array<i32>} : memref<2x10xf32, #tpu.memory_space<vmem>>, vector<2x10xf32>,
    return
  }
}

</mosaic_0001>

<llo_original>
// kernel: rnn_fused_forward.1
$region0: #{rnn_fused_forward.1}
  #allocation0 [shape = 'u32[]', space=smem, size = 0x4, offset = 0x4, fixed_abs, tag = 'smem constant byte address 0x4 - core index']
  #allocation1 [shape = 'u32[72,128]{1,0:T(1,128)}', space=vmem, size = 0x9000, scoped, tag = 'internal scratch']
  %s0 = inlined_call_operand.vmem [shape: f32[2,8,28], index: 0, kind: input, shape index: {}]
  %s1 = inlined_call_operand.vmem [shape: bf16[28,512], index: 1, kind: input, shape index: {}]
  %s2 = inlined_call_operand.hbm [shape: bf16[128,512], index: 2, kind: input, shape index: {}]
  %s3 = inlined_call_operand.vmem [shape: f32[1,512], index: 3, kind: input, shape index: {}]
  %s4 = inlined_call_operand.hbm [shape: bf16[128,512], index: 4, kind: input, shape index: {}]
  %s5 = inlined_call_operand.hbm [shape: bf16[128,512], index: 5, kind: input, shape index: {}]
  %s6 = inlined_call_operand.vmem [shape: f32[1,512], index: 6, kind: input, shape index: {}]
  %s7 = inlined_call_operand.vmem [shape: f32[128,10], index: 7, kind: input, shape index: {}]
  %s8 = inlined_call_operand.vmem [shape: f32[1,10], index: 8, kind: input, shape index: {}]
  %s9 = inlined_call_operand.hbm [shape: f32[2,10], index: 9, kind: output, shape index: {}]
  %s10 = sld [smem:[#allocation0]]
  $region58: #{rnn_fused_forward.1} parent=0
    _
  %s12 = ssub.s32 1, %s10
  %s13 = scalar_select 0, %s12, %s10
  $region1: #{rnn_fused_forward.1} parent=0
    #allocation2 [shape = 'u8[131072]{0}', space=vmem, size = 0x20000, scoped, tag = 'input window, operand 2, single buffered']
    #allocation3 [shape = 's32[1]{0}', space=sflag, size = 0x4, scoped, tag = 'scoped memory for rnn_fused_forward.1']
    #allocation4 [shape = 's32[1]{0}', space=sflag, size = 0x4, scoped, tag = 'scoped memory for rnn_fused_forward.1']
    #allocation5 [shape = 'u8[131072]{0}', space=vmem, size = 0x20000, scoped, tag = 'input window, operand 4, single buffered']
    #allocation6 [shape = 's32[1]{0}', space=sflag, size = 0x4, scoped, tag = 'scoped memory for rnn_fused_forward.1']
    #allocation7 [shape = 'u8[131072]{0}', space=vmem, size = 0x20000, scoped, tag = 'input window, operand 5, single buffered']
    #allocation8 [shape = 'u8[1024]{0}', space=vmem, size = 0x400, scoped, tag = 'output window, operand 0, single buffered']
    %14 = vsyncpa [#allocation3], 0
    %15 = vsyncpa [#allocation6], 0
    %16 = vsyncpa [#allocation4], 0
    // Predicated region
    $region2: #{rnn_fused_forward.1} parent=1 // pred_check
      _
    $region3: #{rnn_fused_forward.1} parent=1 // pred_check_branch
      %18 = sbr.rel (0) target = $region5
    $region4: #{rnn_fused_forward.1} parent=1 // pred_region
      _
    $region5: #{rnn_fused_forward.1} parent=1 // pred_fallthru
      _
    // Predicated region
    $region6: #{rnn_fused_forward.1} parent=1 // pred_check
      _
    $region7: #{rnn_fused_forward.1} parent=1 // pred_check_branch
      %20 = sbr.rel (0) target = $region9
    $region8: #{rnn_fused_forward.1} parent=1 // pred_region
      _
    $region9: #{rnn_fused_forward.1} parent=1 // pred_fallthru
      _
    // Predicated region
    $region10: #{rnn_fused_forward.1} parent=1 // pred_check
      _
    $region11: #{rnn_fused_forward.1} parent=1 // pred_check_branch
      %22 = sbr.rel (0) target = $region13
    $region12: #{rnn_fused_forward.1} parent=1 // pred_region
      %24 = vsyncadd [#allocation3], 0
      %s25 = sshll.u32 %s2, 4
      %s26 = int_to_ptr.hbm [resolvable:$true] %s25
      %s27 = sshll.u32 [#allocation2], 4
      %s28 = int_to_ptr.vmem [resolvable:$true] %s27
      %33 = dma.hbm_to_vmem [thread:$0]  %s26, 4096, %s28, [#allocation3], 256, 256, 16
    $region13: #{rnn_fused_forward.1} parent=1 // pred_fallthru
      _
    // Predicated region
    $region14: #{rnn_fused_forward.1} parent=1 // pred_check
      _
    $region15: #{rnn_fused_forward.1} parent=1 // pred_check_branch
      %35 = sbr.rel (0) target = $region17
    $region16: #{rnn_fused_forward.1} parent=1 // pred_region
      _
    $region17: #{rnn_fused_forward.1} parent=1 // pred_fallthru
      _
    // Predicated region
    $region18: #{rnn_fused_forward.1} parent=1 // pred_check
      _
    $region19: #{rnn_fused_forward.1} parent=1 // pred_check_branch
      %37 = sbr.rel (0) target = $region21
    $region20: #{rnn_fused_forward.1} parent=1 // pred_region
      %39 = vsyncadd [#allocation6], 0
      %s40 = sshll.u32 %s4, 4
      %s41 = int_to_ptr.hbm [resolvable:$true] %s40
      %s42 = sshll.u32 [#allocation5], 4
      %s43 = int_to_ptr.vmem [resolvable:$true] %s42
      %48 = dma.hbm_to_vmem [thread:$0]  %s41, 4096, %s43, [#allocation6], 256, 256, 16
    $region21: #{rnn_fused_forward.1} parent=1 // pred_fallthru
      _
    // Predicated region
    $region22: #{rnn_fused_forward.1} parent=1 // pred_check
      _
    $region23: #{rnn_fused_forward.1} parent=1 // pred_check_branch
      %50 = sbr.rel (0) target = $region25
    $region24: #{rnn_fused_forward.1} parent=1 // pred_region
      %52 = vsyncadd [#allocation6], 0
      %s53 = sshll.u32 %s5, 4
      %s54 = int_to_ptr.hbm [resolvable:$true] %s53
      %s55 = sshll.u32 [#allocation7], 4
      %s56 = int_to_ptr.vmem [resolvable:$true] %s55
      %61 = dma.hbm_to_vmem [thread:$0]  %s54, 4096, %s56, [#allocation6], 256, 256, 16
    $region25: #{rnn_fused_forward.1} parent=1 // pred_fallthru
      _
    // Predicated region
    $region26: #{rnn_fused_forward.1} parent=1 // pred_check
      _
    $region27: #{rnn_fused_forward.1} parent=1 // pred_check_branch
      %63 = sbr.rel (0) target = $region29
    $region28: #{rnn_fused_forward.1} parent=1 // pred_region
      _
    $region29: #{rnn_fused_forward.1} parent=1 // pred_fallthru
      _
    // Predicated region
    $region30: #{rnn_fused_forward.1} parent=1 // pred_check
      _
    $region31: #{rnn_fused_forward.1} parent=1 // pred_check_branch
      %65 = sbr.rel (0) target = $region33
    $region32: #{rnn_fused_forward.1} parent=1 // pred_region
      _
    $region33: #{rnn_fused_forward.1} parent=1 // pred_fallthru
      _
    // Predicated region
    $region34: #{rnn_fused_forward.1} parent=1 // pred_check
      _
    $region35: #{rnn_fused_forward.1} parent=1 // pred_check_branch
      %67 = sbr.rel (0) target = $region37
    $region36: #{rnn_fused_forward.1} parent=1 // pred_region
      _
    $region37: #{rnn_fused_forward.1} parent=1 // pred_fallthru
      _
    // Predicated region
    $region38: #{rnn_fused_forward.1} parent=1 // pred_check
      _
    $region39: #{rnn_fused_forward.1} parent=1 // pred_check_branch
      %69 = sbr.rel (0) target = $region41
    $region40: #{rnn_fused_forward.1} parent=1 // pred_region
      %71 = dma.done [#allocation3], 4096
    $region41: #{rnn_fused_forward.1} parent=1 // pred_fallthru
      _
    // Predicated region
    $region42: #{rnn_fused_forward.1} parent=1 // pred_check
      _
    $region43: #{rnn_fused_forward.1} parent=1 // pred_check_branch
      %73 = sbr.rel (0) target = $region45
    $region44: #{rnn_fused_forward.1} parent=1 // pred_region
      %75 = dma.done [#allocation6], 4096
    $region45: #{rnn_fused_forward.1} parent=1 // pred_fallthru
      _
    // Predicated region
    $region46: #{rnn_fused_forward.1} parent=1 // pred_check
      _
    $region47: #{rnn_fused_forward.1} parent=1 // pred_check_branch
      %77 = sbr.rel (0) target = $region49
    $region48: #{rnn_fused_forward.1} parent=1 // pred_region
      %79 = dma.done [#allocation6], 4096
    $region49: #{rnn_fused_forward.1} parent=1 // pred_fallthru
      _
    %v81 = vld [vmem:[%s0] sm:$0xff]
    %v82 = vld [vmem:[%s0 + $0x8] sm:$0xff]
    %v85 = vrot.slane %v82, 7
    %vm86 = vcmask 1041409
    %v87 = vsel %vm86, %v85, %v81
    %v89 = vrot.slane %v81, 7
    %v90 = vrot.slane %v82, 6
    %vm91 = vcmask 1043459
    %v92 = vsel %vm91, %v90, %v89
    %v94 = vrot.slane %v81, 6
    %v95 = vrot.slane %v82, 5
    %vm96 = vcmask 1045509
    %v97 = vsel %vm96, %v95, %v94
    %v99 = vrot.slane %v81, 5
    %v100 = vrot.slane %v82, 4
    %vm101 = vcmask 1047559
    %v102 = vsel %vm101, %v100, %v99
    %v104 = vrot.slane %v81, 4
    %v105 = vrot.slane %v82, 3
    %v106 = vsel %vm86, %v105, %v104
    %v108 = vrot.slane %v81, 3
    %v109 = vrot.slane %v82, 2
    %v110 = vsel %vm91, %v109, %v108
    %v112 = vrot.slane %v81, 2
    %v113 = vrot.slane %v82, 1
    %v114 = vsel %vm96, %v113, %v112
    %v116 = vrot.slane %v81, 1
    %v117 = vsel %vm101, %v82, %v116
    %vm119 = vcmask 1041408
    %v120 = vsel %vm119, %v87, %v92
    %vm121 = vcmask 1043456
    %v122 = vsel %vm121, %v120, %v97
    %vm123 = vcmask 1045504
    %v124 = vsel %vm123, %v122, %v102
    %v125 = vsel %vm119, %v106, %v110
    %v126 = vsel %vm121, %v125, %v114
    %v127 = vsel %vm123, %v126, %v117
    %v128 = vpack.c.bf16 %v127, %v124
    %v129 = vld [vmem:[%s1] sm:$0xff]
    %v130 = vld [vmem:[%s1 + $0x8] sm:$0xff]
    %v131 = vld [vmem:[%s1 + $0x10] sm:$0xff]
    %v132 = vld [vmem:[%s1 + $0x18] sm:$0xff]
    %v133 = vld [vmem:[%s1 + $0x20] sm:$0xff]
    %v134 = vld [vmem:[%s1 + $0x28] sm:$0xff]
    %v135 = vld [vmem:[%s1 + $0x30] sm:$0x33]
    %v136 = vld [vmem:[%s1 + $0x38] sm:$0x33]
    %v137 = vld [vmem:[%s3] sm:$0xf]
    %v139 = vperm.slane %v137, 0
    %v140 = vperm.slane %v137, 1
    %v141 = vperm.slane %v137, 2
    %v142 = vperm.slane %v137, 3
    %v155 = vunpack.c.l.b16 %v129
    %v156 = vunpack.c.h.b16 %v129
    %v157 = vunpack.c.l.b16 %v130
    %v158 = vunpack.c.h.b16 %v130
    %v159 = vunpack.c.l.b16 %v131
    %v160 = vunpack.c.h.b16 %v131
    %v161 = vunpack.c.l.b16 %v132
    %v162 = vunpack.c.h.b16 %v132
    %v163 = vunpack.c.l.b16 %v133
    %v164 = vunpack.c.h.b16 %v133
    %v165 = vunpack.c.l.b16 %v134
    %v166 = vunpack.c.h.b16 %v134
    %v167 = vunpack.c.l.b16 %v135
    %v168 = vunpack.c.h.b16 %v135
    %v169 = vunpack.c.l.b16 %v136
    %v170 = vunpack.c.h.b16 %v136
    %v171 = vpack.c.b16 %v159, %v155
    %v172 = vpack.c.b16 %v160, %v156
    %v173 = vpack.c.b16 %v161, %v157
    %v174 = vpack.c.b16 %v162, %v158
    %v175 = vpack.c.b16 %v167, %v163
    %v176 = vpack.c.b16 %v168, %v164
    %v177 = vpack.c.b16 %v169, %v165
    %v178 = vpack.c.b16 %v170, %v166
    %vm183 = vcmask 228352
    %v185 = vsel %vm183, %v128, 0
    %v188 = vsel %vm123, %v175, 0
    %v191 = vsel %vm123, %v176, 0
    %v194 = vsel %vm123, %v177, 0
    %v197 = vsel %vm123, %v178, 0
    %199 = vmatpush.bf16.msra.mxu0 0
    %200 = vmatpush.bf16.msra.mxu0 0
    %201 = vmatpush.bf16.msra.mxu0 0
    %202 = vmatpush.bf16.msra.mxu0 0
    %203 = vmatpush.bf16.msra.mxu0 0
    %204 = vmatpush.bf16.msra.mxu0 0
    %205 = vmatpush.bf16.msra.mxu0 %v188
    %206 = vmatpush.bf16.msra.mxu0 %v171
    %207 = vmatmul.bf16.gmra.mxu0 %v185
    %v208 = vpop.f32.mrf.mxu0
    %v209 = vadd.f32 %v139, %v208
    %v210 = vpop.f32.mrf.mxu0
    %v211 = vadd.f32 %v139, %v210
    %212 = vdwg.mxu0
    %213 = vmatpush.bf16.msra.mxu0 0
    %214 = vmatpush.bf16.msra.mxu0 0
    %215 = vmatpush.bf16.msra.mxu0 0
    %216 = vmatpush.bf16.msra.mxu0 0
    %217 = vmatpush.bf16.msra.mxu0 0
    %218 = vmatpush.bf16.msra.mxu0 0
    %219 = vmatpush.bf16.msra.mxu0 %v191
    %220 = vmatpush.bf16.msra.mxu0 %v172
    %221 = vmatmul.bf16.gmra.mxu0 %v185
    %v222 = vpop.f32.mrf.mxu0
    %v223 = vadd.f32 %v140, %v222
    %v224 = vpop.f32.mrf.mxu0
    %v225 = vadd.f32 %v140, %v224
    %226 = vdwg.mxu0
    %227 = vmatpush.bf16.msra.mxu0 0
    %228 = vmatpush.bf16.msra.mxu0 0
    %229 = vmatpush.bf16.msra.mxu0 0
    %230 = vmatpush.bf16.msra.mxu0 0
    %231 = vmatpush.bf16.msra.mxu0 0
    %232 = vmatpush.bf16.msra.mxu0 0
    %233 = vmatpush.bf16.msra.mxu0 %v194
    %234 = vmatpush.bf16.msra.mxu0 %v173
    %235 = vmatmul.bf16.gmra.mxu0 %v185
    %v236 = vpop.f32.mrf.mxu0
    %v237 = vadd.f32 %v141, %v236
    %v238 = vpop.f32.mrf.mxu0
    %v239 = vadd.f32 %v141, %v238
    %240 = vdwg.mxu0
    %241 = vmatpush.bf16.msra.mxu0 0
    %242 = vmatpush.bf16.msra.mxu0 0
    %243 = vmatpush.bf16.msra.mxu0 0
    %244 = vmatpush.bf16.msra.mxu0 0
    %245 = vmatpush.bf16.msra.mxu0 0
    %246 = vmatpush.bf16.msra.mxu0 0
    %247 = vmatpush.bf16.msra.mxu0 %v197
    %248 = vmatpush.bf16.msra.mxu0 %v174
    %249 = vmatmul.bf16.gmra.mxu0 %v185
    %v250 = vpop.f32.mrf.mxu0
    %v251 = vadd.f32 %v142, %v250
    %v252 = vpop.f32.mrf.mxu0
    %v253 = vadd.f32 %v142, %v252
    %254 = vdwg.mxu0
    %v255 = vld [vmem:[#allocation2] sm:$0xff]
    %v256 = vld [vmem:[#allocation2 + $0x8] sm:$0xff]
    %v257 = vld [vmem:[#allocation2 + $0x10] sm:$0xff]
    %v258 = vld [vmem:[#allocation2 + $0x18] sm:$0xff]
    %v259 = vld [vmem:[#allocation2 + $0x20] sm:$0xff]
    %v260 = vld [vmem:[#allocation2 + $0x28] sm:$0xff]
    %v261 = vld [vmem:[#allocation2 + $0x30] sm:$0xff]
    %v262 = vld [vmem:[#allocation2 + $0x38] sm:$0xff]
    %v263 = vld [vmem:[#allocation2 + $0x40] sm:$0xff]
    %v264 = vld [vmem:[#allocation2 + $0x48] sm:$0xff]
    %v265 = vld [vmem:[#allocation2 + $0x50] sm:$0xff]
    %v266 = vld [vmem:[#allocation2 + $0x58] sm:$0xff]
    %v267 = vld [vmem:[#allocation2 + $0x60] sm:$0xff]
    %v268 = vld [vmem:[#allocation2 + $0x68] sm:$0xff]
    %v269 = vld [vmem:[#allocation2 + $0x70] sm:$0xff]
    %v270 = vld [vmem:[#allocation2 + $0x78] sm:$0xff]
    %v271 = vld [vmem:[#allocation2 + $0x80] sm:$0xff]
    %v272 = vld [vmem:[#allocation2 + $0x88] sm:$0xff]
    %v273 = vld [vmem:[#allocation2 + $0x90] sm:$0xff]
    %v274 = vld [vmem:[#allocation2 + $0x98] sm:$0xff]
    %v275 = vld [vmem:[#allocation2 + $0xa0] sm:$0xff]
    %v276 = vld [vmem:[#allocation2 + $0xa8] sm:$0xff]
    %v277 = vld [vmem:[#allocation2 + $0xb0] sm:$0xff]
    %v278 = vld [vmem:[#allocation2 + $0xb8] sm:$0xff]
    %v279 = vld [vmem:[#allocation2 + $0xc0] sm:$0xff]
    %v280 = vld [vmem:[#allocation2 + $0xc8] sm:$0xff]
    %v281 = vld [vmem:[#allocation2 + $0xd0] sm:$0xff]
    %v282 = vld [vmem:[#allocation2 + $0xd8] sm:$0xff]
    %v283 = vld [vmem:[#allocation2 + $0xe0] sm:$0xff]
    %v284 = vld [vmem:[#allocation2 + $0xe8] sm:$0xff]
    %v285 = vld [vmem:[#allocation2 + $0xf0] sm:$0xff]
    %v286 = vld [vmem:[#allocation2 + $0xf8] sm:$0xff]
    %v319 = vunpack.c.l.b16 %v255
    %v320 = vunpack.c.h.b16 %v255
    %v321 = vunpack.c.l.b16 %v256
    %v322 = vunpack.c.h.b16 %v256
    %v323 = vunpack.c.l.b16 %v257
    %v324 = vunpack.c.h.b16 %v257
    %v325 = vunpack.c.l.b16 %v258
    %v326 = vunpack.c.h.b16 %v258
    %v327 = vunpack.c.l.b16 %v259
    %v328 = vunpack.c.h.b16 %v259
    %v329 = vunpack.c.l.b16 %v260
    %v330 = vunpack.c.h.b16 %v260
    %v331 = vunpack.c.l.b16 %v261
    %v332 = vunpack.c.h.b16 %v261
    %v333 = vunpack.c.l.b16 %v262
    %v334 = vunpack.c.h.b16 %v262
    %v335 = vunpack.c.l.b16 %v263
    %v336 = vunpack.c.h.b16 %v263
    %v337 = vunpack.c.l.b16 %v264
    %v338 = vunpack.c.h.b16 %v264
    %v339 = vunpack.c.l.b16 %v265
    %v340 = vunpack.c.h.b16 %v265
    %v341 = vunpack.c.l.b16 %v266
    %v342 = vunpack.c.h.b16 %v266
    %v343 = vunpack.c.l.b16 %v267
    %v344 = vunpack.c.h.b16 %v267
    %v345 = vunpack.c.l.b16 %v268
    %v346 = vunpack.c.h.b16 %v268
    %v347 = vunpack.c.l.b16 %v269
    %v348 = vunpack.c.h.b16 %v269
    %v349 = vunpack.c.l.b16 %v270
    %v350 = vunpack.c.h.b16 %v270
    %v351 = vunpack.c.l.b16 %v271
    %v352 = vunpack.c.h.b16 %v271
    %v353 = vunpack.c.l.b16 %v272
    %v354 = vunpack.c.h.b16 %v272
    %v355 = vunpack.c.l.b16 %v273
    %v356 = vunpack.c.h.b16 %v273
    %v357 = vunpack.c.l.b16 %v274
    %v358 = vunpack.c.h.b16 %v274
    %v359 = vunpack.c.l.b16 %v275
    %v360 = vunpack.c.h.b16 %v275
    %v361 = vunpack.c.l.b16 %v276
    %v362 = vunpack.c.h.b16 %v276
    %v363 = vunpack.c.l.b16 %v277
    %v364 = vunpack.c.h.b16 %v277
    %v365 = vunpack.c.l.b16 %v278
    %v366 = vunpack.c.h.b16 %v278
    %v367 = vunpack.c.l.b16 %v279
    %v368 = vunpack.c.h.b16 %v279
    %v369 = vunpack.c.l.b16 %v280
    %v370 = vunpack.c.h.b16 %v280
    %v371 = vunpack.c.l.b16 %v281
    %v372 = vunpack.c.h.b16 %v281
    %v373 = vunpack.c.l.b16 %v282
    %v374 = vunpack.c.h.b16 %v282
    %v375 = vunpack.c.l.b16 %v283
    %v376 = vunpack.c.h.b16 %v283
    %v377 = vunpack.c.l.b16 %v284
    %v378 = vunpack.c.h.b16 %v284
    %v379 = vunpack.c.l.b16 %v285
    %v380 = vunpack.c.h.b16 %v285
    %v381 = vunpack.c.l.b16 %v286
    %v382 = vunpack.c.h.b16 %v286
    %v383 = vpack.c.b16 %v323, %v319
    %v384 = vpack.c.b16 %v324, %v320
    %v385 = vpack.c.b16 %v325, %v321
    %v386 = vpack.c.b16 %v326, %v322
    %v387 = vpack.c.b16 %v331, %v327
    %v388 = vpack.c.b16 %v332, %v328
    %v389 = vpack.c.b16 %v333, %v329
    %v390 = vpack.c.b16 %v334, %v330
    %v391 = vpack.c.b16 %v339, %v335
    %v392 = vpack.c.b16 %v340, %v336
    %v393 = vpack.c.b16 %v341, %v337
    %v394 = vpack.c.b16 %v342, %v338
    %v395 = vpack.c.b16 %v347, %v343
    %v396 = vpack.c.b16 %v348, %v344
    %v397 = vpack.c.b16 %v349, %v345
    %v398 = vpack.c.b16 %v350, %v346
    %v399 = vpack.c.b16 %v355, %v351
    %v400 = vpack.c.b16 %v356, %v352
    %v401 = vpack.c.b16 %v357, %v353
    %v402 = vpack.c.b16 %v358, %v354
    %v403 = vpack.c.b16 %v363, %v359
    %v404 = vpack.c.b16 %v364, %v360
    %v405 = vpack.c.b16 %v365, %v361
    %v406 = vpack.c.b16 %v366, %v362
    %v407 = vpack.c.b16 %v371, %v367
    %v408 = vpack.c.b16 %v372, %v368
    %v409 = vpack.c.b16 %v373, %v369
    %v410 = vpack.c.b16 %v374, %v370
    %v411 = vpack.c.b16 %v379, %v375
    %v412 = vpack.c.b16 %v380, %v376
    %v413 = vpack.c.b16 %v381, %v377
    %v414 = vpack.c.b16 %v382, %v378
    %447 = vmatpush.bf16.msra.mxu0 %v411
    %448 = vmatpush.bf16.msra.mxu0 %v407
    %449 = vmatpush.bf16.msra.mxu0 %v403
    %450 = vmatpush.bf16.msra.mxu0 %v399
    %451 = vmatpush.bf16.msra.mxu0 %v395
    %452 = vmatpush.bf16.msra.mxu0 %v391
    %453 = vmatpush.bf16.msra.mxu0 %v387
    %454 = vmatpush.bf16.msra.mxu0 %v383
    %455 = vmatmul.bf16.gmra.mxu0 0
    %v456 = vpop.f32.mrf.mxu0
    %v457 = vadd.f32 0.0, %v456
    %v458 = vpop.f32.mrf.mxu0
    %459 = vdwg.mxu0
    %460 = vmatpush.bf16.msra.mxu0 %v412
    %461 = vmatpush.bf16.msra.mxu0 %v408
    %462 = vmatpush.bf16.msra.mxu0 %v404
    %463 = vmatpush.bf16.msra.mxu0 %v400
    %464 = vmatpush.bf16.msra.mxu0 %v396
    %465 = vmatpush.bf16.msra.mxu0 %v392
    %466 = vmatpush.bf16.msra.mxu0 %v388
    %467 = vmatpush.bf16.msra.mxu0 %v384
    %468 = vmatmul.bf16.gmra.mxu0 0
    %v469 = vpop.f32.mrf.mxu0
    %v470 = vadd.f32 0.0, %v469
    %v471 = vpop.f32.mrf.mxu0
    %472 = vdwg.mxu0
    %473 = vmatpush.bf16.msra.mxu0 %v413
    %474 = vmatpush.bf16.msra.mxu0 %v409
    %475 = vmatpush.bf16.msra.mxu0 %v405
    %476 = vmatpush.bf16.msra.mxu0 %v401
    %477 = vmatpush.bf16.msra.mxu0 %v397
    %478 = vmatpush.bf16.msra.mxu0 %v393
    %479 = vmatpush.bf16.msra.mxu0 %v389
    %480 = vmatpush.bf16.msra.mxu0 %v385
    %481 = vmatmul.bf16.gmra.mxu0 0
    %v482 = vpop.f32.mrf.mxu0
    %v483 = vadd.f32 0.0, %v482
    %v484 = vpop.f32.mrf.mxu0
    %485 = vdwg.mxu0
    %486 = vmatpush.bf16.msra.mxu0 %v414
    %487 = vmatpush.bf16.msra.mxu0 %v410
    %488 = vmatpush.bf16.msra.mxu0 %v406
    %489 = vmatpush.bf16.msra.mxu0 %v402
    %490 = vmatpush.bf16.msra.mxu0 %v398
    %491 = vmatpush.bf16.msra.mxu0 %v394
    %492 = vmatpush.bf16.msra.mxu0 %v390
    %493 = vmatpush.bf16.msra.mxu0 %v386
    %494 = vmatmul.bf16.gmra.mxu0 0
    %v495 = vpop.f32.mrf.mxu0
    %v496 = vadd.f32 0.0, %v495
    %v497 = vpop.f32.mrf.mxu0
    %498 = vdwg.mxu0
    %v499 = vadd.f32 %v209, %v457
    %v500 = vadd.f32 %v223, %v470
    %v501 = vadd.f32 %v237, %v483
    %v502 = vadd.f32 %v251, %v496
    %v503 = vxor.u32 %v499, 2147483648
    %v504 = vmul.f32 %v503, 1.442695
    %v505 = vpow.pop %v504
    %v506 = vadd.f32 %v505, 1.0
    %v507 = vrcp.pop %v506
    %v508 = vmul.f32 %v506, %v507
    %v509 = vsub.f32 1.0, %v508
    %v510 = vmul.f32 %v507, %v509
    %v511 = vadd.f32 %v507, %v510
    %vm512 = vweird.f32 %v506
    %vm513 = vweird.f32 %v507
    %vm514 = vmor %vm512, %vm513
    %v515 = vsel %vm514, %v507, %v511
    %v516 = vand.u32 2147483647, %v506
    %vm517 = vcmp.eq.f32.partialorder %v516, 8.507059e+37
    %v518 = vand.u32 %v506, 2147483648
    %v519 = vor.u32 1.1754944e-38, %v518
    %v520 = vsel %vm517, %v519, %v515
    %v521 = vmul.f32 1.0, %v520
    %v522 = vxor.u32 %v500, 2147483648
    %v523 = vmul.f32 %v522, 1.442695
    %v524 = vpow.pop %v523
    %v525 = vadd.f32 %v524, 1.0
    %v526 = vrcp.pop %v525
    %v527 = vmul.f32 %v525, %v526
    %v528 = vsub.f32 1.0, %v527
    %v529 = vmul.f32 %v526, %v528
    %v530 = vadd.f32 %v526, %v529
    %vm531 = vweird.f32 %v525
    %vm532 = vweird.f32 %v526
    %vm533 = vmor %vm531, %vm532
    %v534 = vsel %vm533, %v526, %v530
    %v535 = vand.u32 2147483647, %v525
    %vm536 = vcmp.eq.f32.partialorder %v535, 8.507059e+37
    %v537 = vand.u32 %v525, 2147483648
    %v538 = vor.u32 1.1754944e-38, %v537
    %v539 = vsel %vm536, %v538, %v534
    %v540 = vmul.f32 1.0, %v539
    %v541 = vtanh.pop %v501
    %v542 = vxor.u32 %v502, 2147483648
    %v543 = vmul.f32 %v542, 1.442695
    %v544 = vpow.pop %v543
    %v545 = vadd.f32 %v544, 1.0
    %v546 = vrcp.pop %v545
    %v547 = vmul.f32 %v545, %v546
    %v548 = vsub.f32 1.0, %v547
    %v549 = vmul.f32 %v546, %v548
    %v550 = vadd.f32 %v546, %v549
    %vm551 = vweird.f32 %v545
    %vm552 = vweird.f32 %v546
    %vm553 = vmor %vm551, %vm552
    %v554 = vsel %vm553, %v546, %v550
    %v555 = vand.u32 2147483647, %v545
    %vm556 = vcmp.eq.f32.partialorder %v555, 8.507059e+37
    %v557 = vand.u32 %v545, 2147483648
    %v558 = vor.u32 1.1754944e-38, %v557
    %v559 = vsel %vm556, %v558, %v554
    %v560 = vmul.f32 1.0, %v559
    %v561 = vmul.f32 %v540, 0.0
    %v562 = vmul.f32 %v521, %v541
    %v563 = vadd.f32 %v561, %v562
    %v564 = vtanh.pop %v563
    %v565 = vmul.f32 %v560, %v564
    %v566 = vpack.c.bf16 %v565, %v565
    %v567 = vld [vmem:[#allocation5] sm:$0xff]
    %v568 = vld [vmem:[#allocation5 + $0x8] sm:$0xff]
    %v569 = vld [vmem:[#allocation5 + $0x10] sm:$0xff]
    %v570 = vld [vmem:[#allocation5 + $0x18] sm:$0xff]
    %v571 = vld [vmem:[#allocation5 + $0x20] sm:$0xff]
    %v572 = vld [vmem:[#allocation5 + $0x28] sm:$0xff]
    %v573 = vld [vmem:[#allocation5 + $0x30] sm:$0xff]
    %v574 = vld [vmem:[#allocation5 + $0x38] sm:$0xff]
    %v575 = vld [vmem:[#allocation5 + $0x40] sm:$0xff]
    %v576 = vld [vmem:[#allocation5 + $0x48] sm:$0xff]
    %v577 = vld [vmem:[#allocation5 + $0x50] sm:$0xff]
    %v578 = vld [vmem:[#allocation5 + $0x58] sm:$0xff]
    %v579 = vld [vmem:[#allocation5 + $0x60] sm:$0xff]
    %v580 = vld [vmem:[#allocation5 + $0x68] sm:$0xff]
    %v581 = vld [vmem:[#allocation5 + $0x70] sm:$0xff]
    %v582 = vld [vmem:[#allocation5 + $0x78] sm:$0xff]
    %v583 = vld [vmem:[#allocation5 + $0x80] sm:$0xff]
    %v584 = vld [vmem:[#allocation5 + $0x88] sm:$0xff]
    %v585 = vld [vmem:[#allocation5 + $0x90] sm:$0xff]
    %v586 = vld [vmem:[#allocation5 + $0x98] sm:$0xff]
    %v587 = vld [vmem:[#allocation5 + $0xa0] sm:$0xff]
    %v588 = vld [vmem:[#allocation5 + $0xa8] sm:$0xff]
    %v589 = vld [vmem:[#allocation5 + $0xb0] sm:$0xff]
    %v590 = vld [vmem:[#allocation5 + $0xb8] sm:$0xff]
    %v591 = vld [vmem:[#allocation5 + $0xc0] sm:$0xff]
    %v592 = vld [vmem:[#allocation5 + $0xc8] sm:$0xff]
    %v593 = vld [vmem:[#allocation5 + $0xd0] sm:$0xff]
    %v594 = vld [vmem:[#allocation5 + $0xd8] sm:$0xff]
    %v595 = vld [vmem:[#allocation5 + $0xe0] sm:$0xff]
    %v596 = vld [vmem:[#allocation5 + $0xe8] sm:$0xff]
    %v597 = vld [vmem:[#allocation5 + $0xf0] sm:$0xff]
    %v598 = vld [vmem:[#allocation5 + $0xf8] sm:$0xff]
    %v599 = vld [vmem:[#allocation7] sm:$0xff]
    %v600 = vld [vmem:[#allocation7 + $0x8] sm:$0xff]
    %v601 = vld [vmem:[#allocation7 + $0x10] sm:$0xff]
    %v602 = vld [vmem:[#allocation7 + $0x18] sm:$0xff]
    %v603 = vld [vmem:[#allocation7 + $0x20] sm:$0xff]
    %v604 = vld [vmem:[#allocation7 + $0x28] sm:$0xff]
    %v605 = vld [vmem:[#allocation7 + $0x30] sm:$0xff]
    %v606 = vld [vmem:[#allocation7 + $0x38] sm:$0xff]
    %v607 = vld [vmem:[#allocation7 + $0x40] sm:$0xff]
    %v608 = vld [vmem:[#allocation7 + $0x48] sm:$0xff]
    %v609 = vld [vmem:[#allocation7 + $0x50] sm:$0xff]
    %v610 = vld [vmem:[#allocation7 + $0x58] sm:$0xff]
    %v611 = vld [vmem:[#allocation7 + $0x60] sm:$0xff]
    %v612 = vld [vmem:[#allocation7 + $0x68] sm:$0xff]
    %v613 = vld [vmem:[#allocation7 + $0x70] sm:$0xff]
    %v614 = vld [vmem:[#allocation7 + $0x78] sm:$0xff]
    %v615 = vld [vmem:[#allocation7 + $0x80] sm:$0xff]
    %v616 = vld [vmem:[#allocation7 + $0x88] sm:$0xff]
    %v617 = vld [vmem:[#allocation7 + $0x90] sm:$0xff]
    %v618 = vld [vmem:[#allocation7 + $0x98] sm:$0xff]
    %v619 = vld [vmem:[#allocation7 + $0xa0] sm:$0xff]
    %v620 = vld [vmem:[#allocation7 + $0xa8] sm:$0xff]
    %v621 = vld [vmem:[#allocation7 + $0xb0] sm:$0xff]
    %v622 = vld [vmem:[#allocation7 + $0xb8] sm:$0xff]
    %v623 = vld [vmem:[#allocation7 + $0xc0] sm:$0xff]
    %v624 = vld [vmem:[#allocation7 + $0xc8] sm:$0xff]
    %v625 = vld [vmem:[#allocation7 + $0xd0] sm:$0xff]
    %v626 = vld [vmem:[#allocation7 + $0xd8] sm:$0xff]
    %v627 = vld [vmem:[#allocation7 + $0xe0] sm:$0xff]
    %v628 = vld [vmem:[#allocation7 + $0xe8] sm:$0xff]
    %v629 = vld [vmem:[#allocation7 + $0xf0] sm:$0xff]
    %v630 = vld [vmem:[#allocation7 + $0xf8] sm:$0xff]
    %v663 = vunpack.c.l.b16 %v599
    %v664 = vunpack.c.h.b16 %v599
    %v665 = vunpack.c.l.b16 %v600
    %v666 = vunpack.c.h.b16 %v600
    %v667 = vunpack.c.l.b16 %v601
    %v668 = vunpack.c.h.b16 %v601
    %v669 = vunpack.c.l.b16 %v602
    %v670 = vunpack.c.h.b16 %v602
    %v671 = vunpack.c.l.b16 %v603
    %v672 = vunpack.c.h.b16 %v603
    %v673 = vunpack.c.l.b16 %v604
    %v674 = vunpack.c.h.b16 %v604
    %v675 = vunpack.c.l.b16 %v605
    %v676 = vunpack.c.h.b16 %v605
    %v677 = vunpack.c.l.b16 %v606
    %v678 = vunpack.c.h.b16 %v606
    %v679 = vunpack.c.l.b16 %v607
    %v680 = vunpack.c.h.b16 %v607
    %v681 = vunpack.c.l.b16 %v608
    %v682 = vunpack.c.h.b16 %v608
    %v683 = vunpack.c.l.b16 %v609
    %v684 = vunpack.c.h.b16 %v609
    %v685 = vunpack.c.l.b16 %v610
    %v686 = vunpack.c.h.b16 %v610
    %v687 = vunpack.c.l.b16 %v611
    %v688 = vunpack.c.h.b16 %v611
    %v689 = vunpack.c.l.b16 %v612
    %v690 = vunpack.c.h.b16 %v612
    %v691 = vunpack.c.l.b16 %v613
    %v692 = vunpack.c.h.b16 %v613
    %v693 = vunpack.c.l.b16 %v614
    %v694 = vunpack.c.h.b16 %v614
    %v695 = vunpack.c.l.b16 %v615
    %v696 = vunpack.c.h.b16 %v615
    %v697 = vunpack.c.l.b16 %v616
    %v698 = vunpack.c.h.b16 %v616
    %v699 = vunpack.c.l.b16 %v617
    %v700 = vunpack.c.h.b16 %v617
    %v701 = vunpack.c.l.b16 %v618
    %v702 = vunpack.c.h.b16 %v618
    %v703 = vunpack.c.l.b16 %v619
    %v704 = vunpack.c.h.b16 %v619
    %v705 = vunpack.c.l.b16 %v620
    %v706 = vunpack.c.h.b16 %v620
    %v707 = vunpack.c.l.b16 %v621
    %v708 = vunpack.c.h.b16 %v621
    %v709 = vunpack.c.l.b16 %v622
    %v710 = vunpack.c.h.b16 %v622
    %v711 = vunpack.c.l.b16 %v623
    %v712 = vunpack.c.h.b16 %v623
    %v713 = vunpack.c.l.b16 %v624
    %v714 = vunpack.c.h.b16 %v624
    %v715 = vunpack.c.l.b16 %v625
    %v716 = vunpack.c.h.b16 %v625
    %v717 = vunpack.c.l.b16 %v626
    %v718 = vunpack.c.h.b16 %v626
    %v719 = vunpack.c.l.b16 %v627
    %v720 = vunpack.c.h.b16 %v627
    %v721 = vunpack.c.l.b16 %v628
    %v722 = vunpack.c.h.b16 %v628
    %v723 = vunpack.c.l.b16 %v629
    %v724 = vunpack.c.h.b16 %v629
    %v725 = vunpack.c.l.b16 %v630
    %v726 = vunpack.c.h.b16 %v630
    %v727 = vpack.c.b16 %v667, %v663
    %v728 = vpack.c.b16 %v668, %v664
    %v729 = vpack.c.b16 %v669, %v665
    %v730 = vpack.c.b16 %v670, %v666
    %v731 = vpack.c.b16 %v675, %v671
    %v732 = vpack.c.b16 %v676, %v672
    %v733 = vpack.c.b16 %v677, %v673
    %v734 = vpack.c.b16 %v678, %v674
    %v735 = vpack.c.b16 %v683, %v679
    %v736 = vpack.c.b16 %v684, %v680
    %v737 = vpack.c.b16 %v685, %v681
    %v738 = vpack.c.b16 %v686, %v682
    %v739 = vpack.c.b16 %v691, %v687
    %v740 = vpack.c.b16 %v692, %v688
    %v741 = vpack.c.b16 %v693, %v689
    %v742 = vpack.c.b16 %v694, %v690
    %v743 = vpack.c.b16 %v699, %v695
    %v744 = vpack.c.b16 %v700, %v696
    %v745 = vpack.c.b16 %v701, %v697
    %v746 = vpack.c.b16 %v702, %v698
    %v747 = vpack.c.b16 %v707, %v703
    %v748 = vpack.c.b16 %v708, %v704
    %v749 = vpack.c.b16 %v709, %v705
    %v750 = vpack.c.b16 %v710, %v706
    %v751 = vpack.c.b16 %v715, %v711
    %v752 = vpack.c.b16 %v716, %v712
    %v753 = vpack.c.b16 %v717, %v713
    %v754 = vpack.c.b16 %v718, %v714
    %v755 = vpack.c.b16 %v723, %v719
    %v756 = vpack.c.b16 %v724, %v720
    %v757 = vpack.c.b16 %v725, %v721
    %v758 = vpack.c.b16 %v726, %v722
    %791 = vmatpush.bf16.msra.mxu0 %v755
    %792 = vmatpush.bf16.msra.mxu0 %v751
    %793 = vmatpush.bf16.msra.mxu0 %v747
    %794 = vmatpush.bf16.msra.mxu0 %v743
    %795 = vmatpush.bf16.msra.mxu0 %v739
    %796 = vmatpush.bf16.msra.mxu0 %v735
    %797 = vmatpush.bf16.msra.mxu0 %v731
    %798 = vmatpush.bf16.msra.mxu0 %v727
    %799 = vmatmul.bf16.gmra.mxu0 0
    %v800 = vpop.f32.mrf.mxu0
    %v801 = vadd.f32 0.0, %v800
    %v802 = vpop.f32.mrf.mxu0
    %803 = vdwg.mxu0
    %804 = vmatpush.bf16.msra.mxu0 %v756
    %805 = vmatpush.bf16.msra.mxu0 %v752
    %806 = vmatpush.bf16.msra.mxu0 %v748
    %807 = vmatpush.bf16.msra.mxu0 %v744
    %808 = vmatpush.bf16.msra.mxu0 %v740
    %809 = vmatpush.bf16.msra.mxu0 %v736
    %810 = vmatpush.bf16.msra.mxu0 %v732
    %811 = vmatpush.bf16.msra.mxu0 %v728
    %812 = vmatmul.bf16.gmra.mxu0 0
    %v813 = vpop.f32.mrf.mxu0
    %v814 = vadd.f32 0.0, %v813
    %v815 = vpop.f32.mrf.mxu0
    %816 = vdwg.mxu0
    %817 = vmatpush.bf16.msra.mxu0 %v757
    %818 = vmatpush.bf16.msra.mxu0 %v753
    %819 = vmatpush.bf16.msra.mxu0 %v749
    %820 = vmatpush.bf16.msra.mxu0 %v745
    %821 = vmatpush.bf16.msra.mxu0 %v741
    %822 = vmatpush.bf16.msra.mxu0 %v737
    %823 = vmatpush.bf16.msra.mxu0 %v733
    %824 = vmatpush.bf16.msra.mxu0 %v729
    %825 = vmatmul.bf16.gmra.mxu0 0
    %v826 = vpop.f32.mrf.mxu0
    %v827 = vadd.f32 0.0, %v826
    %v828 = vpop.f32.mrf.mxu0
    %829 = vdwg.mxu0
    %830 = vmatpush.bf16.msra.mxu0 %v758
    %831 = vmatpush.bf16.msra.mxu0 %v754
    %832 = vmatpush.bf16.msra.mxu0 %v750
    %833 = vmatpush.bf16.msra.mxu0 %v746
    %834 = vmatpush.bf16.msra.mxu0 %v742
    %835 = vmatpush.bf16.msra.mxu0 %v738
    %836 = vmatpush.bf16.msra.mxu0 %v734
    %837 = vmatpush.bf16.msra.mxu0 %v730
    %838 = vmatmul.bf16.gmra.mxu0 0
    %v839 = vpop.f32.mrf.mxu0
    %v840 = vadd.f32 0.0, %v839
    %v841 = vpop.f32.mrf.mxu0
    %842 = vdwg.mxu0
    %v875 = vunpack.c.l.b16 %v567
    %v876 = vunpack.c.h.b16 %v567
    %v877 = vunpack.c.l.b16 %v568
    %v878 = vunpack.c.h.b16 %v568
    %v879 = vunpack.c.l.b16 %v569
    %v880 = vunpack.c.h.b16 %v569
    %v881 = vunpack.c.l.b16 %v570
    %v882 = vunpack.c.h.b16 %v570
    %v883 = vunpack.c.l.b16 %v571
    %v884 = vunpack.c.h.b16 %v571
    %v885 = vunpack.c.l.b16 %v572
    %v886 = vunpack.c.h.b16 %v572
    %v887 = vunpack.c.l.b16 %v573
    %v888 = vunpack.c.h.b16 %v573
    %v889 = vunpack.c.l.b16 %v574
    %v890 = vunpack.c.h.b16 %v574
    %v891 = vunpack.c.l.b16 %v575
    %v892 = vunpack.c.h.b16 %v575
    %v893 = vunpack.c.l.b16 %v576
    %v894 = vunpack.c.h.b16 %v576
    %v895 = vunpack.c.l.b16 %v577
    %v896 = vunpack.c.h.b16 %v577
    %v897 = vunpack.c.l.b16 %v578
    %v898 = vunpack.c.h.b16 %v578
    %v899 = vunpack.c.l.b16 %v579
    %v900 = vunpack.c.h.b16 %v579
    %v901 = vunpack.c.l.b16 %v580
    %v902 = vunpack.c.h.b16 %v580
    %v903 = vunpack.c.l.b16 %v581
    %v904 = vunpack.c.h.b16 %v581
    %v905 = vunpack.c.l.b16 %v582
    %v906 = vunpack.c.h.b16 %v582
    %v907 = vunpack.c.l.b16 %v583
    %v908 = vunpack.c.h.b16 %v583
    %v909 = vunpack.c.l.b16 %v584
    %v910 = vunpack.c.h.b16 %v584
    %v911 = vunpack.c.l.b16 %v585
    %v912 = vunpack.c.h.b16 %v585
    %v913 = vunpack.c.l.b16 %v586
    %v914 = vunpack.c.h.b16 %v586
    %v915 = vunpack.c.l.b16 %v587
    %v916 = vunpack.c.h.b16 %v587
    %v917 = vunpack.c.l.b16 %v588
    %v918 = vunpack.c.h.b16 %v588
    %v919 = vunpack.c.l.b16 %v589
    %v920 = vunpack.c.h.b16 %v589
    %v921 = vunpack.c.l.b16 %v590
    %v922 = vunpack.c.h.b16 %v590
    %v923 = vunpack.c.l.b16 %v591
    %v924 = vunpack.c.h.b16 %v591
    %v925 = vunpack.c.l.b16 %v592
    %v926 = vunpack.c.h.b16 %v592
    %v927 = vunpack.c.l.b16 %v593
    %v928 = vunpack.c.h.b16 %v593
    %v929 = vunpack.c.l.b16 %v594
    %v930 = vunpack.c.h.b16 %v594
    %v931 = vunpack.c.l.b16 %v595
    %v932 = vunpack.c.h.b16 %v595
    %v933 = vunpack.c.l.b16 %v596
    %v934 = vunpack.c.h.b16 %v596
    %v935 = vunpack.c.l.b16 %v597
    %v936 = vunpack.c.h.b16 %v597
    %v937 = vunpack.c.l.b16 %v598
    %v938 = vunpack.c.h.b16 %v598
    %v939 = vpack.c.b16 %v879, %v875
    %v940 = vpack.c.b16 %v880, %v876
    %v941 = vpack.c.b16 %v881, %v877
    %v942 = vpack.c.b16 %v882, %v878
    %v943 = vpack.c.b16 %v887, %v883
    %v944 = vpack.c.b16 %v888, %v884
    %v945 = vpack.c.b16 %v889, %v885
    %v946 = vpack.c.b16 %v890, %v886
    %v947 = vpack.c.b16 %v895, %v891
    %v948 = vpack.c.b16 %v896, %v892
    %v949 = vpack.c.b16 %v897, %v893
    %v950 = vpack.c.b16 %v898, %v894
    %v951 = vpack.c.b16 %v903, %v899
    %v952 = vpack.c.b16 %v904, %v900
    %v953 = vpack.c.b16 %v905, %v901
    %v954 = vpack.c.b16 %v906, %v902
    %v955 = vpack.c.b16 %v911, %v907
    %v956 = vpack.c.b16 %v912, %v908
    %v957 = vpack.c.b16 %v913, %v909
    %v958 = vpack.c.b16 %v914, %v910
    %v959 = vpack.c.b16 %v919, %v915
    %v960 = vpack.c.b16 %v920, %v916
    %v961 = vpack.c.b16 %v921, %v917
    %v962 = vpack.c.b16 %v922, %v918
    %v963 = vpack.c.b16 %v927, %v923
    %v964 = vpack.c.b16 %v928, %v924
    %v965 = vpack.c.b16 %v929, %v925
    %v966 = vpack.c.b16 %v930, %v926
    %v967 = vpack.c.b16 %v935, %v931
    %v968 = vpack.c.b16 %v936, %v932
    %v969 = vpack.c.b16 %v937, %v933
    %v970 = vpack.c.b16 %v938, %v934
    %1003 = vmatpush.bf16.msra.mxu0 %v967
    %1004 = vmatpush.bf16.msra.mxu0 %v963
    %1005 = vmatpush.bf16.msra.mxu0 %v959
    %1006 = vmatpush.bf16.msra.mxu0 %v955
    %1007 = vmatpush.bf16.msra.mxu0 %v951
    %1008 = vmatpush.bf16.msra.mxu0 %v947
    %1009 = vmatpush.bf16.msra.mxu0 %v943
    %1010 = vmatpush.bf16.msra.mxu0 %v939
    %1011 = vmatmul.bf16.gmra.mxu0 %v566
    %v1012 = vpop.f32.mrf.mxu0
    %v1013 = vadd.f32 %v801, %v1012
    %v1014 = vpop.f32.mrf.mxu0
    %1015 = vdwg.mxu0
    %1016 = vmatpush.bf16.msra.mxu0 %v968
    %1017 = vmatpush.bf16.msra.mxu0 %v964
    %1018 = vmatpush.bf16.msra.mxu0 %v960
    %1019 = vmatpush.bf16.msra.mxu0 %v956
    %1020 = vmatpush.bf16.msra.mxu0 %v952
    %1021 = vmatpush.bf16.msra.mxu0 %v948
    %1022 = vmatpush.bf16.msra.mxu0 %v944
    %1023 = vmatpush.bf16.msra.mxu0 %v940
    %1024 = vmatmul.bf16.gmra.mxu0 %v566
    %v1025 = vpop.f32.mrf.mxu0
    %v1026 = vadd.f32 %v814, %v1025
    %v1027 = vpop.f32.mrf.mxu0
    %1028 = vdwg.mxu0
    %1029 = vmatpush.bf16.msra.mxu0 %v969
    %1030 = vmatpush.bf16.msra.mxu0 %v965
    %1031 = vmatpush.bf16.msra.mxu0 %v961
    %1032 = vmatpush.bf16.msra.mxu0 %v957
    %1033 = vmatpush.bf16.msra.mxu0 %v953
    %1034 = vmatpush.bf16.msra.mxu0 %v949
    %1035 = vmatpush.bf16.msra.mxu0 %v945
    %1036 = vmatpush.bf16.msra.mxu0 %v941
    %1037 = vmatmul.bf16.gmra.mxu0 %v566
    %v1038 = vpop.f32.mrf.mxu0
    %v1039 = vadd.f32 %v827, %v1038
    %v1040 = vpop.f32.mrf.mxu0
    %1041 = vdwg.mxu0
    %1042 = vmatpush.bf16.msra.mxu0 %v970
    %1043 = vmatpush.bf16.msra.mxu0 %v966
    %1044 = vmatpush.bf16.msra.mxu0 %v962
    %1045 = vmatpush.bf16.msra.mxu0 %v958
    %1046 = vmatpush.bf16.msra.mxu0 %v954
    %1047 = vmatpush.bf16.msra.mxu0 %v950
    %1048 = vmatpush.bf16.msra.mxu0 %v946
    %1049 = vmatpush.bf16.msra.mxu0 %v942
    %1050 = vmatmul.bf16.gmra.mxu0 %v566
    %v1051 = vpop.f32.mrf.mxu0
    %v1052 = vadd.f32 %v840, %v1051
    %v1053 = vpop.f32.mrf.mxu0
    %1054 = vdwg.mxu0
    %v1055 = vld [vmem:[%s6] sm:$0xf]
    %v1057 = vperm.slane %v1055, 0
    %v1058 = vperm.slane %v1055, 1
    %v1059 = vperm.slane %v1055, 2
    %v1060 = vperm.slane %v1055, 3
    %v1065 = vadd.f32 %v1013, %v1057
    %v1066 = vadd.f32 %v1026, %v1058
    %v1067 = vadd.f32 %v1039, %v1059
    %v1068 = vadd.f32 %v1052, %v1060
    %v1069 = vxor.u32 %v1065, 2147483648
    %v1070 = vmul.f32 %v1069, 1.442695
    %v1071 = vpow.pop %v1070
    %v1072 = vadd.f32 %v1071, 1.0
    %v1073 = vrcp.pop %v1072
    %v1074 = vmul.f32 %v1072, %v1073
    %v1075 = vsub.f32 1.0, %v1074
    %v1076 = vmul.f32 %v1073, %v1075
    %v1077 = vadd.f32 %v1073, %v1076
    %vm1078 = vweird.f32 %v1072
    %vm1079 = vweird.f32 %v1073
    %vm1080 = vmor %vm1078, %vm1079
    %v1081 = vsel %vm1080, %v1073, %v1077
    %v1082 = vand.u32 2147483647, %v1072
    %vm1083 = vcmp.eq.f32.partialorder %v1082, 8.507059e+37
    %v1084 = vand.u32 %v1072, 2147483648
    %v1085 = vor.u32 1.1754944e-38, %v1084
    %v1086 = vsel %vm1083, %v1085, %v1081
    %v1087 = vmul.f32 1.0, %v1086
    %v1088 = vxor.u32 %v1066, 2147483648
    %v1089 = vmul.f32 %v1088, 1.442695
    %v1090 = vpow.pop %v1089
    %v1091 = vadd.f32 %v1090, 1.0
    %v1092 = vrcp.pop %v1091
    %v1093 = vmul.f32 %v1091, %v1092
    %v1094 = vsub.f32 1.0, %v1093
    %v1095 = vmul.f32 %v1092, %v1094
    %v1096 = vadd.f32 %v1092, %v1095
    %vm1097 = vweird.f32 %v1091
    %vm1098 = vweird.f32 %v1092
    %vm1099 = vmor %vm1097, %vm1098
    %v1100 = vsel %vm1099, %v1092, %v1096
    %v1101 = vand.u32 2147483647, %v1091
    %vm1102 = vcmp.eq.f32.partialorder %v1101, 8.507059e+37
    %v1103 = vand.u32 %v1091, 2147483648
    %v1104 = vor.u32 1.1754944e-38, %v1103
    %v1105 = vsel %vm1102, %v1104, %v1100
    %v1106 = vmul.f32 1.0, %v1105
    %v1107 = vtanh.pop %v1067
    %v1108 = vxor.u32 %v1068, 2147483648
    %v1109 = vmul.f32 %v1108, 1.442695
    %v1110 = vpow.pop %v1109
    %v1111 = vadd.f32 %v1110, 1.0
    %v1112 = vrcp.pop %v1111
    %v1113 = vmul.f32 %v1111, %v1112
    %v1114 = vsub.f32 1.0, %v1113
    %v1115 = vmul.f32 %v1112, %v1114
    %v1116 = vadd.f32 %v1112, %v1115
    %vm1117 = vweird.f32 %v1111
    %vm1118 = vweird.f32 %v1112
    %vm1119 = vmor %vm1117, %vm1118
    %v1120 = vsel %vm1119, %v1112, %v1116
    %v1121 = vand.u32 2147483647, %v1111
    %vm1122 = vcmp.eq.f32.partialorder %v1121, 8.507059e+37
    %v1123 = vand.u32 %v1111, 2147483648
    %v1124 = vor.u32 1.1754944e-38, %v1123
    %v1125 = vsel %vm1122, %v1124, %v1120
    %v1126 = vmul.f32 1.0, %v1125
    %v1127 = vmul.f32 %v1106, 0.0
    %v1128 = vmul.f32 %v1087, %v1107
    %v1129 = vadd.f32 %v1127, %v1128
    %v1130 = vtanh.pop %v1129
    %v1131 = vmul.f32 %v1126, %v1130
    %1132 = vmatpush.bf16.msra.mxu0 %v411
    %1133 = vmatpush.bf16.msra.mxu0 %v407
    %1134 = vmatpush.bf16.msra.mxu0 %v403
    %1135 = vmatpush.bf16.msra.mxu0 %v399
    %1136 = vmatpush.bf16.msra.mxu0 %v395
    %1137 = vmatpush.bf16.msra.mxu0 %v391
    %1138 = vmatpush.bf16.msra.mxu0 %v387
    %1139 = vmatpush.bf16.msra.mxu0 %v383
    %1140 = vmatmul.bf16.gmra.mxu0 %v566
    %v1141 = vpop.f32.mrf.mxu0
    %v1142 = vadd.f32 0.0, %v1141
    %v1143 = vpop.f32.mrf.mxu0
    %1144 = vdwg.mxu0
    %1145 = vmatpush.bf16.msra.mxu0 %v412
    %1146 = vmatpush.bf16.msra.mxu0 %v408
    %1147 = vmatpush.bf16.msra.mxu0 %v404
    %1148 = vmatpush.bf16.msra.mxu0 %v400
    %1149 = vmatpush.bf16.msra.mxu0 %v396
    %1150 = vmatpush.bf16.msra.mxu0 %v392
    %1151 = vmatpush.bf16.msra.mxu0 %v388
    %1152 = vmatpush.bf16.msra.mxu0 %v384
    %1153 = vmatmul.bf16.gmra.mxu0 %v566
    %v1154 = vpop.f32.mrf.mxu0
    %v1155 = vadd.f32 0.0, %v1154
    %v1156 = vpop.f32.mrf.mxu0
    %1157 = vdwg.mxu0
    %1158 = vmatpush.bf16.msra.mxu0 %v413
    %1159 = vmatpush.bf16.msra.mxu0 %v409
    %1160 = vmatpush.bf16.msra.mxu0 %v405
    %1161 = vmatpush.bf16.msra.mxu0 %v401
    %1162 = vmatpush.bf16.msra.mxu0 %v397
    %1163 = vmatpush.bf16.msra.mxu0 %v393
    %1164 = vmatpush.bf16.msra.mxu0 %v389
    %1165 = vmatpush.bf16.msra.mxu0 %v385
    %1166 = vmatmul.bf16.gmra.mxu0 %v566
    %v1167 = vpop.f32.mrf.mxu0
    %v1168 = vadd.f32 0.0, %v1167
    %v1169 = vpop.f32.mrf.mxu0
    %1170 = vdwg.mxu0
    %1171 = vmatpush.bf16.msra.mxu0 %v414
    %1172 = vmatpush.bf16.msra.mxu0 %v410
    %1173 = vmatpush.bf16.msra.mxu0 %v406
    %1174 = vmatpush.bf16.msra.mxu0 %v402
    %1175 = vmatpush.bf16.msra.mxu0 %v398
    %1176 = vmatpush.bf16.msra.mxu0 %v394
    %1177 = vmatpush.bf16.msra.mxu0 %v390
    %1178 = vmatpush.bf16.msra.mxu0 %v386
    %1179 = vmatmul.bf16.gmra.mxu0 %v566
    %v1180 = vpop.f32.mrf.mxu0
    %v1181 = vadd.f32 0.0, %v1180
    %v1182 = vpop.f32.mrf.mxu0
    %1183 = vdwg.mxu0
    %v1188 = vrot.slane %v1142, 6
    %v1189 = vrot.slane %v1155, 6
    %v1190 = vrot.slane %v1168, 6
    %v1191 = vrot.slane %v1181, 6
    %v1196 = vadd.f32 %v209, %v1188
    %v1197 = vadd.f32 %v223, %v1189
    %v1198 = vadd.f32 %v237, %v1190
    %v1199 = vadd.f32 %v251, %v1191
    %v1200 = vxor.u32 %v1196, 2147483648
    %v1201 = vmul.f32 %v1200, 1.442695
    %v1202 = vpow.pop %v1201
    %v1203 = vadd.f32 %v1202, 1.0
    %v1204 = vrcp.pop %v1203
    %v1205 = vmul.f32 %v1203, %v1204
    %v1206 = vsub.f32 1.0, %v1205
    %v1207 = vmul.f32 %v1204, %v1206
    %v1208 = vadd.f32 %v1204, %v1207
    %vm1209 = vweird.f32 %v1203
    %vm1210 = vweird.f32 %v1204
    %vm1211 = vmor %vm1209, %vm1210
    %v1212 = vsel %vm1211, %v1204, %v1208
    %v1213 = vand.u32 2147483647, %v1203
    %vm1214 = vcmp.eq.f32.partialorder %v1213, 8.507059e+37
    %v1215 = vand.u32 %v1203, 2147483648
    %v1216 = vor.u32 1.1754944e-38, %v1215
    %v1217 = vsel %vm1214, %v1216, %v1212
    %v1218 = vmul.f32 1.0, %v1217
    %v1219 = vxor.u32 %v1197, 2147483648
    %v1220 = vmul.f32 %v1219, 1.442695
    %v1221 = vpow.pop %v1220
    %v1222 = vadd.f32 %v1221, 1.0
    %v1223 = vrcp.pop %v1222
    %v1224 = vmul.f32 %v1222, %v1223
    %v1225 = vsub.f32 1.0, %v1224
    %v1226 = vmul.f32 %v1223, %v1225
    %v1227 = vadd.f32 %v1223, %v1226
    %vm1228 = vweird.f32 %v1222
    %vm1229 = vweird.f32 %v1223
    %vm1230 = vmor %vm1228, %vm1229
    %v1231 = vsel %vm1230, %v1223, %v1227
    %v1232 = vand.u32 2147483647, %v1222
    %vm1233 = vcmp.eq.f32.partialorder %v1232, 8.507059e+37
    %v1234 = vand.u32 %v1222, 2147483648
    %v1235 = vor.u32 1.1754944e-38, %v1234
    %v1236 = vsel %vm1233, %v1235, %v1231
    %v1237 = vmul.f32 1.0, %v1236
    %v1238 = vtanh.pop %v1198
    %v1239 = vxor.u32 %v1199, 2147483648
    %v1240 = vmul.f32 %v1239, 1.442695
    %v1241 = vpow.pop %v1240
    %v1242 = vadd.f32 %v1241, 1.0
    %v1243 = vrcp.pop %v1242
    %v1244 = vmul.f32 %v1242, %v1243
    %v1245 = vsub.f32 1.0, %v1244
    %v1246 = vmul.f32 %v1243, %v1245
    %v1247 = vadd.f32 %v1243, %v1246
    %vm1248 = vweird.f32 %v1242
    %vm1249 = vweird.f32 %v1243
    %vm1250 = vmor %vm1248, %vm1249
    %v1251 = vsel %vm1250, %v1243, %v1247
    %v1252 = vand.u32 2147483647, %v1242
    %vm1253 = vcmp.eq.f32.partialorder %v1252, 8.507059e+37
    %v1254 = vand.u32 %v1242, 2147483648
    %v1255 = vor.u32 1.1754944e-38, %v1254
    %v1256 = vsel %vm1253, %v1255, %v1251
    %v1257 = vmul.f32 1.0, %v1256
    %v1259 = vrot.slane %v563, 6
    %v1261 = vmul.f32 %v1237, %v1259
    %v1262 = vmul.f32 %v1218, %v1238
    %v1263 = vadd.f32 %v1261, %v1262
    %v1264 = vtanh.pop %v1263
    %v1265 = vmul.f32 %v1257, %v1264
    %v1266 = vpack.c.bf16 %v1265, %v1265
    %v1267 = vpack.c.bf16 %v1131, %v1131
    %1268 = vmatpush.bf16.msra.mxu0 %v755
    %1269 = vmatpush.bf16.msra.mxu0 %v751
    %1270 = vmatpush.bf16.msra.mxu0 %v747
    %1271 = vmatpush.bf16.msra.mxu0 %v743
    %1272 = vmatpush.bf16.msra.mxu0 %v739
    %1273 = vmatpush.bf16.msra.mxu0 %v735
    %1274 = vmatpush.bf16.msra.mxu0 %v731
    %1275 = vmatpush.bf16.msra.mxu0 %v727
    %1276 = vmatmul.bf16.gmra.mxu0 %v1267
    %v1277 = vpop.f32.mrf.mxu0
    %v1278 = vadd.f32 0.0, %v1277
    %v1279 = vpop.f32.mrf.mxu0
    %1280 = vdwg.mxu0
    %1281 = vmatpush.bf16.msra.mxu0 %v756
    %1282 = vmatpush.bf16.msra.mxu0 %v752
    %1283 = vmatpush.bf16.msra.mxu0 %v748
    %1284 = vmatpush.bf16.msra.mxu0 %v744
    %1285 = vmatpush.bf16.msra.mxu0 %v740
    %1286 = vmatpush.bf16.msra.mxu0 %v736
    %1287 = vmatpush.bf16.msra.mxu0 %v732
    %1288 = vmatpush.bf16.msra.mxu0 %v728
    %1289 = vmatmul.bf16.gmra.mxu0 %v1267
    %v1290 = vpop.f32.mrf.mxu0
    %v1291 = vadd.f32 0.0, %v1290
    %v1292 = vpop.f32.mrf.mxu0
    %1293 = vdwg.mxu0
    %1294 = vmatpush.bf16.msra.mxu0 %v757
    %1295 = vmatpush.bf16.msra.mxu0 %v753
    %1296 = vmatpush.bf16.msra.mxu0 %v749
    %1297 = vmatpush.bf16.msra.mxu0 %v745
    %1298 = vmatpush.bf16.msra.mxu0 %v741
    %1299 = vmatpush.bf16.msra.mxu0 %v737
    %1300 = vmatpush.bf16.msra.mxu0 %v733
    %1301 = vmatpush.bf16.msra.mxu0 %v729
    %1302 = vmatmul.bf16.gmra.mxu0 %v1267
    %v1303 = vpop.f32.mrf.mxu0
    %v1304 = vadd.f32 0.0, %v1303
    %v1305 = vpop.f32.mrf.mxu0
    %1306 = vdwg.mxu0
    %1307 = vmatpush.bf16.msra.mxu0 %v758
    %1308 = vmatpush.bf16.msra.mxu0 %v754
    %1309 = vmatpush.bf16.msra.mxu0 %v750
    %1310 = vmatpush.bf16.msra.mxu0 %v746
    %1311 = vmatpush.bf16.msra.mxu0 %v742
    %1312 = vmatpush.bf16.msra.mxu0 %v738
    %1313 = vmatpush.bf16.msra.mxu0 %v734
    %1314 = vmatpush.bf16.msra.mxu0 %v730
    %1315 = vmatmul.bf16.gmra.mxu0 %v1267
    %v1316 = vpop.f32.mrf.mxu0
    %v1317 = vadd.f32 0.0, %v1316
    %v1318 = vpop.f32.mrf.mxu0
    %1319 = vdwg.mxu0
    %v1321 = vrot.slane %v1266, 1
    %1323 = vmatpush.bf16.msra.mxu0 %v967
    %1324 = vmatpush.bf16.msra.mxu0 %v963
    %1325 = vmatpush.bf16.msra.mxu0 %v959
    %1326 = vmatpush.bf16.msra.mxu0 %v955
    %1327 = vmatpush.bf16.msra.mxu0 %v951
    %1328 = vmatpush.bf16.msra.mxu0 %v947
    %1329 = vmatpush.bf16.msra.mxu0 %v943
    %1330 = vmatpush.bf16.msra.mxu0 %v939
    %1331 = vmatmul.bf16.gmra.mxu0 %v1321
    %v1332 = vpop.f32.mrf.mxu0
    %v1333 = vadd.f32 %v1278, %v1332
    %v1334 = vpop.f32.mrf.mxu0
    %1335 = vdwg.mxu0
    %1336 = vmatpush.bf16.msra.mxu0 %v968
    %1337 = vmatpush.bf16.msra.mxu0 %v964
    %1338 = vmatpush.bf16.msra.mxu0 %v960
    %1339 = vmatpush.bf16.msra.mxu0 %v956
    %1340 = vmatpush.bf16.msra.mxu0 %v952
    %1341 = vmatpush.bf16.msra.mxu0 %v948
    %1342 = vmatpush.bf16.msra.mxu0 %v944
    %1343 = vmatpush.bf16.msra.mxu0 %v940
    %1344 = vmatmul.bf16.gmra.mxu0 %v1321
    %v1345 = vpop.f32.mrf.mxu0
    %v1346 = vadd.f32 %v1291, %v1345
    %v1347 = vpop.f32.mrf.mxu0
    %1348 = vdwg.mxu0
    %1349 = vmatpush.bf16.msra.mxu0 %v969
    %1350 = vmatpush.bf16.msra.mxu0 %v965
    %1351 = vmatpush.bf16.msra.mxu0 %v961
    %1352 = vmatpush.bf16.msra.mxu0 %v957
    %1353 = vmatpush.bf16.msra.mxu0 %v953
    %1354 = vmatpush.bf16.msra.mxu0 %v949
    %1355 = vmatpush.bf16.msra.mxu0 %v945
    %1356 = vmatpush.bf16.msra.mxu0 %v941
    %1357 = vmatmul.bf16.gmra.mxu0 %v1321
    %v1358 = vpop.f32.mrf.mxu0
    %v1359 = vadd.f32 %v1304, %v1358
    %v1360 = vpop.f32.mrf.mxu0
    %1361 = vdwg.mxu0
    %1362 = vmatpush.bf16.msra.mxu0 %v970
    %1363 = vmatpush.bf16.msra.mxu0 %v966
    %1364 = vmatpush.bf16.msra.mxu0 %v962
    %1365 = vmatpush.bf16.msra.mxu0 %v958
    %1366 = vmatpush.bf16.msra.mxu0 %v954
    %1367 = vmatpush.bf16.msra.mxu0 %v950
    %1368 = vmatpush.bf16.msra.mxu0 %v946
    %1369 = vmatpush.bf16.msra.mxu0 %v942
    %1370 = vmatmul.bf16.gmra.mxu0 %v1321
    %v1371 = vpop.f32.mrf.mxu0
    %v1372 = vadd.f32 %v1317, %v1371
    %v1373 = vpop.f32.mrf.mxu0
    %1374 = vdwg.mxu0
    %v1375 = vadd.f32 %v1333, %v1057
    %v1376 = vadd.f32 %v1346, %v1058
    %v1377 = vadd.f32 %v1359, %v1059
    %v1378 = vadd.f32 %v1372, %v1060
    %v1379 = vxor.u32 %v1375, 2147483648
    %v1380 = vmul.f32 %v1379, 1.442695
    %v1381 = vpow.pop %v1380
    %v1382 = vadd.f32 %v1381, 1.0
    %v1383 = vrcp.pop %v1382
    %v1384 = vmul.f32 %v1382, %v1383
    %v1385 = vsub.f32 1.0, %v1384
    %v1386 = vmul.f32 %v1383, %v1385
    %v1387 = vadd.f32 %v1383, %v1386
    %vm1388 = vweird.f32 %v1382
    %vm1389 = vweird.f32 %v1383
    %vm1390 = vmor %vm1388, %vm1389
    %v1391 = vsel %vm1390, %v1383, %v1387
    %v1392 = vand.u32 2147483647, %v1382
    %vm1393 = vcmp.eq.f32.partialorder %v1392, 8.507059e+37
    %v1394 = vand.u32 %v1382, 2147483648
    %v1395 = vor.u32 1.1754944e-38, %v1394
    %v1396 = vsel %vm1393, %v1395, %v1391
    %v1397 = vmul.f32 1.0, %v1396
    %v1398 = vxor.u32 %v1376, 2147483648
    %v1399 = vmul.f32 %v1398, 1.442695
    %v1400 = vpow.pop %v1399
    %v1401 = vadd.f32 %v1400, 1.0
    %v1402 = vrcp.pop %v1401
    %v1403 = vmul.f32 %v1401, %v1402
    %v1404 = vsub.f32 1.0, %v1403
    %v1405 = vmul.f32 %v1402, %v1404
    %v1406 = vadd.f32 %v1402, %v1405
    %vm1407 = vweird.f32 %v1401
    %vm1408 = vweird.f32 %v1402
    %vm1409 = vmor %vm1407, %vm1408
    %v1410 = vsel %vm1409, %v1402, %v1406
    %v1411 = vand.u32 2147483647, %v1401
    %vm1412 = vcmp.eq.f32.partialorder %v1411, 8.507059e+37
    %v1413 = vand.u32 %v1401, 2147483648
    %v1414 = vor.u32 1.1754944e-38, %v1413
    %v1415 = vsel %vm1412, %v1414, %v1410
    %v1416 = vmul.f32 1.0, %v1415
    %v1417 = vtanh.pop %v1377
    %v1418 = vxor.u32 %v1378, 2147483648
    %v1419 = vmul.f32 %v1418, 1.442695
    %v1420 = vpow.pop %v1419
    %v1421 = vadd.f32 %v1420, 1.0
    %v1422 = vrcp.pop %v1421
    %v1423 = vmul.f32 %v1421, %v1422
    %v1424 = vsub.f32 1.0, %v1423
    %v1425 = vmul.f32 %v1422, %v1424
    %v1426 = vadd.f32 %v1422, %v1425
    %vm1427 = vweird.f32 %v1421
    %vm1428 = vweird.f32 %v1422
    %vm1429 = vmor %vm1427, %vm1428
    %v1430 = vsel %vm1429, %v1422, %v1426
    %v1431 = vand.u32 2147483647, %v1421
    %vm1432 = vcmp.eq.f32.partialorder %v1431, 8.507059e+37
    %v1433 = vand.u32 %v1421, 2147483648
    %v1434 = vor.u32 1.1754944e-38, %v1433
    %v1435 = vsel %vm1432, %v1434, %v1430
    %v1436 = vmul.f32 1.0, %v1435
    %v1437 = vmul.f32 %v1416, %v1129
    %v1438 = vmul.f32 %v1397, %v1417
    %v1439 = vadd.f32 %v1437, %v1438
    %v1440 = vtanh.pop %v1439
    %v1441 = vmul.f32 %v1436, %v1440
    %1442 = vmatpush.bf16.msra.mxu0 %v411
    %1443 = vmatpush.bf16.msra.mxu0 %v407
    %1444 = vmatpush.bf16.msra.mxu0 %v403
    %1445 = vmatpush.bf16.msra.mxu0 %v399
    %1446 = vmatpush.bf16.msra.mxu0 %v395
    %1447 = vmatpush.bf16.msra.mxu0 %v391
    %1448 = vmatpush.bf16.msra.mxu0 %v387
    %1449 = vmatpush.bf16.msra.mxu0 %v383
    %1450 = vmatmul.bf16.gmra.mxu0 %v1321
    %v1451 = vpop.f32.mrf.mxu0
    %v1452 = vadd.f32 0.0, %v1451
    %v1453 = vpop.f32.mrf.mxu0
    %1454 = vdwg.mxu0
    %1455 = vmatpush.bf16.msra.mxu0 %v412
    %1456 = vmatpush.bf16.msra.mxu0 %v408
    %1457 = vmatpush.bf16.msra.mxu0 %v404
    %1458 = vmatpush.bf16.msra.mxu0 %v400
    %1459 = vmatpush.bf16.msra.mxu0 %v396
    %1460 = vmatpush.bf16.msra.mxu0 %v392
    %1461 = vmatpush.bf16.msra.mxu0 %v388
    %1462 = vmatpush.bf16.msra.mxu0 %v384
    %1463 = vmatmul.bf16.gmra.mxu0 %v1321
    %v1464 = vpop.f32.mrf.mxu0
    %v1465 = vadd.f32 0.0, %v1464
    %v1466 = vpop.f32.mrf.mxu0
    %1467 = vdwg.mxu0
    %1468 = vmatpush.bf16.msra.mxu0 %v413
    %1469 = vmatpush.bf16.msra.mxu0 %v409
    %1470 = vmatpush.bf16.msra.mxu0 %v405
    %1471 = vmatpush.bf16.msra.mxu0 %v401
    %1472 = vmatpush.bf16.msra.mxu0 %v397
    %1473 = vmatpush.bf16.msra.mxu0 %v393
    %1474 = vmatpush.bf16.msra.mxu0 %v389
    %1475 = vmatpush.bf16.msra.mxu0 %v385
    %1476 = vmatmul.bf16.gmra.mxu0 %v1321
    %v1477 = vpop.f32.mrf.mxu0
    %v1478 = vadd.f32 0.0, %v1477
    %v1479 = vpop.f32.mrf.mxu0
    %1480 = vdwg.mxu0
    %1481 = vmatpush.bf16.msra.mxu0 %v414
    %1482 = vmatpush.bf16.msra.mxu0 %v410
    %1483 = vmatpush.bf16.msra.mxu0 %v406
    %1484 = vmatpush.bf16.msra.mxu0 %v402
    %1485 = vmatpush.bf16.msra.mxu0 %v398
    %1486 = vmatpush.bf16.msra.mxu0 %v394
    %1487 = vmatpush.bf16.msra.mxu0 %v390
    %1488 = vmatpush.bf16.msra.mxu0 %v386
    %1489 = vmatmul.bf16.gmra.mxu0 %v1321
    %v1490 = vpop.f32.mrf.mxu0
    %v1491 = vadd.f32 0.0, %v1490
    %v1492 = vpop.f32.mrf.mxu0
    %1493 = vdwg.mxu0
    %v1498 = vrot.slane %v1452, 4
    %v1499 = vrot.slane %v1465, 4
    %v1500 = vrot.slane %v1478, 4
    %v1501 = vrot.slane %v1491, 4
    %v1506 = vadd.f32 %v209, %v1498
    %v1507 = vadd.f32 %v223, %v1499
    %v1508 = vadd.f32 %v237, %v1500
    %v1509 = vadd.f32 %v251, %v1501
    %v1510 = vxor.u32 %v1506, 2147483648
    %v1511 = vmul.f32 %v1510, 1.442695
    %v1512 = vpow.pop %v1511
    %v1513 = vadd.f32 %v1512, 1.0
    %v1514 = vrcp.pop %v1513
    %v1515 = vmul.f32 %v1513, %v1514
    %v1516 = vsub.f32 1.0, %v1515
    %v1517 = vmul.f32 %v1514, %v1516
    %v1518 = vadd.f32 %v1514, %v1517
    %vm1519 = vweird.f32 %v1513
    %vm1520 = vweird.f32 %v1514
    %vm1521 = vmor %vm1519, %vm1520
    %v1522 = vsel %vm1521, %v1514, %v1518
    %v1523 = vand.u32 2147483647, %v1513
    %vm1524 = vcmp.eq.f32.partialorder %v1523, 8.507059e+37
    %v1525 = vand.u32 %v1513, 2147483648
    %v1526 = vor.u32 1.1754944e-38, %v1525
    %v1527 = vsel %vm1524, %v1526, %v1522
    %v1528 = vmul.f32 1.0, %v1527
    %v1529 = vxor.u32 %v1507, 2147483648
    %v1530 = vmul.f32 %v1529, 1.442695
    %v1531 = vpow.pop %v1530
    %v1532 = vadd.f32 %v1531, 1.0
    %v1533 = vrcp.pop %v1532
    %v1534 = vmul.f32 %v1532, %v1533
    %v1535 = vsub.f32 1.0, %v1534
    %v1536 = vmul.f32 %v1533, %v1535
    %v1537 = vadd.f32 %v1533, %v1536
    %vm1538 = vweird.f32 %v1532
    %vm1539 = vweird.f32 %v1533
    %vm1540 = vmor %vm1538, %vm1539
    %v1541 = vsel %vm1540, %v1533, %v1537
    %v1542 = vand.u32 2147483647, %v1532
    %vm1543 = vcmp.eq.f32.partialorder %v1542, 8.507059e+37
    %v1544 = vand.u32 %v1532, 2147483648
    %v1545 = vor.u32 1.1754944e-38, %v1544
    %v1546 = vsel %vm1543, %v1545, %v1541
    %v1547 = vmul.f32 1.0, %v1546
    %v1548 = vtanh.pop %v1508
    %v1549 = vxor.u32 %v1509, 2147483648
    %v1550 = vmul.f32 %v1549, 1.442695
    %v1551 = vpow.pop %v1550
    %v1552 = vadd.f32 %v1551, 1.0
    %v1553 = vrcp.pop %v1552
    %v1554 = vmul.f32 %v1552, %v1553
    %v1555 = vsub.f32 1.0, %v1554
    %v1556 = vmul.f32 %v1553, %v1555
    %v1557 = vadd.f32 %v1553, %v1556
    %vm1558 = vweird.f32 %v1552
    %vm1559 = vweird.f32 %v1553
    %vm1560 = vmor %vm1558, %vm1559
    %v1561 = vsel %vm1560, %v1553, %v1557
    %v1562 = vand.u32 2147483647, %v1552
    %vm1563 = vcmp.eq.f32.partialorder %v1562, 8.507059e+37
    %v1564 = vand.u32 %v1552, 2147483648
    %v1565 = vor.u32 1.1754944e-38, %v1564
    %v1566 = vsel %vm1563, %v1565, %v1561
    %v1567 = vmul.f32 1.0, %v1566
    %v1569 = vrot.slane %v1263, 6
    %v1571 = vmul.f32 %v1547, %v1569
    %v1572 = vmul.f32 %v1528, %v1548
    %v1573 = vadd.f32 %v1571, %v1572
    %v1574 = vtanh.pop %v1573
    %v1575 = vmul.f32 %v1567, %v1574
    %v1576 = vpack.c.bf16 %v1575, %v1575
    %v1577 = vpack.c.bf16 %v1441, %v1441
    %1578 = vmatpush.bf16.msra.mxu0 %v755
    %1579 = vmatpush.bf16.msra.mxu0 %v751
    %1580 = vmatpush.bf16.msra.mxu0 %v747
    %1581 = vmatpush.bf16.msra.mxu0 %v743
    %1582 = vmatpush.bf16.msra.mxu0 %v739
    %1583 = vmatpush.bf16.msra.mxu0 %v735
    %1584 = vmatpush.bf16.msra.mxu0 %v731
    %1585 = vmatpush.bf16.msra.mxu0 %v727
    %1586 = vmatmul.bf16.gmra.mxu0 %v1577
    %v1587 = vpop.f32.mrf.mxu0
    %v1588 = vadd.f32 0.0, %v1587
    %v1589 = vpop.f32.mrf.mxu0
    %1590 = vdwg.mxu0
    %1591 = vmatpush.bf16.msra.mxu0 %v756
    %1592 = vmatpush.bf16.msra.mxu0 %v752
    %1593 = vmatpush.bf16.msra.mxu0 %v748
    %1594 = vmatpush.bf16.msra.mxu0 %v744
    %1595 = vmatpush.bf16.msra.mxu0 %v740
    %1596 = vmatpush.bf16.msra.mxu0 %v736
    %1597 = vmatpush.bf16.msra.mxu0 %v732
    %1598 = vmatpush.bf16.msra.mxu0 %v728
    %1599 = vmatmul.bf16.gmra.mxu0 %v1577
    %v1600 = vpop.f32.mrf.mxu0
    %v1601 = vadd.f32 0.0, %v1600
    %v1602 = vpop.f32.mrf.mxu0
    %1603 = vdwg.mxu0
    %1604 = vmatpush.bf16.msra.mxu0 %v757
    %1605 = vmatpush.bf16.msra.mxu0 %v753
    %1606 = vmatpush.bf16.msra.mxu0 %v749
    %1607 = vmatpush.bf16.msra.mxu0 %v745
    %1608 = vmatpush.bf16.msra.mxu0 %v741
    %1609 = vmatpush.bf16.msra.mxu0 %v737
    %1610 = vmatpush.bf16.msra.mxu0 %v733
    %1611 = vmatpush.bf16.msra.mxu0 %v729
    %1612 = vmatmul.bf16.gmra.mxu0 %v1577
    %v1613 = vpop.f32.mrf.mxu0
    %v1614 = vadd.f32 0.0, %v1613
    %v1615 = vpop.f32.mrf.mxu0
    %1616 = vdwg.mxu0
    %1617 = vmatpush.bf16.msra.mxu0 %v758
    %1618 = vmatpush.bf16.msra.mxu0 %v754
    %1619 = vmatpush.bf16.msra.mxu0 %v750
    %1620 = vmatpush.bf16.msra.mxu0 %v746
    %1621 = vmatpush.bf16.msra.mxu0 %v742
    %1622 = vmatpush.bf16.msra.mxu0 %v738
    %1623 = vmatpush.bf16.msra.mxu0 %v734
    %1624 = vmatpush.bf16.msra.mxu0 %v730
    %1625 = vmatmul.bf16.gmra.mxu0 %v1577
    %v1626 = vpop.f32.mrf.mxu0
    %v1627 = vadd.f32 0.0, %v1626
    %v1628 = vpop.f32.mrf.mxu0
    %1629 = vdwg.mxu0
    %v1631 = vrot.slane %v1576, 2
    %1633 = vmatpush.bf16.msra.mxu0 %v967
    %1634 = vmatpush.bf16.msra.mxu0 %v963
    %1635 = vmatpush.bf16.msra.mxu0 %v959
    %1636 = vmatpush.bf16.msra.mxu0 %v955
    %1637 = vmatpush.bf16.msra.mxu0 %v951
    %1638 = vmatpush.bf16.msra.mxu0 %v947
    %1639 = vmatpush.bf16.msra.mxu0 %v943
    %1640 = vmatpush.bf16.msra.mxu0 %v939
    %1641 = vmatmul.bf16.gmra.mxu0 %v1631
    %v1642 = vpop.f32.mrf.mxu0
    %v1643 = vadd.f32 %v1588, %v1642
    %v1644 = vpop.f32.mrf.mxu0
    %1645 = vdwg.mxu0
    %1646 = vmatpush.bf16.msra.mxu0 %v968
    %1647 = vmatpush.bf16.msra.mxu0 %v964
    %1648 = vmatpush.bf16.msra.mxu0 %v960
    %1649 = vmatpush.bf16.msra.mxu0 %v956
    %1650 = vmatpush.bf16.msra.mxu0 %v952
    %1651 = vmatpush.bf16.msra.mxu0 %v948
    %1652 = vmatpush.bf16.msra.mxu0 %v944
    %1653 = vmatpush.bf16.msra.mxu0 %v940
    %1654 = vmatmul.bf16.gmra.mxu0 %v1631
    %v1655 = vpop.f32.mrf.mxu0
    %v1656 = vadd.f32 %v1601, %v1655
    %v1657 = vpop.f32.mrf.mxu0
    %1658 = vdwg.mxu0
    %1659 = vmatpush.bf16.msra.mxu0 %v969
    %1660 = vmatpush.bf16.msra.mxu0 %v965
    %1661 = vmatpush.bf16.msra.mxu0 %v961
    %1662 = vmatpush.bf16.msra.mxu0 %v957
    %1663 = vmatpush.bf16.msra.mxu0 %v953
    %1664 = vmatpush.bf16.msra.mxu0 %v949
    %1665 = vmatpush.bf16.msra.mxu0 %v945
    %1666 = vmatpush.bf16.msra.mxu0 %v941
    %1667 = vmatmul.bf16.gmra.mxu0 %v1631
    %v1668 = vpop.f32.mrf.mxu0
    %v1669 = vadd.f32 %v1614, %v1668
    %v1670 = vpop.f32.mrf.mxu0
    %1671 = vdwg.mxu0
    %1672 = vmatpush.bf16.msra.mxu0 %v970
    %1673 = vmatpush.bf16.msra.mxu0 %v966
    %1674 = vmatpush.bf16.msra.mxu0 %v962
    %1675 = vmatpush.bf16.msra.mxu0 %v958
    %1676 = vmatpush.bf16.msra.mxu0 %v954
    %1677 = vmatpush.bf16.msra.mxu0 %v950
    %1678 = vmatpush.bf16.msra.mxu0 %v946
    %1679 = vmatpush.bf16.msra.mxu0 %v942
    %1680 = vmatmul.bf16.gmra.mxu0 %v1631
    %v1681 = vpop.f32.mrf.mxu0
    %v1682 = vadd.f32 %v1627, %v1681
    %v1683 = vpop.f32.mrf.mxu0
    %1684 = vdwg.mxu0
    %v1685 = vadd.f32 %v1643, %v1057
    %v1686 = vadd.f32 %v1656, %v1058
    %v1687 = vadd.f32 %v1669, %v1059
    %v1688 = vadd.f32 %v1682, %v1060
    %v1689 = vxor.u32 %v1685, 2147483648
    %v1690 = vmul.f32 %v1689, 1.442695
    %v1691 = vpow.pop %v1690
    %v1692 = vadd.f32 %v1691, 1.0
    %v1693 = vrcp.pop %v1692
    %v1694 = vmul.f32 %v1692, %v1693
    %v1695 = vsub.f32 1.0, %v1694
    %v1696 = vmul.f32 %v1693, %v1695
    %v1697 = vadd.f32 %v1693, %v1696
    %vm1698 = vweird.f32 %v1692
    %vm1699 = vweird.f32 %v1693
    %vm1700 = vmor %vm1698, %vm1699
    %v1701 = vsel %vm1700, %v1693, %v1697
    %v1702 = vand.u32 2147483647, %v1692
    %vm1703 = vcmp.eq.f32.partialorder %v1702, 8.507059e+37
    %v1704 = vand.u32 %v1692, 2147483648
    %v1705 = vor.u32 1.1754944e-38, %v1704
    %v1706 = vsel %vm1703, %v1705, %v1701
    %v1707 = vmul.f32 1.0, %v1706
    %v1708 = vxor.u32 %v1686, 2147483648
    %v1709 = vmul.f32 %v1708, 1.442695
    %v1710 = vpow.pop %v1709
    %v1711 = vadd.f32 %v1710, 1.0
    %v1712 = vrcp.pop %v1711
    %v1713 = vmul.f32 %v1711, %v1712
    %v1714 = vsub.f32 1.0, %v1713
    %v1715 = vmul.f32 %v1712, %v1714
    %v1716 = vadd.f32 %v1712, %v1715
    %vm1717 = vweird.f32 %v1711
    %vm1718 = vweird.f32 %v1712
    %vm1719 = vmor %vm1717, %vm1718
    %v1720 = vsel %vm1719, %v1712, %v1716
    %v1721 = vand.u32 2147483647, %v1711
    %vm1722 = vcmp.eq.f32.partialorder %v1721, 8.507059e+37
    %v1723 = vand.u32 %v1711, 2147483648
    %v1724 = vor.u32 1.1754944e-38, %v1723
    %v1725 = vsel %vm1722, %v1724, %v1720
    %v1726 = vmul.f32 1.0, %v1725
    %v1727 = vtanh.pop %v1687
    %v1728 = vxor.u32 %v1688, 2147483648
    %v1729 = vmul.f32 %v1728, 1.442695
    %v1730 = vpow.pop %v1729
    %v1731 = vadd.f32 %v1730, 1.0
    %v1732 = vrcp.pop %v1731
    %v1733 = vmul.f32 %v1731, %v1732
    %v1734 = vsub.f32 1.0, %v1733
    %v1735 = vmul.f32 %v1732, %v1734
    %v1736 = vadd.f32 %v1732, %v1735
    %vm1737 = vweird.f32 %v1731
    %vm1738 = vweird.f32 %v1732
    %vm1739 = vmor %vm1737, %vm1738
    %v1740 = vsel %vm1739, %v1732, %v1736
    %v1741 = vand.u32 2147483647, %v1731
    %vm1742 = vcmp.eq.f32.partialorder %v1741, 8.507059e+37
    %v1743 = vand.u32 %v1731, 2147483648
    %v1744 = vor.u32 1.1754944e-38, %v1743
    %v1745 = vsel %vm1742, %v1744, %v1740
    %v1746 = vmul.f32 1.0, %v1745
    %v1747 = vmul.f32 %v1726, %v1439
    %v1748 = vmul.f32 %v1707, %v1727
    %v1749 = vadd.f32 %v1747, %v1748
    %v1750 = vtanh.pop %v1749
    %v1751 = vmul.f32 %v1746, %v1750
    %1752 = vmatpush.bf16.msra.mxu0 %v411
    %1753 = vmatpush.bf16.msra.mxu0 %v407
    %1754 = vmatpush.bf16.msra.mxu0 %v403
    %1755 = vmatpush.bf16.msra.mxu0 %v399
    %1756 = vmatpush.bf16.msra.mxu0 %v395
    %1757 = vmatpush.bf16.msra.mxu0 %v391
    %1758 = vmatpush.bf16.msra.mxu0 %v387
    %1759 = vmatpush.bf16.msra.mxu0 %v383
    %1760 = vmatmul.bf16.gmra.mxu0 %v1631
    %v1761 = vpop.f32.mrf.mxu0
    %v1762 = vadd.f32 0.0, %v1761
    %v1763 = vpop.f32.mrf.mxu0
    %1764 = vdwg.mxu0
    %1765 = vmatpush.bf16.msra.mxu0 %v412
    %1766 = vmatpush.bf16.msra.mxu0 %v408
    %1767 = vmatpush.bf16.msra.mxu0 %v404
    %1768 = vmatpush.bf16.msra.mxu0 %v400
    %1769 = vmatpush.bf16.msra.mxu0 %v396
    %1770 = vmatpush.bf16.msra.mxu0 %v392
    %1771 = vmatpush.bf16.msra.mxu0 %v388
    %1772 = vmatpush.bf16.msra.mxu0 %v384
    %1773 = vmatmul.bf16.gmra.mxu0 %v1631
    %v1774 = vpop.f32.mrf.mxu0
    %v1775 = vadd.f32 0.0, %v1774
    %v1776 = vpop.f32.mrf.mxu0
    %1777 = vdwg.mxu0
    %1778 = vmatpush.bf16.msra.mxu0 %v413
    %1779 = vmatpush.bf16.msra.mxu0 %v409
    %1780 = vmatpush.bf16.msra.mxu0 %v405
    %1781 = vmatpush.bf16.msra.mxu0 %v401
    %1782 = vmatpush.bf16.msra.mxu0 %v397
    %1783 = vmatpush.bf16.msra.mxu0 %v393
    %1784 = vmatpush.bf16.msra.mxu0 %v389
    %1785 = vmatpush.bf16.msra.mxu0 %v385
    %1786 = vmatmul.bf16.gmra.mxu0 %v1631
    %v1787 = vpop.f32.mrf.mxu0
    %v1788 = vadd.f32 0.0, %v1787
    %v1789 = vpop.f32.mrf.mxu0
    %1790 = vdwg.mxu0
    %1791 = vmatpush.bf16.msra.mxu0 %v414
    %1792 = vmatpush.bf16.msra.mxu0 %v410
    %1793 = vmatpush.bf16.msra.mxu0 %v406
    %1794 = vmatpush.bf16.msra.mxu0 %v402
    %1795 = vmatpush.bf16.msra.mxu0 %v398
    %1796 = vmatpush.bf16.msra.mxu0 %v394
    %1797 = vmatpush.bf16.msra.mxu0 %v390
    %1798 = vmatpush.bf16.msra.mxu0 %v386
    %1799 = vmatmul.bf16.gmra.mxu0 %v1631
    %v1800 = vpop.f32.mrf.mxu0
    %v1801 = vadd.f32 0.0, %v1800
    %v1802 = vpop.f32.mrf.mxu0
    %1803 = vdwg.mxu0
    %v1808 = vrot.slane %v1762, 2
    %v1809 = vrot.slane %v1775, 2
    %v1810 = vrot.slane %v1788, 2
    %v1811 = vrot.slane %v1801, 2
    %v1816 = vadd.f32 %v209, %v1808
    %v1817 = vadd.f32 %v223, %v1809
    %v1818 = vadd.f32 %v237, %v1810
    %v1819 = vadd.f32 %v251, %v1811
    %v1820 = vxor.u32 %v1816, 2147483648
    %v1821 = vmul.f32 %v1820, 1.442695
    %v1822 = vpow.pop %v1821
    %v1823 = vadd.f32 %v1822, 1.0
    %v1824 = vrcp.pop %v1823
    %v1825 = vmul.f32 %v1823, %v1824
    %v1826 = vsub.f32 1.0, %v1825
    %v1827 = vmul.f32 %v1824, %v1826
    %v1828 = vadd.f32 %v1824, %v1827
    %vm1829 = vweird.f32 %v1823
    %vm1830 = vweird.f32 %v1824
    %vm1831 = vmor %vm1829, %vm1830
    %v1832 = vsel %vm1831, %v1824, %v1828
    %v1833 = vand.u32 2147483647, %v1823
    %vm1834 = vcmp.eq.f32.partialorder %v1833, 8.507059e+37
    %v1835 = vand.u32 %v1823, 2147483648
    %v1836 = vor.u32 1.1754944e-38, %v1835
    %v1837 = vsel %vm1834, %v1836, %v1832
    %v1838 = vmul.f32 1.0, %v1837
    %v1839 = vxor.u32 %v1817, 2147483648
    %v1840 = vmul.f32 %v1839, 1.442695
    %v1841 = vpow.pop %v1840
    %v1842 = vadd.f32 %v1841, 1.0
    %v1843 = vrcp.pop %v1842
    %v1844 = vmul.f32 %v1842, %v1843
    %v1845 = vsub.f32 1.0, %v1844
    %v1846 = vmul.f32 %v1843, %v1845
    %v1847 = vadd.f32 %v1843, %v1846
    %vm1848 = vweird.f32 %v1842
    %vm1849 = vweird.f32 %v1843
    %vm1850 = vmor %vm1848, %vm1849
    %v1851 = vsel %vm1850, %v1843, %v1847
    %v1852 = vand.u32 2147483647, %v1842
    %vm1853 = vcmp.eq.f32.partialorder %v1852, 8.507059e+37
    %v1854 = vand.u32 %v1842, 2147483648
    %v1855 = vor.u32 1.1754944e-38, %v1854
    %v1856 = vsel %vm1853, %v1855, %v1851
    %v1857 = vmul.f32 1.0, %v1856
    %v1858 = vtanh.pop %v1818
    %v1859 = vxor.u32 %v1819, 2147483648
    %v1860 = vmul.f32 %v1859, 1.442695
    %v1861 = vpow.pop %v1860
    %v1862 = vadd.f32 %v1861, 1.0
    %v1863 = vrcp.pop %v1862
    %v1864 = vmul.f32 %v1862, %v1863
    %v1865 = vsub.f32 1.0, %v1864
    %v1866 = vmul.f32 %v1863, %v1865
    %v1867 = vadd.f32 %v1863, %v1866
    %vm1868 = vweird.f32 %v1862
    %vm1869 = vweird.f32 %v1863
    %vm1870 = vmor %vm1868, %vm1869
    %v1871 = vsel %vm1870, %v1863, %v1867
    %v1872 = vand.u32 2147483647, %v1862
    %vm1873 = vcmp.eq.f32.partialorder %v1872, 8.507059e+37
    %v1874 = vand.u32 %v1862, 2147483648
    %v1875 = vor.u32 1.1754944e-38, %v1874
    %v1876 = vsel %vm1873, %v1875, %v1871
    %v1877 = vmul.f32 1.0, %v1876
    %v1879 = vrot.slane %v1573, 6
    %v1881 = vmul.f32 %v1857, %v1879
    %v1882 = vmul.f32 %v1838, %v1858
    %v1883 = vadd.f32 %v1881, %v1882
    %v1884 = vtanh.pop %v1883
    %v1885 = vmul.f32 %v1877, %v1884
    %v1886 = vpack.c.bf16 %v1885, %v1885
    %v1887 = vpack.c.bf16 %v1751, %v1751
    %1888 = vmatpush.bf16.msra.mxu0 %v755
    %1889 = vmatpush.bf16.msra.mxu0 %v751
    %1890 = vmatpush.bf16.msra.mxu0 %v747
    %1891 = vmatpush.bf16.msra.mxu0 %v743
    %1892 = vmatpush.bf16.msra.mxu0 %v739
    %1893 = vmatpush.bf16.msra.mxu0 %v735
    %1894 = vmatpush.bf16.msra.mxu0 %v731
    %1895 = vmatpush.bf16.msra.mxu0 %v727
    %1896 = vmatmul.bf16.gmra.mxu0 %v1887
    %v1897 = vpop.f32.mrf.mxu0
    %v1898 = vadd.f32 0.0, %v1897
    %v1899 = vpop.f32.mrf.mxu0
    %1900 = vdwg.mxu0
    %1901 = vmatpush.bf16.msra.mxu0 %v756
    %1902 = vmatpush.bf16.msra.mxu0 %v752
    %1903 = vmatpush.bf16.msra.mxu0 %v748
    %1904 = vmatpush.bf16.msra.mxu0 %v744
    %1905 = vmatpush.bf16.msra.mxu0 %v740
    %1906 = vmatpush.bf16.msra.mxu0 %v736
    %1907 = vmatpush.bf16.msra.mxu0 %v732
    %1908 = vmatpush.bf16.msra.mxu0 %v728
    %1909 = vmatmul.bf16.gmra.mxu0 %v1887
    %v1910 = vpop.f32.mrf.mxu0
    %v1911 = vadd.f32 0.0, %v1910
    %v1912 = vpop.f32.mrf.mxu0
    %1913 = vdwg.mxu0
    %1914 = vmatpush.bf16.msra.mxu0 %v757
    %1915 = vmatpush.bf16.msra.mxu0 %v753
    %1916 = vmatpush.bf16.msra.mxu0 %v749
    %1917 = vmatpush.bf16.msra.mxu0 %v745
    %1918 = vmatpush.bf16.msra.mxu0 %v741
    %1919 = vmatpush.bf16.msra.mxu0 %v737
    %1920 = vmatpush.bf16.msra.mxu0 %v733
    %1921 = vmatpush.bf16.msra.mxu0 %v729
    %1922 = vmatmul.bf16.gmra.mxu0 %v1887
    %v1923 = vpop.f32.mrf.mxu0
    %v1924 = vadd.f32 0.0, %v1923
    %v1925 = vpop.f32.mrf.mxu0
    %1926 = vdwg.mxu0
    %1927 = vmatpush.bf16.msra.mxu0 %v758
    %1928 = vmatpush.bf16.msra.mxu0 %v754
    %1929 = vmatpush.bf16.msra.mxu0 %v750
    %1930 = vmatpush.bf16.msra.mxu0 %v746
    %1931 = vmatpush.bf16.msra.mxu0 %v742
    %1932 = vmatpush.bf16.msra.mxu0 %v738
    %1933 = vmatpush.bf16.msra.mxu0 %v734
    %1934 = vmatpush.bf16.msra.mxu0 %v730
    %1935 = vmatmul.bf16.gmra.mxu0 %v1887
    %v1936 = vpop.f32.mrf.mxu0
    %v1937 = vadd.f32 0.0, %v1936
    %v1938 = vpop.f32.mrf.mxu0
    %1939 = vdwg.mxu0
    %v1941 = vrot.slane %v1886, 3
    %1943 = vmatpush.bf16.msra.mxu0 %v967
    %1944 = vmatpush.bf16.msra.mxu0 %v963
    %1945 = vmatpush.bf16.msra.mxu0 %v959
    %1946 = vmatpush.bf16.msra.mxu0 %v955
    %1947 = vmatpush.bf16.msra.mxu0 %v951
    %1948 = vmatpush.bf16.msra.mxu0 %v947
    %1949 = vmatpush.bf16.msra.mxu0 %v943
    %1950 = vmatpush.bf16.msra.mxu0 %v939
    %1951 = vmatmul.bf16.gmra.mxu0 %v1941
    %v1952 = vpop.f32.mrf.mxu0
    %v1953 = vadd.f32 %v1898, %v1952
    %v1954 = vpop.f32.mrf.mxu0
    %1955 = vdwg.mxu0
    %1956 = vmatpush.bf16.msra.mxu0 %v968
    %1957 = vmatpush.bf16.msra.mxu0 %v964
    %1958 = vmatpush.bf16.msra.mxu0 %v960
    %1959 = vmatpush.bf16.msra.mxu0 %v956
    %1960 = vmatpush.bf16.msra.mxu0 %v952
    %1961 = vmatpush.bf16.msra.mxu0 %v948
    %1962 = vmatpush.bf16.msra.mxu0 %v944
    %1963 = vmatpush.bf16.msra.mxu0 %v940
    %1964 = vmatmul.bf16.gmra.mxu0 %v1941
    %v1965 = vpop.f32.mrf.mxu0
    %v1966 = vadd.f32 %v1911, %v1965
    %v1967 = vpop.f32.mrf.mxu0
    %1968 = vdwg.mxu0
    %1969 = vmatpush.bf16.msra.mxu0 %v969
    %1970 = vmatpush.bf16.msra.mxu0 %v965
    %1971 = vmatpush.bf16.msra.mxu0 %v961
    %1972 = vmatpush.bf16.msra.mxu0 %v957
    %1973 = vmatpush.bf16.msra.mxu0 %v953
    %1974 = vmatpush.bf16.msra.mxu0 %v949
    %1975 = vmatpush.bf16.msra.mxu0 %v945
    %1976 = vmatpush.bf16.msra.mxu0 %v941
    %1977 = vmatmul.bf16.gmra.mxu0 %v1941
    %v1978 = vpop.f32.mrf.mxu0
    %v1979 = vadd.f32 %v1924, %v1978
    %v1980 = vpop.f32.mrf.mxu0
    %1981 = vdwg.mxu0
    %1982 = vmatpush.bf16.msra.mxu0 %v970
    %1983 = vmatpush.bf16.msra.mxu0 %v966
    %1984 = vmatpush.bf16.msra.mxu0 %v962
    %1985 = vmatpush.bf16.msra.mxu0 %v958
    %1986 = vmatpush.bf16.msra.mxu0 %v954
    %1987 = vmatpush.bf16.msra.mxu0 %v950
    %1988 = vmatpush.bf16.msra.mxu0 %v946
    %1989 = vmatpush.bf16.msra.mxu0 %v942
    %1990 = vmatmul.bf16.gmra.mxu0 %v1941
    %v1991 = vpop.f32.mrf.mxu0
    %v1992 = vadd.f32 %v1937, %v1991
    %v1993 = vpop.f32.mrf.mxu0
    %1994 = vdwg.mxu0
    %v1995 = vadd.f32 %v1953, %v1057
    %v1996 = vadd.f32 %v1966, %v1058
    %v1997 = vadd.f32 %v1979, %v1059
    %v1998 = vadd.f32 %v1992, %v1060
    %v1999 = vxor.u32 %v1995, 2147483648
    %v2000 = vmul.f32 %v1999, 1.442695
    %v2001 = vpow.pop %v2000
    %v2002 = vadd.f32 %v2001, 1.0
    %v2003 = vrcp.pop %v2002
    %v2004 = vmul.f32 %v2002, %v2003
    %v2005 = vsub.f32 1.0, %v2004
    %v2006 = vmul.f32 %v2003, %v2005
    %v2007 = vadd.f32 %v2003, %v2006
    %vm2008 = vweird.f32 %v2002
    %vm2009 = vweird.f32 %v2003
    %vm2010 = vmor %vm2008, %vm2009
    %v2011 = vsel %vm2010, %v2003, %v2007
    %v2012 = vand.u32 2147483647, %v2002
    %vm2013 = vcmp.eq.f32.partialorder %v2012, 8.507059e+37
    %v2014 = vand.u32 %v2002, 2147483648
    %v2015 = vor.u32 1.1754944e-38, %v2014
    %v2016 = vsel %vm2013, %v2015, %v2011
    %v2017 = vmul.f32 1.0, %v2016
    %v2018 = vxor.u32 %v1996, 2147483648
    %v2019 = vmul.f32 %v2018, 1.442695
    %v2020 = vpow.pop %v2019
    %v2021 = vadd.f32 %v2020, 1.0
    %v2022 = vrcp.pop %v2021
    %v2023 = vmul.f32 %v2021, %v2022
    %v2024 = vsub.f32 1.0, %v2023
    %v2025 = vmul.f32 %v2022, %v2024
    %v2026 = vadd.f32 %v2022, %v2025
    %vm2027 = vweird.f32 %v2021
    %vm2028 = vweird.f32 %v2022
    %vm2029 = vmor %vm2027, %vm2028
    %v2030 = vsel %vm2029, %v2022, %v2026
    %v2031 = vand.u32 2147483647, %v2021
    %vm2032 = vcmp.eq.f32.partialorder %v2031, 8.507059e+37
    %v2033 = vand.u32 %v2021, 2147483648
    %v2034 = vor.u32 1.1754944e-38, %v2033
    %v2035 = vsel %vm2032, %v2034, %v2030
    %v2036 = vmul.f32 1.0, %v2035
    %v2037 = vtanh.pop %v1997
    %v2038 = vxor.u32 %v1998, 2147483648
    %v2039 = vmul.f32 %v2038, 1.442695
    %v2040 = vpow.pop %v2039
    %v2041 = vadd.f32 %v2040, 1.0
    %v2042 = vrcp.pop %v2041
    %v2043 = vmul.f32 %v2041, %v2042
    %v2044 = vsub.f32 1.0, %v2043
    %v2045 = vmul.f32 %v2042, %v2044
    %v2046 = vadd.f32 %v2042, %v2045
    %vm2047 = vweird.f32 %v2041
    %vm2048 = vweird.f32 %v2042
    %vm2049 = vmor %vm2047, %vm2048
    %v2050 = vsel %vm2049, %v2042, %v2046
    %v2051 = vand.u32 2147483647, %v2041
    %vm2052 = vcmp.eq.f32.partialorder %v2051, 8.507059e+37
    %v2053 = vand.u32 %v2041, 2147483648
    %v2054 = vor.u32 1.1754944e-38, %v2053
    %v2055 = vsel %vm2052, %v2054, %v2050
    %v2056 = vmul.f32 1.0, %v2055
    %v2057 = vmul.f32 %v2036, %v1749
    %v2058 = vmul.f32 %v2017, %v2037
    %v2059 = vadd.f32 %v2057, %v2058
    %v2060 = vtanh.pop %v2059
    %v2061 = vmul.f32 %v2056, %v2060
    %2062 = vmatpush.bf16.msra.mxu0 %v411
    %2063 = vmatpush.bf16.msra.mxu0 %v407
    %2064 = vmatpush.bf16.msra.mxu0 %v403
    %2065 = vmatpush.bf16.msra.mxu0 %v399
    %2066 = vmatpush.bf16.msra.mxu0 %v395
    %2067 = vmatpush.bf16.msra.mxu0 %v391
    %2068 = vmatpush.bf16.msra.mxu0 %v387
    %2069 = vmatpush.bf16.msra.mxu0 %v383
    %2070 = vmatmul.bf16.gmra.mxu0 %v1941
    %v2071 = vpop.f32.mrf.mxu0
    %v2072 = vadd.f32 0.0, %v2071
    %v2073 = vpop.f32.mrf.mxu0
    %2074 = vdwg.mxu0
    %2075 = vmatpush.bf16.msra.mxu0 %v412
    %2076 = vmatpush.bf16.msra.mxu0 %v408
    %2077 = vmatpush.bf16.msra.mxu0 %v404
    %2078 = vmatpush.bf16.msra.mxu0 %v400
    %2079 = vmatpush.bf16.msra.mxu0 %v396
    %2080 = vmatpush.bf16.msra.mxu0 %v392
    %2081 = vmatpush.bf16.msra.mxu0 %v388
    %2082 = vmatpush.bf16.msra.mxu0 %v384
    %2083 = vmatmul.bf16.gmra.mxu0 %v1941
    %v2084 = vpop.f32.mrf.mxu0
    %v2085 = vadd.f32 0.0, %v2084
    %v2086 = vpop.f32.mrf.mxu0
    %2087 = vdwg.mxu0
    %2088 = vmatpush.bf16.msra.mxu0 %v413
    %2089 = vmatpush.bf16.msra.mxu0 %v409
    %2090 = vmatpush.bf16.msra.mxu0 %v405
    %2091 = vmatpush.bf16.msra.mxu0 %v401
    %2092 = vmatpush.bf16.msra.mxu0 %v397
    %2093 = vmatpush.bf16.msra.mxu0 %v393
    %2094 = vmatpush.bf16.msra.mxu0 %v389
    %2095 = vmatpush.bf16.msra.mxu0 %v385
    %2096 = vmatmul.bf16.gmra.mxu0 %v1941
    %v2097 = vpop.f32.mrf.mxu0
    %v2098 = vadd.f32 0.0, %v2097
    %v2099 = vpop.f32.mrf.mxu0
    %2100 = vdwg.mxu0
    %2101 = vmatpush.bf16.msra.mxu0 %v414
    %2102 = vmatpush.bf16.msra.mxu0 %v410
    %2103 = vmatpush.bf16.msra.mxu0 %v406
    %2104 = vmatpush.bf16.msra.mxu0 %v402
    %2105 = vmatpush.bf16.msra.mxu0 %v398
    %2106 = vmatpush.bf16.msra.mxu0 %v394
    %2107 = vmatpush.bf16.msra.mxu0 %v390
    %2108 = vmatpush.bf16.msra.mxu0 %v386
    %2109 = vmatmul.bf16.gmra.mxu0 %v1941
    %v2110 = vpop.f32.mrf.mxu0
    %v2111 = vadd.f32 0.0, %v2110
    %v2112 = vpop.f32.mrf.mxu0
    %2113 = vdwg.mxu0
    %v2114 = vadd.f32 %v211, %v2072
    %v2115 = vadd.f32 %v225, %v2085
    %v2116 = vadd.f32 %v239, %v2098
    %v2117 = vadd.f32 %v253, %v2111
    %v2118 = vxor.u32 %v2114, 2147483648
    %v2119 = vmul.f32 %v2118, 1.442695
    %v2120 = vpow.pop %v2119
    %v2121 = vadd.f32 %v2120, 1.0
    %v2122 = vrcp.pop %v2121
    %v2123 = vmul.f32 %v2121, %v2122
    %v2124 = vsub.f32 1.0, %v2123
    %v2125 = vmul.f32 %v2122, %v2124
    %v2126 = vadd.f32 %v2122, %v2125
    %vm2127 = vweird.f32 %v2121
    %vm2128 = vweird.f32 %v2122
    %vm2129 = vmor %vm2127, %vm2128
    %v2130 = vsel %vm2129, %v2122, %v2126
    %v2131 = vand.u32 2147483647, %v2121
    %vm2132 = vcmp.eq.f32.partialorder %v2131, 8.507059e+37
    %v2133 = vand.u32 %v2121, 2147483648
    %v2134 = vor.u32 1.1754944e-38, %v2133
    %v2135 = vsel %vm2132, %v2134, %v2130
    %v2136 = vmul.f32 1.0, %v2135
    %v2137 = vxor.u32 %v2115, 2147483648
    %v2138 = vmul.f32 %v2137, 1.442695
    %v2139 = vpow.pop %v2138
    %v2140 = vadd.f32 %v2139, 1.0
    %v2141 = vrcp.pop %v2140
    %v2142 = vmul.f32 %v2140, %v2141
    %v2143 = vsub.f32 1.0, %v2142
    %v2144 = vmul.f32 %v2141, %v2143
    %v2145 = vadd.f32 %v2141, %v2144
    %vm2146 = vweird.f32 %v2140
    %vm2147 = vweird.f32 %v2141
    %vm2148 = vmor %vm2146, %vm2147
    %v2149 = vsel %vm2148, %v2141, %v2145
    %v2150 = vand.u32 2147483647, %v2140
    %vm2151 = vcmp.eq.f32.partialorder %v2150, 8.507059e+37
    %v2152 = vand.u32 %v2140, 2147483648
    %v2153 = vor.u32 1.1754944e-38, %v2152
    %v2154 = vsel %vm2151, %v2153, %v2149
    %v2155 = vmul.f32 1.0, %v2154
    %v2156 = vtanh.pop %v2116
    %v2157 = vxor.u32 %v2117, 2147483648
    %v2158 = vmul.f32 %v2157, 1.442695
    %v2159 = vpow.pop %v2158
    %v2160 = vadd.f32 %v2159, 1.0
    %v2161 = vrcp.pop %v2160
    %v2162 = vmul.f32 %v2160, %v2161
    %v2163 = vsub.f32 1.0, %v2162
    %v2164 = vmul.f32 %v2161, %v2163
    %v2165 = vadd.f32 %v2161, %v2164
    %vm2166 = vweird.f32 %v2160
    %vm2167 = vweird.f32 %v2161
    %vm2168 = vmor %vm2166, %vm2167
    %v2169 = vsel %vm2168, %v2161, %v2165
    %v2170 = vand.u32 2147483647, %v2160
    %vm2171 = vcmp.eq.f32.partialorder %v2170, 8.507059e+37
    %v2172 = vand.u32 %v2160, 2147483648
    %v2173 = vor.u32 1.1754944e-38, %v2172
    %v2174 = vsel %vm2171, %v2173, %v2169
    %v2175 = vmul.f32 1.0, %v2174
    %v2177 = vrot.slane %v1883, 6
    %v2179 = vmul.f32 %v2155, %v2177
    %v2180 = vmul.f32 %v2136, %v2156
    %v2181 = vadd.f32 %v2179, %v2180
    %v2182 = vtanh.pop %v2181
    %v2183 = vmul.f32 %v2175, %v2182
    %v2184 = vpack.c.bf16 %v2183, %v2183
    %v2185 = vpack.c.bf16 %v2061, %v2061
    %2186 = vmatpush.bf16.msra.mxu0 %v755
    %2187 = vmatpush.bf16.msra.mxu0 %v751
    %2188 = vmatpush.bf16.msra.mxu0 %v747
    %2189 = vmatpush.bf16.msra.mxu0 %v743
    %2190 = vmatpush.bf16.msra.mxu0 %v739
    %2191 = vmatpush.bf16.msra.mxu0 %v735
    %2192 = vmatpush.bf16.msra.mxu0 %v731
    %2193 = vmatpush.bf16.msra.mxu0 %v727
    %2194 = vmatmul.bf16.gmra.mxu0 %v2185
    %v2195 = vpop.f32.mrf.mxu0
    %v2196 = vadd.f32 0.0, %v2195
    %v2197 = vpop.f32.mrf.mxu0
    %2198 = vdwg.mxu0
    %2199 = vmatpush.bf16.msra.mxu0 %v756
    %2200 = vmatpush.bf16.msra.mxu0 %v752
    %2201 = vmatpush.bf16.msra.mxu0 %v748
    %2202 = vmatpush.bf16.msra.mxu0 %v744
    %2203 = vmatpush.bf16.msra.mxu0 %v740
    %2204 = vmatpush.bf16.msra.mxu0 %v736
    %2205 = vmatpush.bf16.msra.mxu0 %v732
    %2206 = vmatpush.bf16.msra.mxu0 %v728
    %2207 = vmatmul.bf16.gmra.mxu0 %v2185
    %v2208 = vpop.f32.mrf.mxu0
    %v2209 = vadd.f32 0.0, %v2208
    %v2210 = vpop.f32.mrf.mxu0
    %2211 = vdwg.mxu0
    %2212 = vmatpush.bf16.msra.mxu0 %v757
    %2213 = vmatpush.bf16.msra.mxu0 %v753
    %2214 = vmatpush.bf16.msra.mxu0 %v749
    %2215 = vmatpush.bf16.msra.mxu0 %v745
    %2216 = vmatpush.bf16.msra.mxu0 %v741
    %2217 = vmatpush.bf16.msra.mxu0 %v737
    %2218 = vmatpush.bf16.msra.mxu0 %v733
    %2219 = vmatpush.bf16.msra.mxu0 %v729
    %2220 = vmatmul.bf16.gmra.mxu0 %v2185
    %v2221 = vpop.f32.mrf.mxu0
    %v2222 = vadd.f32 0.0, %v2221
    %v2223 = vpop.f32.mrf.mxu0
    %2224 = vdwg.mxu0
    %2225 = vmatpush.bf16.msra.mxu0 %v758
    %2226 = vmatpush.bf16.msra.mxu0 %v754
    %2227 = vmatpush.bf16.msra.mxu0 %v750
    %2228 = vmatpush.bf16.msra.mxu0 %v746
    %2229 = vmatpush.bf16.msra.mxu0 %v742
    %2230 = vmatpush.bf16.msra.mxu0 %v738
    %2231 = vmatpush.bf16.msra.mxu0 %v734
    %2232 = vmatpush.bf16.msra.mxu0 %v730
    %2233 = vmatmul.bf16.gmra.mxu0 %v2185
    %v2234 = vpop.f32.mrf.mxu0
    %v2235 = vadd.f32 0.0, %v2234
    %v2236 = vpop.f32.mrf.mxu0
    %2237 = vdwg.mxu0
    %2238 = vmatpush.bf16.msra.mxu0 %v967
    %2239 = vmatpush.bf16.msra.mxu0 %v963
    %2240 = vmatpush.bf16.msra.mxu0 %v959
    %2241 = vmatpush.bf16.msra.mxu0 %v955
    %2242 = vmatpush.bf16.msra.mxu0 %v951
    %2243 = vmatpush.bf16.msra.mxu0 %v947
    %2244 = vmatpush.bf16.msra.mxu0 %v943
    %2245 = vmatpush.bf16.msra.mxu0 %v939
    %2246 = vmatmul.bf16.gmra.mxu0 %v2184
    %v2247 = vpop.f32.mrf.mxu0
    %v2248 = vadd.f32 %v2196, %v2247
    %v2249 = vpop.f32.mrf.mxu0
    %2250 = vdwg.mxu0
    %2251 = vmatpush.bf16.msra.mxu0 %v968
    %2252 = vmatpush.bf16.msra.mxu0 %v964
    %2253 = vmatpush.bf16.msra.mxu0 %v960
    %2254 = vmatpush.bf16.msra.mxu0 %v956
    %2255 = vmatpush.bf16.msra.mxu0 %v952
    %2256 = vmatpush.bf16.msra.mxu0 %v948
    %2257 = vmatpush.bf16.msra.mxu0 %v944
    %2258 = vmatpush.bf16.msra.mxu0 %v940
    %2259 = vmatmul.bf16.gmra.mxu0 %v2184
    %v2260 = vpop.f32.mrf.mxu0
    %v2261 = vadd.f32 %v2209, %v2260
    %v2262 = vpop.f32.mrf.mxu0
    %2263 = vdwg.mxu0
    %2264 = vmatpush.bf16.msra.mxu0 %v969
    %2265 = vmatpush.bf16.msra.mxu0 %v965
    %2266 = vmatpush.bf16.msra.mxu0 %v961
    %2267 = vmatpush.bf16.msra.mxu0 %v957
    %2268 = vmatpush.bf16.msra.mxu0 %v953
    %2269 = vmatpush.bf16.msra.mxu0 %v949
    %2270 = vmatpush.bf16.msra.mxu0 %v945
    %2271 = vmatpush.bf16.msra.mxu0 %v941
    %2272 = vmatmul.bf16.gmra.mxu0 %v2184
    %v2273 = vpop.f32.mrf.mxu0
    %v2274 = vadd.f32 %v2222, %v2273
    %v2275 = vpop.f32.mrf.mxu0
    %2276 = vdwg.mxu0
    %2277 = vmatpush.bf16.msra.mxu0 %v970
    %2278 = vmatpush.bf16.msra.mxu0 %v966
    %2279 = vmatpush.bf16.msra.mxu0 %v962
    %2280 = vmatpush.bf16.msra.mxu0 %v958
    %2281 = vmatpush.bf16.msra.mxu0 %v954
    %2282 = vmatpush.bf16.msra.mxu0 %v950
    %2283 = vmatpush.bf16.msra.mxu0 %v946
    %2284 = vmatpush.bf16.msra.mxu0 %v942
    %2285 = vmatmul.bf16.gmra.mxu0 %v2184
    %v2286 = vpop.f32.mrf.mxu0
    %v2287 = vadd.f32 %v2235, %v2286
    %v2288 = vpop.f32.mrf.mxu0
    %2289 = vdwg.mxu0
    %v2290 = vadd.f32 %v2248, %v1057
    %v2291 = vadd.f32 %v2261, %v1058
    %v2292 = vadd.f32 %v2274, %v1059
    %v2293 = vadd.f32 %v2287, %v1060
    %v2294 = vxor.u32 %v2290, 2147483648
    %v2295 = vmul.f32 %v2294, 1.442695
    %v2296 = vpow.pop %v2295
    %v2297 = vadd.f32 %v2296, 1.0
    %v2298 = vrcp.pop %v2297
    %v2299 = vmul.f32 %v2297, %v2298
    %v2300 = vsub.f32 1.0, %v2299
    %v2301 = vmul.f32 %v2298, %v2300
    %v2302 = vadd.f32 %v2298, %v2301
    %vm2303 = vweird.f32 %v2297
    %vm2304 = vweird.f32 %v2298
    %vm2305 = vmor %vm2303, %vm2304
    %v2306 = vsel %vm2305, %v2298, %v2302
    %v2307 = vand.u32 2147483647, %v2297
    %vm2308 = vcmp.eq.f32.partialorder %v2307, 8.507059e+37
    %v2309 = vand.u32 %v2297, 2147483648
    %v2310 = vor.u32 1.1754944e-38, %v2309
    %v2311 = vsel %vm2308, %v2310, %v2306
    %v2312 = vmul.f32 1.0, %v2311
    %v2313 = vxor.u32 %v2291, 2147483648
    %v2314 = vmul.f32 %v2313, 1.442695
    %v2315 = vpow.pop %v2314
    %v2316 = vadd.f32 %v2315, 1.0
    %v2317 = vrcp.pop %v2316
    %v2318 = vmul.f32 %v2316, %v2317
    %v2319 = vsub.f32 1.0, %v2318
    %v2320 = vmul.f32 %v2317, %v2319
    %v2321 = vadd.f32 %v2317, %v2320
    %vm2322 = vweird.f32 %v2316
    %vm2323 = vweird.f32 %v2317
    %vm2324 = vmor %vm2322, %vm2323
    %v2325 = vsel %vm2324, %v2317, %v2321
    %v2326 = vand.u32 2147483647, %v2316
    %vm2327 = vcmp.eq.f32.partialorder %v2326, 8.507059e+37
    %v2328 = vand.u32 %v2316, 2147483648
    %v2329 = vor.u32 1.1754944e-38, %v2328
    %v2330 = vsel %vm2327, %v2329, %v2325
    %v2331 = vmul.f32 1.0, %v2330
    %v2332 = vtanh.pop %v2292
    %v2333 = vxor.u32 %v2293, 2147483648
    %v2334 = vmul.f32 %v2333, 1.442695
    %v2335 = vpow.pop %v2334
    %v2336 = vadd.f32 %v2335, 1.0
    %v2337 = vrcp.pop %v2336
    %v2338 = vmul.f32 %v2336, %v2337
    %v2339 = vsub.f32 1.0, %v2338
    %v2340 = vmul.f32 %v2337, %v2339
    %v2341 = vadd.f32 %v2337, %v2340
    %vm2342 = vweird.f32 %v2336
    %vm2343 = vweird.f32 %v2337
    %vm2344 = vmor %vm2342, %vm2343
    %v2345 = vsel %vm2344, %v2337, %v2341
    %v2346 = vand.u32 2147483647, %v2336
    %vm2347 = vcmp.eq.f32.partialorder %v2346, 8.507059e+37
    %v2348 = vand.u32 %v2336, 2147483648
    %v2349 = vor.u32 1.1754944e-38, %v2348
    %v2350 = vsel %vm2347, %v2349, %v2345
    %v2351 = vmul.f32 1.0, %v2350
    %v2352 = vmul.f32 %v2331, %v2059
    %v2353 = vmul.f32 %v2312, %v2332
    %v2354 = vadd.f32 %v2352, %v2353
    %v2355 = vtanh.pop %v2354
    %v2356 = vmul.f32 %v2351, %v2355
    %2357 = vmatpush.bf16.msra.mxu0 %v411
    %2358 = vmatpush.bf16.msra.mxu0 %v407
    %2359 = vmatpush.bf16.msra.mxu0 %v403
    %2360 = vmatpush.bf16.msra.mxu0 %v399
    %2361 = vmatpush.bf16.msra.mxu0 %v395
    %2362 = vmatpush.bf16.msra.mxu0 %v391
    %2363 = vmatpush.bf16.msra.mxu0 %v387
    %2364 = vmatpush.bf16.msra.mxu0 %v383
    %2365 = vmatmul.bf16.gmra.mxu0 %v2184
    %v2366 = vpop.f32.mrf.mxu0
    %v2367 = vadd.f32 0.0, %v2366
    %v2368 = vpop.f32.mrf.mxu0
    %2369 = vdwg.mxu0
    %2370 = vmatpush.bf16.msra.mxu0 %v412
    %2371 = vmatpush.bf16.msra.mxu0 %v408
    %2372 = vmatpush.bf16.msra.mxu0 %v404
    %2373 = vmatpush.bf16.msra.mxu0 %v400
    %2374 = vmatpush.bf16.msra.mxu0 %v396
    %2375 = vmatpush.bf16.msra.mxu0 %v392
    %2376 = vmatpush.bf16.msra.mxu0 %v388
    %2377 = vmatpush.bf16.msra.mxu0 %v384
    %2378 = vmatmul.bf16.gmra.mxu0 %v2184
    %v2379 = vpop.f32.mrf.mxu0
    %v2380 = vadd.f32 0.0, %v2379
    %v2381 = vpop.f32.mrf.mxu0
    %2382 = vdwg.mxu0
    %2383 = vmatpush.bf16.msra.mxu0 %v413
    %2384 = vmatpush.bf16.msra.mxu0 %v409
    %2385 = vmatpush.bf16.msra.mxu0 %v405
    %2386 = vmatpush.bf16.msra.mxu0 %v401
    %2387 = vmatpush.bf16.msra.mxu0 %v397
    %2388 = vmatpush.bf16.msra.mxu0 %v393
    %2389 = vmatpush.bf16.msra.mxu0 %v389
    %2390 = vmatpush.bf16.msra.mxu0 %v385
    %2391 = vmatmul.bf16.gmra.mxu0 %v2184
    %v2392 = vpop.f32.mrf.mxu0
    %v2393 = vadd.f32 0.0, %v2392
    %v2394 = vpop.f32.mrf.mxu0
    %2395 = vdwg.mxu0
    %2396 = vmatpush.bf16.msra.mxu0 %v414
    %2397 = vmatpush.bf16.msra.mxu0 %v410
    %2398 = vmatpush.bf16.msra.mxu0 %v406
    %2399 = vmatpush.bf16.msra.mxu0 %v402
    %2400 = vmatpush.bf16.msra.mxu0 %v398
    %2401 = vmatpush.bf16.msra.mxu0 %v394
    %2402 = vmatpush.bf16.msra.mxu0 %v390
    %2403 = vmatpush.bf16.msra.mxu0 %v386
    %2404 = vmatmul.bf16.gmra.mxu0 %v2184
    %v2405 = vpop.f32.mrf.mxu0
    %v2406 = vadd.f32 0.0, %v2405
    %v2407 = vpop.f32.mrf.mxu0
    %2408 = vdwg.mxu0
    %v2413 = vrot.slane %v2367, 6
    %v2414 = vrot.slane %v2380, 6
    %v2415 = vrot.slane %v2393, 6
    %v2416 = vrot.slane %v2406, 6
    %v2421 = vadd.f32 %v211, %v2413
    %v2422 = vadd.f32 %v225, %v2414
    %v2423 = vadd.f32 %v239, %v2415
    %v2424 = vadd.f32 %v253, %v2416
    %v2425 = vxor.u32 %v2421, 2147483648
    %v2426 = vmul.f32 %v2425, 1.442695
    %v2427 = vpow.pop %v2426
    %v2428 = vadd.f32 %v2427, 1.0
    %v2429 = vrcp.pop %v2428
    %v2430 = vmul.f32 %v2428, %v2429
    %v2431 = vsub.f32 1.0, %v2430
    %v2432 = vmul.f32 %v2429, %v2431
    %v2433 = vadd.f32 %v2429, %v2432
    %vm2434 = vweird.f32 %v2428
    %vm2435 = vweird.f32 %v2429
    %vm2436 = vmor %vm2434, %vm2435
    %v2437 = vsel %vm2436, %v2429, %v2433
    %v2438 = vand.u32 2147483647, %v2428
    %vm2439 = vcmp.eq.f32.partialorder %v2438, 8.507059e+37
    %v2440 = vand.u32 %v2428, 2147483648
    %v2441 = vor.u32 1.1754944e-38, %v2440
    %v2442 = vsel %vm2439, %v2441, %v2437
    %v2443 = vmul.f32 1.0, %v2442
    %v2444 = vxor.u32 %v2422, 2147483648
    %v2445 = vmul.f32 %v2444, 1.442695
    %v2446 = vpow.pop %v2445
    %v2447 = vadd.f32 %v2446, 1.0
    %v2448 = vrcp.pop %v2447
    %v2449 = vmul.f32 %v2447, %v2448
    %v2450 = vsub.f32 1.0, %v2449
    %v2451 = vmul.f32 %v2448, %v2450
    %v2452 = vadd.f32 %v2448, %v2451
    %vm2453 = vweird.f32 %v2447
    %vm2454 = vweird.f32 %v2448
    %vm2455 = vmor %vm2453, %vm2454
    %v2456 = vsel %vm2455, %v2448, %v2452
    %v2457 = vand.u32 2147483647, %v2447
    %vm2458 = vcmp.eq.f32.partialorder %v2457, 8.507059e+37
    %v2459 = vand.u32 %v2447, 2147483648
    %v2460 = vor.u32 1.1754944e-38, %v2459
    %v2461 = vsel %vm2458, %v2460, %v2456
    %v2462 = vmul.f32 1.0, %v2461
    %v2463 = vtanh.pop %v2423
    %v2464 = vxor.u32 %v2424, 2147483648
    %v2465 = vmul.f32 %v2464, 1.442695
    %v2466 = vpow.pop %v2465
    %v2467 = vadd.f32 %v2466, 1.0
    %v2468 = vrcp.pop %v2467
    %v2469 = vmul.f32 %v2467, %v2468
    %v2470 = vsub.f32 1.0, %v2469
    %v2471 = vmul.f32 %v2468, %v2470
    %v2472 = vadd.f32 %v2468, %v2471
    %vm2473 = vweird.f32 %v2467
    %vm2474 = vweird.f32 %v2468
    %vm2475 = vmor %vm2473, %vm2474
    %v2476 = vsel %vm2475, %v2468, %v2472
    %v2477 = vand.u32 2147483647, %v2467
    %vm2478 = vcmp.eq.f32.partialorder %v2477, 8.507059e+37
    %v2479 = vand.u32 %v2467, 2147483648
    %v2480 = vor.u32 1.1754944e-38, %v2479
    %v2481 = vsel %vm2478, %v2480, %v2476
    %v2482 = vmul.f32 1.0, %v2481
    %v2484 = vrot.slane %v2181, 6
    %v2486 = vmul.f32 %v2462, %v2484
    %v2487 = vmul.f32 %v2443, %v2463
    %v2488 = vadd.f32 %v2486, %v2487
    %v2489 = vtanh.pop %v2488
    %v2490 = vmul.f32 %v2482, %v2489
    %v2491 = vpack.c.bf16 %v2490, %v2490
    %v2492 = vpack.c.bf16 %v2356, %v2356
    %2493 = vmatpush.bf16.msra.mxu0 %v755
    %2494 = vmatpush.bf16.msra.mxu0 %v751
    %2495 = vmatpush.bf16.msra.mxu0 %v747
    %2496 = vmatpush.bf16.msra.mxu0 %v743
    %2497 = vmatpush.bf16.msra.mxu0 %v739
    %2498 = vmatpush.bf16.msra.mxu0 %v735
    %2499 = vmatpush.bf16.msra.mxu0 %v731
    %2500 = vmatpush.bf16.msra.mxu0 %v727
    %2501 = vmatmul.bf16.gmra.mxu0 %v2492
    %v2502 = vpop.f32.mrf.mxu0
    %v2503 = vadd.f32 0.0, %v2502
    %v2504 = vpop.f32.mrf.mxu0
    %2505 = vdwg.mxu0
    %2506 = vmatpush.bf16.msra.mxu0 %v756
    %2507 = vmatpush.bf16.msra.mxu0 %v752
    %2508 = vmatpush.bf16.msra.mxu0 %v748
    %2509 = vmatpush.bf16.msra.mxu0 %v744
    %2510 = vmatpush.bf16.msra.mxu0 %v740
    %2511 = vmatpush.bf16.msra.mxu0 %v736
    %2512 = vmatpush.bf16.msra.mxu0 %v732
    %2513 = vmatpush.bf16.msra.mxu0 %v728
    %2514 = vmatmul.bf16.gmra.mxu0 %v2492
    %v2515 = vpop.f32.mrf.mxu0
    %v2516 = vadd.f32 0.0, %v2515
    %v2517 = vpop.f32.mrf.mxu0
    %2518 = vdwg.mxu0
    %2519 = vmatpush.bf16.msra.mxu0 %v757
    %2520 = vmatpush.bf16.msra.mxu0 %v753
    %2521 = vmatpush.bf16.msra.mxu0 %v749
    %2522 = vmatpush.bf16.msra.mxu0 %v745
    %2523 = vmatpush.bf16.msra.mxu0 %v741
    %2524 = vmatpush.bf16.msra.mxu0 %v737
    %2525 = vmatpush.bf16.msra.mxu0 %v733
    %2526 = vmatpush.bf16.msra.mxu0 %v729
    %2527 = vmatmul.bf16.gmra.mxu0 %v2492
    %v2528 = vpop.f32.mrf.mxu0
    %v2529 = vadd.f32 0.0, %v2528
    %v2530 = vpop.f32.mrf.mxu0
    %2531 = vdwg.mxu0
    %2532 = vmatpush.bf16.msra.mxu0 %v758
    %2533 = vmatpush.bf16.msra.mxu0 %v754
    %2534 = vmatpush.bf16.msra.mxu0 %v750
    %2535 = vmatpush.bf16.msra.mxu0 %v746
    %2536 = vmatpush.bf16.msra.mxu0 %v742
    %2537 = vmatpush.bf16.msra.mxu0 %v738
    %2538 = vmatpush.bf16.msra.mxu0 %v734
    %2539 = vmatpush.bf16.msra.mxu0 %v730
    %2540 = vmatmul.bf16.gmra.mxu0 %v2492
    %v2541 = vpop.f32.mrf.mxu0
    %v2542 = vadd.f32 0.0, %v2541
    %v2543 = vpop.f32.mrf.mxu0
    %2544 = vdwg.mxu0
    %v2546 = vrot.slane %v2491, 1
    %2548 = vmatpush.bf16.msra.mxu0 %v967
    %2549 = vmatpush.bf16.msra.mxu0 %v963
    %2550 = vmatpush.bf16.msra.mxu0 %v959
    %2551 = vmatpush.bf16.msra.mxu0 %v955
    %2552 = vmatpush.bf16.msra.mxu0 %v951
    %2553 = vmatpush.bf16.msra.mxu0 %v947
    %2554 = vmatpush.bf16.msra.mxu0 %v943
    %2555 = vmatpush.bf16.msra.mxu0 %v939
    %2556 = vmatmul.bf16.gmra.mxu0 %v2546
    %v2557 = vpop.f32.mrf.mxu0
    %v2558 = vadd.f32 %v2503, %v2557
    %v2559 = vpop.f32.mrf.mxu0
    %2560 = vdwg.mxu0
    %2561 = vmatpush.bf16.msra.mxu0 %v968
    %2562 = vmatpush.bf16.msra.mxu0 %v964
    %2563 = vmatpush.bf16.msra.mxu0 %v960
    %2564 = vmatpush.bf16.msra.mxu0 %v956
    %2565 = vmatpush.bf16.msra.mxu0 %v952
    %2566 = vmatpush.bf16.msra.mxu0 %v948
    %2567 = vmatpush.bf16.msra.mxu0 %v944
    %2568 = vmatpush.bf16.msra.mxu0 %v940
    %2569 = vmatmul.bf16.gmra.mxu0 %v2546
    %v2570 = vpop.f32.mrf.mxu0
    %v2571 = vadd.f32 %v2516, %v2570
    %v2572 = vpop.f32.mrf.mxu0
    %2573 = vdwg.mxu0
    %2574 = vmatpush.bf16.msra.mxu0 %v969
    %2575 = vmatpush.bf16.msra.mxu0 %v965
    %2576 = vmatpush.bf16.msra.mxu0 %v961
    %2577 = vmatpush.bf16.msra.mxu0 %v957
    %2578 = vmatpush.bf16.msra.mxu0 %v953
    %2579 = vmatpush.bf16.msra.mxu0 %v949
    %2580 = vmatpush.bf16.msra.mxu0 %v945
    %2581 = vmatpush.bf16.msra.mxu0 %v941
    %2582 = vmatmul.bf16.gmra.mxu0 %v2546
    %v2583 = vpop.f32.mrf.mxu0
    %v2584 = vadd.f32 %v2529, %v2583
    %v2585 = vpop.f32.mrf.mxu0
    %2586 = vdwg.mxu0
    %2587 = vmatpush.bf16.msra.mxu0 %v970
    %2588 = vmatpush.bf16.msra.mxu0 %v966
    %2589 = vmatpush.bf16.msra.mxu0 %v962
    %2590 = vmatpush.bf16.msra.mxu0 %v958
    %2591 = vmatpush.bf16.msra.mxu0 %v954
    %2592 = vmatpush.bf16.msra.mxu0 %v950
    %2593 = vmatpush.bf16.msra.mxu0 %v946
    %2594 = vmatpush.bf16.msra.mxu0 %v942
    %2595 = vmatmul.bf16.gmra.mxu0 %v2546
    %v2596 = vpop.f32.mrf.mxu0
    %v2597 = vadd.f32 %v2542, %v2596
    %v2598 = vpop.f32.mrf.mxu0
    %2599 = vdwg.mxu0
    %v2600 = vadd.f32 %v2558, %v1057
    %v2601 = vadd.f32 %v2571, %v1058
    %v2602 = vadd.f32 %v2584, %v1059
    %v2603 = vadd.f32 %v2597, %v1060
    %v2604 = vxor.u32 %v2600, 2147483648
    %v2605 = vmul.f32 %v2604, 1.442695
    %v2606 = vpow.pop %v2605
    %v2607 = vadd.f32 %v2606, 1.0
    %v2608 = vrcp.pop %v2607
    %v2609 = vmul.f32 %v2607, %v2608
    %v2610 = vsub.f32 1.0, %v2609
    %v2611 = vmul.f32 %v2608, %v2610
    %v2612 = vadd.f32 %v2608, %v2611
    %vm2613 = vweird.f32 %v2607
    %vm2614 = vweird.f32 %v2608
    %vm2615 = vmor %vm2613, %vm2614
    %v2616 = vsel %vm2615, %v2608, %v2612
    %v2617 = vand.u32 2147483647, %v2607
    %vm2618 = vcmp.eq.f32.partialorder %v2617, 8.507059e+37
    %v2619 = vand.u32 %v2607, 2147483648
    %v2620 = vor.u32 1.1754944e-38, %v2619
    %v2621 = vsel %vm2618, %v2620, %v2616
    %v2622 = vmul.f32 1.0, %v2621
    %v2623 = vxor.u32 %v2601, 2147483648
    %v2624 = vmul.f32 %v2623, 1.442695
    %v2625 = vpow.pop %v2624
    %v2626 = vadd.f32 %v2625, 1.0
    %v2627 = vrcp.pop %v2626
    %v2628 = vmul.f32 %v2626, %v2627
    %v2629 = vsub.f32 1.0, %v2628
    %v2630 = vmul.f32 %v2627, %v2629
    %v2631 = vadd.f32 %v2627, %v2630
    %vm2632 = vweird.f32 %v2626
    %vm2633 = vweird.f32 %v2627
    %vm2634 = vmor %vm2632, %vm2633
    %v2635 = vsel %vm2634, %v2627, %v2631
    %v2636 = vand.u32 2147483647, %v2626
    %vm2637 = vcmp.eq.f32.partialorder %v2636, 8.507059e+37
    %v2638 = vand.u32 %v2626, 2147483648
    %v2639 = vor.u32 1.1754944e-38, %v2638
    %v2640 = vsel %vm2637, %v2639, %v2635
    %v2641 = vmul.f32 1.0, %v2640
    %v2642 = vtanh.pop %v2602
    %v2643 = vxor.u32 %v2603, 2147483648
    %v2644 = vmul.f32 %v2643, 1.442695
    %v2645 = vpow.pop %v2644
    %v2646 = vadd.f32 %v2645, 1.0
    %v2647 = vrcp.pop %v2646
    %v2648 = vmul.f32 %v2646, %v2647
    %v2649 = vsub.f32 1.0, %v2648
    %v2650 = vmul.f32 %v2647, %v2649
    %v2651 = vadd.f32 %v2647, %v2650
    %vm2652 = vweird.f32 %v2646
    %vm2653 = vweird.f32 %v2647
    %vm2654 = vmor %vm2652, %vm2653
    %v2655 = vsel %vm2654, %v2647, %v2651
    %v2656 = vand.u32 2147483647, %v2646
    %vm2657 = vcmp.eq.f32.partialorder %v2656, 8.507059e+37
    %v2658 = vand.u32 %v2646, 2147483648
    %v2659 = vor.u32 1.1754944e-38, %v2658
    %v2660 = vsel %vm2657, %v2659, %v2655
    %v2661 = vmul.f32 1.0, %v2660
    %v2662 = vmul.f32 %v2641, %v2354
    %v2663 = vmul.f32 %v2622, %v2642
    %v2664 = vadd.f32 %v2662, %v2663
    %v2665 = vtanh.pop %v2664
    %v2666 = vmul.f32 %v2661, %v2665
    %2667 = vmatpush.bf16.msra.mxu0 %v411
    %2668 = vmatpush.bf16.msra.mxu0 %v407
    %2669 = vmatpush.bf16.msra.mxu0 %v403
    %2670 = vmatpush.bf16.msra.mxu0 %v399
    %2671 = vmatpush.bf16.msra.mxu0 %v395
    %2672 = vmatpush.bf16.msra.mxu0 %v391
    %2673 = vmatpush.bf16.msra.mxu0 %v387
    %2674 = vmatpush.bf16.msra.mxu0 %v383
    %2675 = vmatmul.bf16.gmra.mxu0 %v2546
    %v2676 = vpop.f32.mrf.mxu0
    %v2677 = vadd.f32 0.0, %v2676
    %v2678 = vpop.f32.mrf.mxu0
    %2679 = vdwg.mxu0
    %2680 = vmatpush.bf16.msra.mxu0 %v412
    %2681 = vmatpush.bf16.msra.mxu0 %v408
    %2682 = vmatpush.bf16.msra.mxu0 %v404
    %2683 = vmatpush.bf16.msra.mxu0 %v400
    %2684 = vmatpush.bf16.msra.mxu0 %v396
    %2685 = vmatpush.bf16.msra.mxu0 %v392
    %2686 = vmatpush.bf16.msra.mxu0 %v388
    %2687 = vmatpush.bf16.msra.mxu0 %v384
    %2688 = vmatmul.bf16.gmra.mxu0 %v2546
    %v2689 = vpop.f32.mrf.mxu0
    %v2690 = vadd.f32 0.0, %v2689
    %v2691 = vpop.f32.mrf.mxu0
    %2692 = vdwg.mxu0
    %2693 = vmatpush.bf16.msra.mxu0 %v413
    %2694 = vmatpush.bf16.msra.mxu0 %v409
    %2695 = vmatpush.bf16.msra.mxu0 %v405
    %2696 = vmatpush.bf16.msra.mxu0 %v401
    %2697 = vmatpush.bf16.msra.mxu0 %v397
    %2698 = vmatpush.bf16.msra.mxu0 %v393
    %2699 = vmatpush.bf16.msra.mxu0 %v389
    %2700 = vmatpush.bf16.msra.mxu0 %v385
    %2701 = vmatmul.bf16.gmra.mxu0 %v2546
    %v2702 = vpop.f32.mrf.mxu0
    %v2703 = vadd.f32 0.0, %v2702
    %v2704 = vpop.f32.mrf.mxu0
    %2705 = vdwg.mxu0
    %2706 = vmatpush.bf16.msra.mxu0 %v414
    %2707 = vmatpush.bf16.msra.mxu0 %v410
    %2708 = vmatpush.bf16.msra.mxu0 %v406
    %2709 = vmatpush.bf16.msra.mxu0 %v402
    %2710 = vmatpush.bf16.msra.mxu0 %v398
    %2711 = vmatpush.bf16.msra.mxu0 %v394
    %2712 = vmatpush.bf16.msra.mxu0 %v390
    %2713 = vmatpush.bf16.msra.mxu0 %v386
    %2714 = vmatmul.bf16.gmra.mxu0 %v2546
    %v2715 = vpop.f32.mrf.mxu0
    %v2716 = vadd.f32 0.0, %v2715
    %v2717 = vpop.f32.mrf.mxu0
    %2718 = vdwg.mxu0
    %v2723 = vrot.slane %v2677, 4
    %v2724 = vrot.slane %v2690, 4
    %v2725 = vrot.slane %v2703, 4
    %v2726 = vrot.slane %v2716, 4
    %v2731 = vadd.f32 %v211, %v2723
    %v2732 = vadd.f32 %v225, %v2724
    %v2733 = vadd.f32 %v239, %v2725
    %v2734 = vadd.f32 %v253, %v2726
    %v2735 = vxor.u32 %v2731, 2147483648
    %v2736 = vmul.f32 %v2735, 1.442695
    %v2737 = vpow.pop %v2736
    %v2738 = vadd.f32 %v2737, 1.0
    %v2739 = vrcp.pop %v2738
    %v2740 = vmul.f32 %v2738, %v2739
    %v2741 = vsub.f32 1.0, %v2740
    %v2742 = vmul.f32 %v2739, %v2741
    %v2743 = vadd.f32 %v2739, %v2742
    %vm2744 = vweird.f32 %v2738
    %vm2745 = vweird.f32 %v2739
    %vm2746 = vmor %vm2744, %vm2745
    %v2747 = vsel %vm2746, %v2739, %v2743
    %v2748 = vand.u32 2147483647, %v2738
    %vm2749 = vcmp.eq.f32.partialorder %v2748, 8.507059e+37
    %v2750 = vand.u32 %v2738, 2147483648
    %v2751 = vor.u32 1.1754944e-38, %v2750
    %v2752 = vsel %vm2749, %v2751, %v2747
    %v2753 = vmul.f32 1.0, %v2752
    %v2754 = vxor.u32 %v2732, 2147483648
    %v2755 = vmul.f32 %v2754, 1.442695
    %v2756 = vpow.pop %v2755
    %v2757 = vadd.f32 %v2756, 1.0
    %v2758 = vrcp.pop %v2757
    %v2759 = vmul.f32 %v2757, %v2758
    %v2760 = vsub.f32 1.0, %v2759
    %v2761 = vmul.f32 %v2758, %v2760
    %v2762 = vadd.f32 %v2758, %v2761
    %vm2763 = vweird.f32 %v2757
    %vm2764 = vweird.f32 %v2758
    %vm2765 = vmor %vm2763, %vm2764
    %v2766 = vsel %vm2765, %v2758, %v2762
    %v2767 = vand.u32 2147483647, %v2757
    %vm2768 = vcmp.eq.f32.partialorder %v2767, 8.507059e+37
    %v2769 = vand.u32 %v2757, 2147483648
    %v2770 = vor.u32 1.1754944e-38, %v2769
    %v2771 = vsel %vm2768, %v2770, %v2766
    %v2772 = vmul.f32 1.0, %v2771
    %v2773 = vtanh.pop %v2733
    %v2774 = vxor.u32 %v2734, 2147483648
    %v2775 = vmul.f32 %v2774, 1.442695
    %v2776 = vpow.pop %v2775
    %v2777 = vadd.f32 %v2776, 1.0
    %v2778 = vrcp.pop %v2777
    %v2779 = vmul.f32 %v2777, %v2778
    %v2780 = vsub.f32 1.0, %v2779
    %v2781 = vmul.f32 %v2778, %v2780
    %v2782 = vadd.f32 %v2778, %v2781
    %vm2783 = vweird.f32 %v2777
    %vm2784 = vweird.f32 %v2778
    %vm2785 = vmor %vm2783, %vm2784
    %v2786 = vsel %vm2785, %v2778, %v2782
    %v2787 = vand.u32 2147483647, %v2777
    %vm2788 = vcmp.eq.f32.partialorder %v2787, 8.507059e+37
    %v2789 = vand.u32 %v2777, 2147483648
    %v2790 = vor.u32 1.1754944e-38, %v2789
    %v2791 = vsel %vm2788, %v2790, %v2786
    %v2792 = vmul.f32 1.0, %v2791
    %v2794 = vrot.slane %v2488, 6
    %v2796 = vmul.f32 %v2772, %v2794
    %v2797 = vmul.f32 %v2753, %v2773
    %v2798 = vadd.f32 %v2796, %v2797
    %v2799 = vtanh.pop %v2798
    %v2800 = vmul.f32 %v2792, %v2799
    %v2801 = vpack.c.bf16 %v2800, %v2800
    %v2802 = vpack.c.bf16 %v2666, %v2666
    %2803 = vmatpush.bf16.msra.mxu0 %v755
    %2804 = vmatpush.bf16.msra.mxu0 %v751
    %2805 = vmatpush.bf16.msra.mxu0 %v747
    %2806 = vmatpush.bf16.msra.mxu0 %v743
    %2807 = vmatpush.bf16.msra.mxu0 %v739
    %2808 = vmatpush.bf16.msra.mxu0 %v735
    %2809 = vmatpush.bf16.msra.mxu0 %v731
    %2810 = vmatpush.bf16.msra.mxu0 %v727
    %2811 = vmatmul.bf16.gmra.mxu0 %v2802
    %v2812 = vpop.f32.mrf.mxu0
    %v2813 = vadd.f32 0.0, %v2812
    %v2814 = vpop.f32.mrf.mxu0
    %2815 = vdwg.mxu0
    %2816 = vmatpush.bf16.msra.mxu0 %v756
    %2817 = vmatpush.bf16.msra.mxu0 %v752
    %2818 = vmatpush.bf16.msra.mxu0 %v748
    %2819 = vmatpush.bf16.msra.mxu0 %v744
    %2820 = vmatpush.bf16.msra.mxu0 %v740
    %2821 = vmatpush.bf16.msra.mxu0 %v736
    %2822 = vmatpush.bf16.msra.mxu0 %v732
    %2823 = vmatpush.bf16.msra.mxu0 %v728
    %2824 = vmatmul.bf16.gmra.mxu0 %v2802
    %v2825 = vpop.f32.mrf.mxu0
    %v2826 = vadd.f32 0.0, %v2825
    %v2827 = vpop.f32.mrf.mxu0
    %2828 = vdwg.mxu0
    %2829 = vmatpush.bf16.msra.mxu0 %v757
    %2830 = vmatpush.bf16.msra.mxu0 %v753
    %2831 = vmatpush.bf16.msra.mxu0 %v749
    %2832 = vmatpush.bf16.msra.mxu0 %v745
    %2833 = vmatpush.bf16.msra.mxu0 %v741
    %2834 = vmatpush.bf16.msra.mxu0 %v737
    %2835 = vmatpush.bf16.msra.mxu0 %v733
    %2836 = vmatpush.bf16.msra.mxu0 %v729
    %2837 = vmatmul.bf16.gmra.mxu0 %v2802
    %v2838 = vpop.f32.mrf.mxu0
    %v2839 = vadd.f32 0.0, %v2838
    %v2840 = vpop.f32.mrf.mxu0
    %2841 = vdwg.mxu0
    %2842 = vmatpush.bf16.msra.mxu0 %v758
    %2843 = vmatpush.bf16.msra.mxu0 %v754
    %2844 = vmatpush.bf16.msra.mxu0 %v750
    %2845 = vmatpush.bf16.msra.mxu0 %v746
    %2846 = vmatpush.bf16.msra.mxu0 %v742
    %2847 = vmatpush.bf16.msra.mxu0 %v738
    %2848 = vmatpush.bf16.msra.mxu0 %v734
    %2849 = vmatpush.bf16.msra.mxu0 %v730
    %2850 = vmatmul.bf16.gmra.mxu0 %v2802
    %v2851 = vpop.f32.mrf.mxu0
    %v2852 = vadd.f32 0.0, %v2851
    %v2853 = vpop.f32.mrf.mxu0
    %2854 = vdwg.mxu0
    %v2856 = vrot.slane %v2801, 2
    %2858 = vmatpush.bf16.msra.mxu0 %v967
    %2859 = vmatpush.bf16.msra.mxu0 %v963
    %2860 = vmatpush.bf16.msra.mxu0 %v959
    %2861 = vmatpush.bf16.msra.mxu0 %v955
    %2862 = vmatpush.bf16.msra.mxu0 %v951
    %2863 = vmatpush.bf16.msra.mxu0 %v947
    %2864 = vmatpush.bf16.msra.mxu0 %v943
    %2865 = vmatpush.bf16.msra.mxu0 %v939
    %2866 = vmatmul.bf16.gmra.mxu0 %v2856
    %v2867 = vpop.f32.mrf.mxu0
    %v2868 = vadd.f32 %v2813, %v2867
    %v2869 = vpop.f32.mrf.mxu0
    %2870 = vdwg.mxu0
    %2871 = vmatpush.bf16.msra.mxu0 %v968
    %2872 = vmatpush.bf16.msra.mxu0 %v964
    %2873 = vmatpush.bf16.msra.mxu0 %v960
    %2874 = vmatpush.bf16.msra.mxu0 %v956
    %2875 = vmatpush.bf16.msra.mxu0 %v952
    %2876 = vmatpush.bf16.msra.mxu0 %v948
    %2877 = vmatpush.bf16.msra.mxu0 %v944
    %2878 = vmatpush.bf16.msra.mxu0 %v940
    %2879 = vmatmul.bf16.gmra.mxu0 %v2856
    %v2880 = vpop.f32.mrf.mxu0
    %v2881 = vadd.f32 %v2826, %v2880
    %v2882 = vpop.f32.mrf.mxu0
    %2883 = vdwg.mxu0
    %2884 = vmatpush.bf16.msra.mxu0 %v969
    %2885 = vmatpush.bf16.msra.mxu0 %v965
    %2886 = vmatpush.bf16.msra.mxu0 %v961
    %2887 = vmatpush.bf16.msra.mxu0 %v957
    %2888 = vmatpush.bf16.msra.mxu0 %v953
    %2889 = vmatpush.bf16.msra.mxu0 %v949
    %2890 = vmatpush.bf16.msra.mxu0 %v945
    %2891 = vmatpush.bf16.msra.mxu0 %v941
    %2892 = vmatmul.bf16.gmra.mxu0 %v2856
    %v2893 = vpop.f32.mrf.mxu0
    %v2894 = vadd.f32 %v2839, %v2893
    %v2895 = vpop.f32.mrf.mxu0
    %2896 = vdwg.mxu0
    %2897 = vmatpush.bf16.msra.mxu0 %v970
    %2898 = vmatpush.bf16.msra.mxu0 %v966
    %2899 = vmatpush.bf16.msra.mxu0 %v962
    %2900 = vmatpush.bf16.msra.mxu0 %v958
    %2901 = vmatpush.bf16.msra.mxu0 %v954
    %2902 = vmatpush.bf16.msra.mxu0 %v950
    %2903 = vmatpush.bf16.msra.mxu0 %v946
    %2904 = vmatpush.bf16.msra.mxu0 %v942
    %2905 = vmatmul.bf16.gmra.mxu0 %v2856
    %v2906 = vpop.f32.mrf.mxu0
    %v2907 = vadd.f32 %v2852, %v2906
    %v2908 = vpop.f32.mrf.mxu0
    %2909 = vdwg.mxu0
    %v2910 = vadd.f32 %v2868, %v1057
    %v2911 = vadd.f32 %v2881, %v1058
    %v2912 = vadd.f32 %v2894, %v1059
    %v2913 = vadd.f32 %v2907, %v1060
    %v2914 = vxor.u32 %v2910, 2147483648
    %v2915 = vmul.f32 %v2914, 1.442695
    %v2916 = vpow.pop %v2915
    %v2917 = vadd.f32 %v2916, 1.0
    %v2918 = vrcp.pop %v2917
    %v2919 = vmul.f32 %v2917, %v2918
    %v2920 = vsub.f32 1.0, %v2919
    %v2921 = vmul.f32 %v2918, %v2920
    %v2922 = vadd.f32 %v2918, %v2921
    %vm2923 = vweird.f32 %v2917
    %vm2924 = vweird.f32 %v2918
    %vm2925 = vmor %vm2923, %vm2924
    %v2926 = vsel %vm2925, %v2918, %v2922
    %v2927 = vand.u32 2147483647, %v2917
    %vm2928 = vcmp.eq.f32.partialorder %v2927, 8.507059e+37
    %v2929 = vand.u32 %v2917, 2147483648
    %v2930 = vor.u32 1.1754944e-38, %v2929
    %v2931 = vsel %vm2928, %v2930, %v2926
    %v2932 = vmul.f32 1.0, %v2931
    %v2933 = vxor.u32 %v2911, 2147483648
    %v2934 = vmul.f32 %v2933, 1.442695
    %v2935 = vpow.pop %v2934
    %v2936 = vadd.f32 %v2935, 1.0
    %v2937 = vrcp.pop %v2936
    %v2938 = vmul.f32 %v2936, %v2937
    %v2939 = vsub.f32 1.0, %v2938
    %v2940 = vmul.f32 %v2937, %v2939
    %v2941 = vadd.f32 %v2937, %v2940
    %vm2942 = vweird.f32 %v2936
    %vm2943 = vweird.f32 %v2937
    %vm2944 = vmor %vm2942, %vm2943
    %v2945 = vsel %vm2944, %v2937, %v2941
    %v2946 = vand.u32 2147483647, %v2936
    %vm2947 = vcmp.eq.f32.partialorder %v2946, 8.507059e+37
    %v2948 = vand.u32 %v2936, 2147483648
    %v2949 = vor.u32 1.1754944e-38, %v2948
    %v2950 = vsel %vm2947, %v2949, %v2945
    %v2951 = vmul.f32 1.0, %v2950
    %v2952 = vtanh.pop %v2912
    %v2953 = vxor.u32 %v2913, 2147483648
    %v2954 = vmul.f32 %v2953, 1.442695
    %v2955 = vpow.pop %v2954
    %v2956 = vadd.f32 %v2955, 1.0
    %v2957 = vrcp.pop %v2956
    %v2958 = vmul.f32 %v2956, %v2957
    %v2959 = vsub.f32 1.0, %v2958
    %v2960 = vmul.f32 %v2957, %v2959
    %v2961 = vadd.f32 %v2957, %v2960
    %vm2962 = vweird.f32 %v2956
    %vm2963 = vweird.f32 %v2957
    %vm2964 = vmor %vm2962, %vm2963
    %v2965 = vsel %vm2964, %v2957, %v2961
    %v2966 = vand.u32 2147483647, %v2956
    %vm2967 = vcmp.eq.f32.partialorder %v2966, 8.507059e+37
    %v2968 = vand.u32 %v2956, 2147483648
    %v2969 = vor.u32 1.1754944e-38, %v2968
    %v2970 = vsel %vm2967, %v2969, %v2965
    %v2971 = vmul.f32 1.0, %v2970
    %v2972 = vmul.f32 %v2951, %v2664
    %v2973 = vmul.f32 %v2932, %v2952
    %v2974 = vadd.f32 %v2972, %v2973
    %v2975 = vtanh.pop %v2974
    %v2976 = vmul.f32 %v2971, %v2975
    %2977 = vmatpush.bf16.msra.mxu0 %v411
    %2978 = vmatpush.bf16.msra.mxu0 %v407
    %2979 = vmatpush.bf16.msra.mxu0 %v403
    %2980 = vmatpush.bf16.msra.mxu0 %v399
    %2981 = vmatpush.bf16.msra.mxu0 %v395
    %2982 = vmatpush.bf16.msra.mxu0 %v391
    %2983 = vmatpush.bf16.msra.mxu0 %v387
    %2984 = vmatpush.bf16.msra.mxu0 %v383
    %2985 = vmatmul.bf16.gmra.mxu0 %v2856
    %v2986 = vpop.f32.mrf.mxu0
    %v2987 = vadd.f32 0.0, %v2986
    %v2988 = vpop.f32.mrf.mxu0
    %2989 = vdwg.mxu0
    %2990 = vmatpush.bf16.msra.mxu0 %v412
    %2991 = vmatpush.bf16.msra.mxu0 %v408
    %2992 = vmatpush.bf16.msra.mxu0 %v404
    %2993 = vmatpush.bf16.msra.mxu0 %v400
    %2994 = vmatpush.bf16.msra.mxu0 %v396
    %2995 = vmatpush.bf16.msra.mxu0 %v392
    %2996 = vmatpush.bf16.msra.mxu0 %v388
    %2997 = vmatpush.bf16.msra.mxu0 %v384
    %2998 = vmatmul.bf16.gmra.mxu0 %v2856
    %v2999 = vpop.f32.mrf.mxu0
    %v3000 = vadd.f32 0.0, %v2999
    %v3001 = vpop.f32.mrf.mxu0
    %3002 = vdwg.mxu0
    %3003 = vmatpush.bf16.msra.mxu0 %v413
    %3004 = vmatpush.bf16.msra.mxu0 %v409
    %3005 = vmatpush.bf16.msra.mxu0 %v405
    %3006 = vmatpush.bf16.msra.mxu0 %v401
    %3007 = vmatpush.bf16.msra.mxu0 %v397
    %3008 = vmatpush.bf16.msra.mxu0 %v393
    %3009 = vmatpush.bf16.msra.mxu0 %v389
    %3010 = vmatpush.bf16.msra.mxu0 %v385
    %3011 = vmatmul.bf16.gmra.mxu0 %v2856
    %v3012 = vpop.f32.mrf.mxu0
    %v3013 = vadd.f32 0.0, %v3012
    %v3014 = vpop.f32.mrf.mxu0
    %3015 = vdwg.mxu0
    %3016 = vmatpush.bf16.msra.mxu0 %v414
    %3017 = vmatpush.bf16.msra.mxu0 %v410
    %3018 = vmatpush.bf16.msra.mxu0 %v406
    %3019 = vmatpush.bf16.msra.mxu0 %v402
    %3020 = vmatpush.bf16.msra.mxu0 %v398
    %3021 = vmatpush.bf16.msra.mxu0 %v394
    %3022 = vmatpush.bf16.msra.mxu0 %v390
    %3023 = vmatpush.bf16.msra.mxu0 %v386
    %3024 = vmatmul.bf16.gmra.mxu0 %v2856
    %v3025 = vpop.f32.mrf.mxu0
    %v3026 = vadd.f32 0.0, %v3025
    %v3027 = vpop.f32.mrf.mxu0
    %3028 = vdwg.mxu0
    %v3033 = vrot.slane %v2987, 2
    %v3034 = vrot.slane %v3000, 2
    %v3035 = vrot.slane %v3013, 2
    %v3036 = vrot.slane %v3026, 2
    %v3041 = vadd.f32 %v211, %v3033
    %v3042 = vadd.f32 %v225, %v3034
    %v3043 = vadd.f32 %v239, %v3035
    %v3044 = vadd.f32 %v253, %v3036
    %v3045 = vxor.u32 %v3041, 2147483648
    %v3046 = vmul.f32 %v3045, 1.442695
    %v3047 = vpow.pop %v3046
    %v3048 = vadd.f32 %v3047, 1.0
    %v3049 = vrcp.pop %v3048
    %v3050 = vmul.f32 %v3048, %v3049
    %v3051 = vsub.f32 1.0, %v3050
    %v3052 = vmul.f32 %v3049, %v3051
    %v3053 = vadd.f32 %v3049, %v3052
    %vm3054 = vweird.f32 %v3048
    %vm3055 = vweird.f32 %v3049
    %vm3056 = vmor %vm3054, %vm3055
    %v3057 = vsel %vm3056, %v3049, %v3053
    %v3058 = vand.u32 2147483647, %v3048
    %vm3059 = vcmp.eq.f32.partialorder %v3058, 8.507059e+37
    %v3060 = vand.u32 %v3048, 2147483648
    %v3061 = vor.u32 1.1754944e-38, %v3060
    %v3062 = vsel %vm3059, %v3061, %v3057
    %v3063 = vmul.f32 1.0, %v3062
    %v3064 = vxor.u32 %v3042, 2147483648
    %v3065 = vmul.f32 %v3064, 1.442695
    %v3066 = vpow.pop %v3065
    %v3067 = vadd.f32 %v3066, 1.0
    %v3068 = vrcp.pop %v3067
    %v3069 = vmul.f32 %v3067, %v3068
    %v3070 = vsub.f32 1.0, %v3069
    %v3071 = vmul.f32 %v3068, %v3070
    %v3072 = vadd.f32 %v3068, %v3071
    %vm3073 = vweird.f32 %v3067
    %vm3074 = vweird.f32 %v3068
    %vm3075 = vmor %vm3073, %vm3074
    %v3076 = vsel %vm3075, %v3068, %v3072
    %v3077 = vand.u32 2147483647, %v3067
    %vm3078 = vcmp.eq.f32.partialorder %v3077, 8.507059e+37
    %v3079 = vand.u32 %v3067, 2147483648
    %v3080 = vor.u32 1.1754944e-38, %v3079
    %v3081 = vsel %vm3078, %v3080, %v3076
    %v3082 = vmul.f32 1.0, %v3081
    %v3083 = vtanh.pop %v3043
    %v3084 = vxor.u32 %v3044, 2147483648
    %v3085 = vmul.f32 %v3084, 1.442695
    %v3086 = vpow.pop %v3085
    %v3087 = vadd.f32 %v3086, 1.0
    %v3088 = vrcp.pop %v3087
    %v3089 = vmul.f32 %v3087, %v3088
    %v3090 = vsub.f32 1.0, %v3089
    %v3091 = vmul.f32 %v3088, %v3090
    %v3092 = vadd.f32 %v3088, %v3091
    %vm3093 = vweird.f32 %v3087
    %vm3094 = vweird.f32 %v3088
    %vm3095 = vmor %vm3093, %vm3094
    %v3096 = vsel %vm3095, %v3088, %v3092
    %v3097 = vand.u32 2147483647, %v3087
    %vm3098 = vcmp.eq.f32.partialorder %v3097, 8.507059e+37
    %v3099 = vand.u32 %v3087, 2147483648
    %v3100 = vor.u32 1.1754944e-38, %v3099
    %v3101 = vsel %vm3098, %v3100, %v3096
    %v3102 = vmul.f32 1.0, %v3101
    %v3104 = vrot.slane %v2798, 6
    %v3106 = vmul.f32 %v3082, %v3104
    %v3107 = vmul.f32 %v3063, %v3083
    %v3108 = vadd.f32 %v3106, %v3107
    %v3109 = vtanh.pop %v3108
    %v3110 = vmul.f32 %v3102, %v3109
    %v3111 = vpack.c.bf16 %v3110, %v3110
    %v3112 = vpack.c.bf16 %v2976, %v2976
    %3113 = vmatpush.bf16.msra.mxu0 %v755
    %3114 = vmatpush.bf16.msra.mxu0 %v751
    %3115 = vmatpush.bf16.msra.mxu0 %v747
    %3116 = vmatpush.bf16.msra.mxu0 %v743
    %3117 = vmatpush.bf16.msra.mxu0 %v739
    %3118 = vmatpush.bf16.msra.mxu0 %v735
    %3119 = vmatpush.bf16.msra.mxu0 %v731
    %3120 = vmatpush.bf16.msra.mxu0 %v727
    %3121 = vmatmul.bf16.gmra.mxu0 %v3112
    %v3122 = vpop.f32.mrf.mxu0
    %v3123 = vadd.f32 0.0, %v3122
    %v3124 = vpop.f32.mrf.mxu0
    %3125 = vdwg.mxu0
    %3126 = vmatpush.bf16.msra.mxu0 %v756
    %3127 = vmatpush.bf16.msra.mxu0 %v752
    %3128 = vmatpush.bf16.msra.mxu0 %v748
    %3129 = vmatpush.bf16.msra.mxu0 %v744
    %3130 = vmatpush.bf16.msra.mxu0 %v740
    %3131 = vmatpush.bf16.msra.mxu0 %v736
    %3132 = vmatpush.bf16.msra.mxu0 %v732
    %3133 = vmatpush.bf16.msra.mxu0 %v728
    %3134 = vmatmul.bf16.gmra.mxu0 %v3112
    %v3135 = vpop.f32.mrf.mxu0
    %v3136 = vadd.f32 0.0, %v3135
    %v3137 = vpop.f32.mrf.mxu0
    %3138 = vdwg.mxu0
    %3139 = vmatpush.bf16.msra.mxu0 %v757
    %3140 = vmatpush.bf16.msra.mxu0 %v753
    %3141 = vmatpush.bf16.msra.mxu0 %v749
    %3142 = vmatpush.bf16.msra.mxu0 %v745
    %3143 = vmatpush.bf16.msra.mxu0 %v741
    %3144 = vmatpush.bf16.msra.mxu0 %v737
    %3145 = vmatpush.bf16.msra.mxu0 %v733
    %3146 = vmatpush.bf16.msra.mxu0 %v729
    %3147 = vmatmul.bf16.gmra.mxu0 %v3112
    %v3148 = vpop.f32.mrf.mxu0
    %v3149 = vadd.f32 0.0, %v3148
    %v3150 = vpop.f32.mrf.mxu0
    %3151 = vdwg.mxu0
    %3152 = vmatpush.bf16.msra.mxu0 %v758
    %3153 = vmatpush.bf16.msra.mxu0 %v754
    %3154 = vmatpush.bf16.msra.mxu0 %v750
    %3155 = vmatpush.bf16.msra.mxu0 %v746
    %3156 = vmatpush.bf16.msra.mxu0 %v742
    %3157 = vmatpush.bf16.msra.mxu0 %v738
    %3158 = vmatpush.bf16.msra.mxu0 %v734
    %3159 = vmatpush.bf16.msra.mxu0 %v730
    %3160 = vmatmul.bf16.gmra.mxu0 %v3112
    %v3161 = vpop.f32.mrf.mxu0
    %v3162 = vadd.f32 0.0, %v3161
    %v3163 = vpop.f32.mrf.mxu0
    %3164 = vdwg.mxu0
    %v3166 = vrot.slane %v3111, 3
    %3168 = vmatpush.bf16.msra.mxu0 %v967
    %3169 = vmatpush.bf16.msra.mxu0 %v963
    %3170 = vmatpush.bf16.msra.mxu0 %v959
    %3171 = vmatpush.bf16.msra.mxu0 %v955
    %3172 = vmatpush.bf16.msra.mxu0 %v951
    %3173 = vmatpush.bf16.msra.mxu0 %v947
    %3174 = vmatpush.bf16.msra.mxu0 %v943
    %3175 = vmatpush.bf16.msra.mxu0 %v939
    %3176 = vmatmul.bf16.gmra.mxu0 %v3166
    %v3177 = vpop.f32.mrf.mxu0
    %v3178 = vadd.f32 %v3123, %v3177
    %v3179 = vpop.f32.mrf.mxu0
    %3180 = vdwg.mxu0
    %3181 = vmatpush.bf16.msra.mxu0 %v968
    %3182 = vmatpush.bf16.msra.mxu0 %v964
    %3183 = vmatpush.bf16.msra.mxu0 %v960
    %3184 = vmatpush.bf16.msra.mxu0 %v956
    %3185 = vmatpush.bf16.msra.mxu0 %v952
    %3186 = vmatpush.bf16.msra.mxu0 %v948
    %3187 = vmatpush.bf16.msra.mxu0 %v944
    %3188 = vmatpush.bf16.msra.mxu0 %v940
    %3189 = vmatmul.bf16.gmra.mxu0 %v3166
    %v3190 = vpop.f32.mrf.mxu0
    %v3191 = vadd.f32 %v3136, %v3190
    %v3192 = vpop.f32.mrf.mxu0
    %3193 = vdwg.mxu0
    %3194 = vmatpush.bf16.msra.mxu0 %v969
    %3195 = vmatpush.bf16.msra.mxu0 %v965
    %3196 = vmatpush.bf16.msra.mxu0 %v961
    %3197 = vmatpush.bf16.msra.mxu0 %v957
    %3198 = vmatpush.bf16.msra.mxu0 %v953
    %3199 = vmatpush.bf16.msra.mxu0 %v949
    %3200 = vmatpush.bf16.msra.mxu0 %v945
    %3201 = vmatpush.bf16.msra.mxu0 %v941
    %3202 = vmatmul.bf16.gmra.mxu0 %v3166
    %v3203 = vpop.f32.mrf.mxu0
    %v3204 = vadd.f32 %v3149, %v3203
    %v3205 = vpop.f32.mrf.mxu0
    %3206 = vdwg.mxu0
    %3207 = vmatpush.bf16.msra.mxu0 %v970
    %3208 = vmatpush.bf16.msra.mxu0 %v966
    %3209 = vmatpush.bf16.msra.mxu0 %v962
    %3210 = vmatpush.bf16.msra.mxu0 %v958
    %3211 = vmatpush.bf16.msra.mxu0 %v954
    %3212 = vmatpush.bf16.msra.mxu0 %v950
    %3213 = vmatpush.bf16.msra.mxu0 %v946
    %3214 = vmatpush.bf16.msra.mxu0 %v942
    %3215 = vmatmul.bf16.gmra.mxu0 %v3166
    %v3216 = vpop.f32.mrf.mxu0
    %v3217 = vadd.f32 %v3162, %v3216
    %v3218 = vpop.f32.mrf.mxu0
    %3219 = vdwg.mxu0
    %v3220 = vadd.f32 %v3178, %v1057
    %v3221 = vadd.f32 %v3191, %v1058
    %v3222 = vadd.f32 %v3204, %v1059
    %v3223 = vadd.f32 %v3217, %v1060
    %v3224 = vxor.u32 %v3220, 2147483648
    %v3225 = vmul.f32 %v3224, 1.442695
    %v3226 = vpow.pop %v3225
    %v3227 = vadd.f32 %v3226, 1.0
    %v3228 = vrcp.pop %v3227
    %v3229 = vmul.f32 %v3227, %v3228
    %v3230 = vsub.f32 1.0, %v3229
    %v3231 = vmul.f32 %v3228, %v3230
    %v3232 = vadd.f32 %v3228, %v3231
    %vm3233 = vweird.f32 %v3227
    %vm3234 = vweird.f32 %v3228
    %vm3235 = vmor %vm3233, %vm3234
    %v3236 = vsel %vm3235, %v3228, %v3232
    %v3237 = vand.u32 2147483647, %v3227
    %vm3238 = vcmp.eq.f32.partialorder %v3237, 8.507059e+37
    %v3239 = vand.u32 %v3227, 2147483648
    %v3240 = vor.u32 1.1754944e-38, %v3239
    %v3241 = vsel %vm3238, %v3240, %v3236
    %v3242 = vmul.f32 1.0, %v3241
    %v3243 = vxor.u32 %v3221, 2147483648
    %v3244 = vmul.f32 %v3243, 1.442695
    %v3245 = vpow.pop %v3244
    %v3246 = vadd.f32 %v3245, 1.0
    %v3247 = vrcp.pop %v3246
    %v3248 = vmul.f32 %v3246, %v3247
    %v3249 = vsub.f32 1.0, %v3248
    %v3250 = vmul.f32 %v3247, %v3249
    %v3251 = vadd.f32 %v3247, %v3250
    %vm3252 = vweird.f32 %v3246
    %vm3253 = vweird.f32 %v3247
    %vm3254 = vmor %vm3252, %vm3253
    %v3255 = vsel %vm3254, %v3247, %v3251
    %v3256 = vand.u32 2147483647, %v3246
    %vm3257 = vcmp.eq.f32.partialorder %v3256, 8.507059e+37
    %v3258 = vand.u32 %v3246, 2147483648
    %v3259 = vor.u32 1.1754944e-38, %v3258
    %v3260 = vsel %vm3257, %v3259, %v3255
    %v3261 = vmul.f32 1.0, %v3260
    %v3262 = vtanh.pop %v3222
    %v3263 = vxor.u32 %v3223, 2147483648
    %v3264 = vmul.f32 %v3263, 1.442695
    %v3265 = vpow.pop %v3264
    %v3266 = vadd.f32 %v3265, 1.0
    %v3267 = vrcp.pop %v3266
    %v3268 = vmul.f32 %v3266, %v3267
    %v3269 = vsub.f32 1.0, %v3268
    %v3270 = vmul.f32 %v3267, %v3269
    %v3271 = vadd.f32 %v3267, %v3270
    %vm3272 = vweird.f32 %v3266
    %vm3273 = vweird.f32 %v3267
    %vm3274 = vmor %vm3272, %vm3273
    %v3275 = vsel %vm3274, %v3267, %v3271
    %v3276 = vand.u32 2147483647, %v3266
    %vm3277 = vcmp.eq.f32.partialorder %v3276, 8.507059e+37
    %v3278 = vand.u32 %v3266, 2147483648
    %v3279 = vor.u32 1.1754944e-38, %v3278
    %v3280 = vsel %vm3277, %v3279, %v3275
    %v3281 = vmul.f32 1.0, %v3280
    %v3282 = vmul.f32 %v3261, %v2974
    %v3283 = vmul.f32 %v3242, %v3262
    %v3284 = vadd.f32 %v3282, %v3283
    %v3285 = vtanh.pop %v3284
    %v3286 = vmul.f32 %v3281, %v3285
    %v3287 = vld [vmem:[%s7] sm:$0xff]
    %v3288 = vld [vmem:[%s7 + $0x8] sm:$0xff]
    %v3289 = vld [vmem:[%s7 + $0x10] sm:$0xff]
    %v3290 = vld [vmem:[%s7 + $0x18] sm:$0xff]
    %v3291 = vld [vmem:[%s7 + $0x20] sm:$0xff]
    %v3292 = vld [vmem:[%s7 + $0x28] sm:$0xff]
    %v3293 = vld [vmem:[%s7 + $0x30] sm:$0xff]
    %v3294 = vld [vmem:[%s7 + $0x38] sm:$0xff]
    %v3295 = vld [vmem:[%s7 + $0x40] sm:$0xff]
    %v3296 = vld [vmem:[%s7 + $0x48] sm:$0xff]
    %v3297 = vld [vmem:[%s7 + $0x50] sm:$0xff]
    %v3298 = vld [vmem:[%s7 + $0x58] sm:$0xff]
    %v3299 = vld [vmem:[%s7 + $0x60] sm:$0xff]
    %v3300 = vld [vmem:[%s7 + $0x68] sm:$0xff]
    %v3301 = vld [vmem:[%s7 + $0x70] sm:$0xff]
    %v3302 = vld [vmem:[%s7 + $0x78] sm:$0xff]
    %v3303 = vld [vmem:[%s8] sm:$0x1]
    %v3305 = vperm.slane %v3303, 0
    %3307 = vmatpush.msra.mxu0 %v3302
    %3308 = vmatpush.msra.mxu0 %v3301
    %3309 = vmatpush.msra.mxu0 %v3300
    %3310 = vmatpush.msra.mxu0 %v3299
    %3311 = vmatpush.msra.mxu0 %v3298
    %3312 = vmatpush.msra.mxu0 %v3297
    %3313 = vmatpush.msra.mxu0 %v3296
    %3314 = vmatpush.msra.mxu0 %v3295
    %3315 = vmatpush.msra.mxu0 %v3294
    %3316 = vmatpush.msra.mxu0 %v3293
    %3317 = vmatpush.msra.mxu0 %v3292
    %3318 = vmatpush.msra.mxu0 %v3291
    %3319 = vmatpush.msra.mxu0 %v3290
    %3320 = vmatpush.msra.mxu0 %v3289
    %3321 = vmatpush.msra.mxu0 %v3288
    %3322 = vmatpush.msra.mxu0 %v3287
    %3323 = vmatmul.f32.gmra.mxu0 %v3286
    %v3324 = vpop.f32.mrf.mxu0
    %v3325 = vadd.f32 %v3305, %v3324
    %3326 = vdwg.mxu0
    %vm3327 = vcmask 74752
    %3328 = vst.msk [vmem:[#allocation8] sm:$0x3] %vm3327, %v3325
    // Predicated region
    $region50: #{rnn_fused_forward.1} parent=1 // pred_check
      _
    $region51: #{rnn_fused_forward.1} parent=1 // pred_check_branch
      %3330 = sbr.rel (0) target = $region53
    $region52: #{rnn_fused_forward.1} parent=1 // pred_region
      %3332 = vsyncadd [#allocation4], 0
      %s3334 = sshll.u32 [#allocation8], 4
      %s3335 = int_to_ptr.vmem [resolvable:$true] %s3334
      %s3336 = sshll.u32 %s9, 4
      %s3337 = int_to_ptr.hbm [resolvable:$true] %s3336
      %3339 = dma.vmem_to_hbm [thread:$0]  %s3335, 32, %s3337, [#allocation4]
    $region53: #{rnn_fused_forward.1} parent=1 // pred_fallthru
      _
    // Predicated region
    $region54: #{rnn_fused_forward.1} parent=1 // pred_check
      _
    $region55: #{rnn_fused_forward.1} parent=1 // pred_check_branch
      %3341 = sbr.rel (0) target = $region57
    $region56: #{rnn_fused_forward.1} parent=1 // pred_region
      %3343 = dma.done [#allocation4], 32
    $region57: #{rnn_fused_forward.1} parent=1 // pred_fallthru
      _
    %3344 = vsyncpa [#allocation3], 1
    %3345 = vsyncpa [#allocation6], 1
    %3346 = vsyncpa [#allocation4], 1

</llo_original>
